<compile_context>
chip_gen: v7x
topology: tpu7x:2x2x1
jax: 0.10.0
libtpu: 0.0.40
codegen_flags: <defaults>
</compile_context>

<pallas_src>
import numpy as np
import jax
import jax.numpy as jnp
from jax.experimental import pallas as pl
from jax.experimental.pallas import tpu as pltpu

NUM_FILTERS = 32
NUM_RES = 3
EPS = 1e-5

FEAT = 9 * NUM_FILTERS        # 288 real feature columns
FEAT_PAD = 384                # padded to 3 x 128 lanes
HEAD_W = 32                   # 18 policy-conv cols + 9 value-conv cols (+5 pad)
FC_PAD = 256                  # fused fc output: lanes 0:9 policy, 128:160 value_fc1
OUT_W = 128                   # lane-dense packed output: [policy(9), value(1), 0...]
VALUE_GRP = 128               # start lane of the value_fc1 lane group in z2


def _round_up(n, m):
    return (n + m - 1) // m * m


def _choose_tile(batch, tb_max):
    """Pick (TB, B_pad): at least 2 (even) grid steps so the 'parallel' batch
    axis splits across v7x's two TensorCores, tiles capped at tb_max, and
    padding waste bounded by rounding ceil(B/steps) up to 8 sublanes.  The
    extra ~0.35us per step is negligible on single-TC chips (v5e/v6e)."""
    tb_max = max(8, _round_up(tb_max, 8))
    steps = max(2, -(-batch // tb_max))
    if steps % 2:
        steps += 1
    tb = _round_up(-(-batch // steps), 8)
    return tb, steps * tb


# ----------------------------------------------------------------------------
# Kernel
# ----------------------------------------------------------------------------
def tictactoe_kernel(x_ref,
                     w_stem_ref, b_stem_ref,
                     w_res_ref, b_res_ref,
                     w_head_ref, b_head_ref,
                     w_fc_ref, b_fc_ref,
                     w_vfc2_ref, b_vfc2_ref,
                     out_ref):
    f32 = jnp.float32
    bf16 = jnp.bfloat16

    # stem: conv3x3 (lowered to matmul, BN scale folded into W) -> +shift -> relu
    h = jnp.dot(x_ref[...].astype(bf16), w_stem_ref[...],
                preferred_element_type=f32)
    h = jnp.maximum(h + b_stem_ref[...], 0.0).astype(bf16)   # carried in bf16

    # residual tower: bf16 matmul operands, f32 accumulation + residual add
    for i in range(NUM_RES):
        idn = h
        y = jnp.dot(h, w_res_ref[2 * i], preferred_element_type=f32)
        y = jnp.maximum(y + b_res_ref[2 * i], 0.0).astype(bf16)
        y = jnp.dot(y, w_res_ref[2 * i + 1], preferred_element_type=f32)
        y = y + b_res_ref[2 * i + 1]
        h = jnp.maximum(y + idn.astype(f32), 0.0).astype(bf16)

    # fused heads: [policy 1x1 conv (18 cols) | value 1x1 conv (9 cols)] -> relu
    z = jnp.dot(h, w_head_ref[...], preferred_element_type=f32)
    z = jnp.maximum(z + b_head_ref[...], 0.0).astype(bf16)

    # fused fc: policy_fc -> lanes 0:9 (group 0), value_fc1 -> lanes 128:160
    z2 = jnp.dot(z, w_fc_ref[...], preferred_element_type=f32) + b_fc_ref[...]

    lg = z2[:, 0:OUT_W]                    # lane group 0 (policy logits in 0:9)
    vg = z2[:, VALUE_GRP:VALUE_GRP + OUT_W]  # lane group 1 (value_fc1 in 0:32)

    # policy: masked softmax over lanes < 9, exact normalization
    lane = jax.lax.broadcasted_iota(jnp.int32, lg.shape, 1)
    logits = jnp.where(lane < 9, lg, -1e30)
    m = jnp.max(logits, axis=-1, keepdims=True)
    e = jnp.exp(logits - m)                # padded lanes underflow to exactly 0
    policy = e / jnp.sum(e, axis=-1, keepdims=True)

    # value: relu(value_fc1) -> value_fc2 as a lane reduction -> tanh
    v1 = jnp.maximum(vg, 0.0)
    value = jnp.tanh(jnp.sum(v1 * w_vfc2_ref[...], axis=-1, keepdims=True)
                     + b_vfc2_ref[...])

    # lane-dense packed output, single full-tile unmasked store:
    #   lanes 0:9 = policy, lane 9 = value, lanes 10:128 = 0
    out_ref[...] = jnp.where(lane == 9, value, policy)


# ----------------------------------------------------------------------------
# Conv -> matmul lowering + BN folding (one-time plain-JAX glue)
# ----------------------------------------------------------------------------
def _shift_tensor():
    """S[k, p, q] = 1 iff tap k of a 3x3 pad=1 conv at output position p reads
    input position q on the 3x3 board (zero padding otherwise)."""
    S = np.zeros((9, 9, 9), np.float32)
    for kh in range(3):
        for kw in range(3):
            k = kh * 3 + kw
            for h in range(3):
                for w in range(3):
                    qh, qw = h + kh - 1, w + kw - 1
                    if 0 <= qh < 3 and 0 <= qw < 3:
                        S[k, h * 3 + w, qh * 3 + qw] = 1.0
    return jnp.asarray(S)


def conv3x3_to_matmul(W):
    """W: (Cout, Cin, 3, 3) -> (9*Cin, 9*Cout) so that y_flat = x_flat @ Wbig."""
    cout, cin = W.shape[0], W.shape[1]
    Wk = jnp.transpose(W, (2, 3, 1, 0)).reshape(9, cin, cout)   # (k, ci, co)
    S = _shift_tensor()
    return jnp.einsum('kpq,kio->qipo', S, Wk).reshape(9 * cin, 9 * cout)


def conv1x1_to_matmul(W):
    """W: (Cout, Cin, 1, 1) -> (9*Cin, 9*Cout) block-diagonal over positions."""
    cout, cin = W.shape[0], W.shape[1]
    Wk = W[:, :, 0, 0].T                                        # (ci, co)
    return jnp.einsum('pq,io->qipo', jnp.eye(9, dtype=W.dtype), Wk).reshape(
        9 * cin, 9 * cout)


def bn_scale_shift(cb):
    """Eval-mode BN (+ conv bias) -> per-(position,channel) scale/shift vectors."""
    scale = cb['gamma'] / jnp.sqrt(cb['var'] + EPS)
    shift = cb['beta'] - cb['mean'] * scale + scale * cb['b']
    return jnp.tile(scale, 9), jnp.tile(shift, 9)               # (9*cout,) each


def lower_params(p):
    """One-time lowering of module params into kernel weight tensors (bf16)."""
    def fold_pad_cast(wbig, scale_t, rows, cols):
        wf = wbig * scale_t[None, :]
        wf = jnp.pad(wf, ((0, rows - wf.shape[0]), (0, cols - wf.shape[1])))
        return wf.astype(jnp.bfloat16)

    def pad_shift(shift_t, cols):
        return jnp.pad(shift_t, (0, cols - shift_t.shape[0]))[None, :].astype(
            jnp.float32)

    # stem
    s, sh = bn_scale_shift(p['stem'])
    w_stem = fold_pad_cast(conv3x3_to_matmul(p['stem']['w']), s, 9, FEAT_PAD)
    b_stem = pad_shift(sh, FEAT_PAD)

    # residual tower, stacked [b0.c1, b0.c2, b1.c1, ...]
    w_res, b_res = [], []
    for cb1, cb2 in p['res']:
        for cb in (cb1, cb2):
            s, sh = bn_scale_shift(cb)
            w_res.append(fold_pad_cast(conv3x3_to_matmul(cb['w']), s,
                                       FEAT_PAD, FEAT_PAD))
            b_res.append(pad_shift(sh, FEAT_PAD))
    w_res = jnp.stack(w_res)                       # (6, 384, 384) bf16
    b_res = jnp.stack(b_res)                       # (6, 1, 384)   f32

    # fused 1x1-conv heads: columns [0:18]=policy conv, [18:27]=value conv
    s_p, sh_p = bn_scale_shift(p['policy_conv'])   # (18,)
    s_v, sh_v = bn_scale_shift(p['value_conv'])    # (9,)
    w_head = jnp.concatenate(
        [conv1x1_to_matmul(p['policy_conv']['w']) * s_p[None, :],
         conv1x1_to_matmul(p['value_conv']['w']) * s_v[None, :]], axis=1)
    w_head = jnp.pad(w_head, ((0, FEAT_PAD - FEAT),
                              (0, HEAD_W - 27))).astype(jnp.bfloat16)
    b_head = pad_shift(jnp.concatenate([sh_p, sh_v]), HEAD_W)

    # fused lane-aligned fc: policy_fc (18->9) at cols 0:9,
    #                        value_fc1 (9->32) at cols 128:160.
    # policy_fc expects torch flatten order (c*9 + p); ours is (p*2 + c)
    perm = np.array([(j % 2) * 9 + (j // 2) for j in range(18)])
    w_pfc = p['policy_fc']['w'].T[perm]            # (18, 9)
    w_vfc1 = p['value_fc1']['w'].T                 # (9, 32)
    w_fc = jnp.zeros((HEAD_W, FC_PAD), jnp.float32)
    w_fc = w_fc.at[0:18, 0:9].set(w_pfc)
    w_fc = w_fc.at[18:27, VALUE_GRP:VALUE_GRP + 32].set(w_vfc1)
    w_fc = w_fc.astype(jnp.bfloat16)
    b_fc = jnp.zeros((1, FC_PAD), jnp.float32)
    b_fc = b_fc.at[0, 0:9].set(p['policy_fc']['b'])
    b_fc = b_fc.at[0, VALUE_GRP:VALUE_GRP + 32].set(p['value_fc1']['b'])

    # value_fc2 as a 128-lane reduction vector (zeros beyond lane 32)
    w_vfc2 = jnp.zeros((1, OUT_W), jnp.float32)
    w_vfc2 = w_vfc2.at[0, 0:32].set(p['value_fc2']['w'][0])
    b_vfc2 = p['value_fc2']['b'][None, :].astype(jnp.float32)   # (1, 1)

    return (w_stem, b_stem, w_res, b_res, w_head, b_head,
            w_fc, b_fc, w_vfc2, b_vfc2)


# ----------------------------------------------------------------------------
# Wrapper
# ----------------------------------------------------------------------------
def tictactoe_forward(x_nchw, lowered, block_b=2048):
    """x_nchw: (B, 1, 3, 3). Returns (policy (B,9), value (B,1)).

    block_b: max batch rows per grid step.  2048 keeps per-step fixed overhead
    small while total live VMEM stays well under the explicit 48 MiB scoped
    limit on every generation (v7x has only 64 MiB physical VMEM, so do not
    raise block_b past ~3072 there; v5e's 16 MiB default scoped limit is
    overridden explicitly below)."""
    (w_stem, b_stem, w_res, b_res, w_head, b_head,
     w_fc, b_fc, w_vfc2, b_vfc2) = lowered

    B = x_nchw.shape[0]
    xf = x_nchw.reshape(B, 9).astype(jnp.float32)

    # batch tiling: >= 2 (even) grid steps, bounded padding waste
    TB, B_pad = _choose_tile(B, block_b)
    if B_pad != B:
        xf = jnp.pad(xf, ((0, B_pad - B), (0, 0)))
    grid = (B_pad // TB,)

    args = (xf, w_stem, b_stem, w_res, b_res, w_head, b_head,
            w_fc, b_fc, w_vfc2, b_vfc2)

    def resident(a):
        # full-array block + constant index_map -> fetched once, VMEM-resident;
        # Buffered(1) avoids the default 2-deep buffering on these constants.
        nd = a.ndim
        return pl.BlockSpec(a.shape, lambda i: (0,) * nd,
                            pipeline_mode=pl.Buffered(1))

    in_specs = ([pl.BlockSpec((TB, 9), lambda i: (i, 0))] +
                [resident(a) for a in args[1:]])
    out_specs = pl.BlockSpec((TB, OUT_W), lambda i: (i, 0))

    flops = 2 * B_pad * (9 * FEAT_PAD +
                         2 * NUM_RES * FEAT_PAD * FEAT_PAD +
                         FEAT_PAD * HEAD_W + HEAD_W * FC_PAD + OUT_W)
    bytes_accessed = (xf.size * xf.dtype.itemsize + B_pad * OUT_W * 4 +
                      sum(int(a.size) * a.dtype.itemsize for a in args[1:]))

    out = pl.pallas_call(
        tictactoe_kernel,
        grid=grid,
        in_specs=in_specs,
        out_specs=out_specs,
        out_shape=jax.ShapeDtypeStruct((B_pad, OUT_W), jnp.float32),
        compiler_params=pltpu.CompilerParams(
            dimension_semantics=("parallel",),
            vmem_limit_bytes=48 * 1024 * 1024),
        cost_estimate=pl.CostEstimate(flops=flops,
                                      transcendentals=(OUT_W + 1) * B_pad,
                                      bytes_accessed=bytes_accessed),
    )(*args)

    policy = out[:B, 0:9]
    value = out[:B, 9:10]
    return policy, value


# ----------------------------------------------------------------------------
# Params + pure-JAX reference (mirrors the PyTorch module, eval-mode BN)
# ----------------------------------------------------------------------------
def init_params(key):
    keys = iter(jax.random.split(key, 64))

    def nrm(shape, scale=0.1):
        return scale * jax.random.normal(next(keys), shape, jnp.float32)

    def conv_bn(cout, cin, k):
        return dict(
            w=nrm((cout, cin, k, k)),
            b=nrm((cout,)),
            gamma=1.0 + nrm((cout,)),
            beta=nrm((cout,)),
            mean=nrm((cout,)),
            var=1.0 + 0.5 * jax.random.uniform(next(keys), (cout,), jnp.float32),
        )

    p = {}
    p['stem'] = conv_bn(NUM_FILTERS, 1, 3)
    p['res'] = [(conv_bn(NUM_FILTERS, NUM_FILTERS, 3),
                 conv_bn(NUM_FILTERS, NUM_FILTERS, 3)) for _ in range(NUM_RES)]
    p['policy_conv'] = conv_bn(2, NUM_FILTERS, 1)
    p['value_conv'] = conv_bn(1, NUM_FILTERS, 1)
    p['policy_fc'] = dict(w=nrm((9, 18)), b=nrm((9,)))
    p['value_fc1'] = dict(w=nrm((32, 9)), b=nrm((32,)))
    p['value_fc2'] = dict(w=nrm((1, 32)), b=nrm((1,)))
    return p


def reference_forward(x, p):
    dn = ('NCHW', 'OIHW', 'NCHW')

    def cb_apply(x, cb, pad):
        y = jax.lax.conv_general_dilated(x, cb['w'], (1, 1),
                                         ((pad, pad), (pad, pad)),
                                         dimension_numbers=dn)
        y = y + cb['b'][None, :, None, None]
        g, bt, m, v = cb['gamma'], cb['beta'], cb['mean'], cb['var']
        return ((y - m[None, :, None, None]) /
                jnp.sqrt(v[None, :, None, None] + EPS)
                * g[None, :, None, None] + bt[None, :, None, None])

    B = x.shape[0]
    h = jax.nn.relu(cb_apply(x, p['stem'], 1))
    for cb1, cb2 in p['res']:
        idn = h
        h1 = jax.nn.relu(cb_apply(h, cb1, 1))
        h2 = cb_apply(h1, cb2, 1)
        h = jax.nn.relu(h2 + idn)

    pol = jax.nn.relu(cb_apply(h, p['policy_conv'], 0)).reshape(B, 18)
    pol = pol @ p['policy_fc']['w'].T + p['policy_fc']['b']
    pol = jax.nn.softmax(pol, axis=1)

    val = jax.nn.relu(cb_apply(h, p['value_conv'], 0)).reshape(B, 9)
    val = jax.nn.relu(val @ p['value_fc1']['w'].T + p['value_fc1']['b'])
    val = jnp.tanh(val @ p['value_fc2']['w'].T + p['value_fc2']['b'])
    return pol, val


if __name__ == "__main__":
    key = jax.random.PRNGKey(0)
    kx, kp = jax.random.split(key)
    params = init_params(kp)
    lowered = lower_params(params)          # one-time weight lowering

    # small correctness check (B=2 -> TB=8, grid=(2,))
    B = 2
    x = jax.random.normal(kx, (B, 1, 3, 3), jnp.float32)   # NCHW like PyTorch
    policy, value = tictactoe_forward(x, lowered)
    jax.block_until_ready((policy, value))
    ref_p, ref_v = reference_forward(x, params)
    assert policy.shape == (B, 9) and value.shape == (B, 1)
    # bf16 matmul operands / bf16-carried activations (f32 accumulation) ->
    # loosened tolerance vs the f32 reference (intentional precision loss)
    assert jnp.allclose(policy, ref_p, atol=3e-2, rtol=3e-2), "policy mismatch"
    assert jnp.allclose(value, ref_v, atol=3e-2, rtol=3e-2), "value mismatch"
    # exact softmax normalization (no approx reciprocal)
    assert jnp.allclose(jnp.sum(policy, axis=-1), 1.0, atol=1e-5), "softmax norm"

    # exercise the gridded multi-step path with an awkward batch size
    # (B=250, block_b=96 -> 4 even steps of TB=64, only 6 padded rows)
    B2 = 250
    x2 = jax.random.normal(jax.random.PRNGKey(1), (B2, 1, 3, 3), jnp.float32)
    p2, v2 = tictactoe_forward(x2, lowered, block_b=96)
    jax.block_until_ready((p2, v2))
    rp2, rv2 = reference_forward(x2, params)
    assert jnp.allclose(p2, rp2, atol=3e-2, rtol=3e-2), "policy mismatch (grid)"
    assert jnp.allclose(v2, rv2, atol=3e-2, rtol=3e-2), "value mismatch (grid)"

    print("KERNEL_OK")
</pallas_src>

<mosaic_0001>
module attributes {stable_mosaic.version = 11 : i64} {
  func.func @tictactoe_kernel(%arg0: i32, %arg1: memref<8x9xf32, #tpu.memory_space<vmem>>, %arg2: memref<9x384xbf16, #tpu.memory_space<vmem>>, %arg3: memref<1x384xf32, #tpu.memory_space<vmem>>, %arg4: memref<6x384x384xbf16, #tpu.memory_space<vmem>>, %arg5: memref<6x1x384xf32, #tpu.memory_space<vmem>>, %arg6: memref<384x32xbf16, #tpu.memory_space<vmem>>, %arg7: memref<1x32xf32, #tpu.memory_space<vmem>>, %arg8: memref<32x256xbf16, #tpu.memory_space<vmem>>, %arg9: memref<1x256xf32, #tpu.memory_space<vmem>>, %arg10: memref<1x128xf32, #tpu.memory_space<vmem>>, %arg11: memref<1x1xf32, #tpu.memory_space<vmem>>, %arg12: memref<8x128xf32, #tpu.memory_space<vmem>>) attributes {dimension_semantics = [#tpu.dimension_semantics<parallel>], iteration_bounds = array<i64: 2>, scalar_prefetch = 0 : i64, scratch_operands = 0 : i64, tpu.core_type = #tpu.core_type<tc>, window_params = [{transform_indices = @transform_0, window_bounds = array<i64: 8, 9>}, {pipeline_mode = #tpu.pipeline_mode<synchronous>, transform_indices = @transform_1, window_bounds = array<i64: 9, 384>}, {pipeline_mode = #tpu.pipeline_mode<synchronous>, transform_indices = @transform_2, window_bounds = array<i64: 1, 384>}, {pipeline_mode = #tpu.pipeline_mode<synchronous>, transform_indices = @transform_3, window_bounds = array<i64: 6, 384, 384>}, {pipeline_mode = #tpu.pipeline_mode<synchronous>, transform_indices = @transform_4, window_bounds = array<i64: 6, 1, 384>}, {pipeline_mode = #tpu.pipeline_mode<synchronous>, transform_indices = @transform_5, window_bounds = array<i64: 384, 32>}, {pipeline_mode = #tpu.pipeline_mode<synchronous>, transform_indices = @transform_6, window_bounds = array<i64: 1, 32>}, {pipeline_mode = #tpu.pipeline_mode<synchronous>, transform_indices = @transform_7, window_bounds = array<i64: 32, 256>}, {pipeline_mode = #tpu.pipeline_mode<synchronous>, transform_indices = @transform_8, window_bounds = array<i64: 1, 256>}, {pipeline_mode = #tpu.pipeline_mode<synchronous>, transform_indices = @transform_9, window_bounds = array<i64: 1, 128>}, {pipeline_mode = #tpu.pipeline_mode<synchronous>, transform_indices = @transform_10, window_bounds = array<i64: 1, 1>}, {transform_indices = @transform_11, window_bounds = array<i64: 8, 128>}]} {
    %c0 = arith.constant 0 : index
    %c0_0 = arith.constant 0 : index
    %0 = vector.load %arg1[%c0, %c0_0] : memref<8x9xf32, #tpu.memory_space<vmem>>, vector<8x9xf32>
    %1 = arith.truncf %0 : vector<8x9xf32> to vector<8x9xbf16>
    %c0_1 = arith.constant 0 : index
    %c0_2 = arith.constant 0 : index
    %2 = vector.load %arg2[%c0_1, %c0_2] : memref<9x384xbf16, #tpu.memory_space<vmem>>, vector<9x384xbf16>
    %cst = arith.constant dense<0.000000e+00> : vector<8x384xf32>
    %3 = tpu.matmul %1, %2, %cst {dimension_numbers = #tpu.dot_dimension_numbers<[1], [0], [0], [1], [0, 0, 1, 1], [], []>} : vector<8x9xbf16>, vector<9x384xbf16>, vector<8x384xf32> -> vector<8x384xf32>
    %c0_3 = arith.constant 0 : index
    %c0_4 = arith.constant 0 : index
    %4 = vector.load %arg3[%c0_3, %c0_4] : memref<1x384xf32, #tpu.memory_space<vmem>>, vector<1x384xf32>
    %5 = vector.broadcast %4 : vector<1x384xf32> to vector<8x384xf32>
    %6 = arith.addf %3, %5 : vector<8x384xf32>
    %cst_5 = arith.constant 0.000000e+00 : f32
    %7 = vector.broadcast %cst_5 : f32 to vector<8x384xf32>
    %8 = arith.maximumf %6, %7 : vector<8x384xf32>
    %9 = arith.truncf %8 : vector<8x384xf32> to vector<8x384xbf16>
    %c0_6 = arith.constant 0 : index
    %c0_7 = arith.constant 0 : index
    %c0_8 = arith.constant 0 : index
    %10 = vector.load %arg4[%c0_6, %c0_7, %c0_8] : memref<6x384x384xbf16, #tpu.memory_space<vmem>>, vector<1x384x384xbf16>
    %11 = vector.shape_cast %10 : vector<1x384x384xbf16> to vector<384x384xbf16>
    %cst_9 = arith.constant dense<0.000000e+00> : vector<8x384xf32>
    %12 = tpu.matmul %9, %11, %cst_9 {dimension_numbers = #tpu.dot_dimension_numbers<[1], [0], [0], [1], [0, 0, 1, 1], [], []>} : vector<8x384xbf16>, vector<384x384xbf16>, vector<8x384xf32> -> vector<8x384xf32>
    %c0_10 = arith.constant 0 : index
    %c0_11 = arith.constant 0 : index
    %c0_12 = arith.constant 0 : index
    %13 = vector.load %arg5[%c0_10, %c0_11, %c0_12] : memref<6x1x384xf32, #tpu.memory_space<vmem>>, vector<1x1x384xf32>
    %14 = vector.shape_cast %13 : vector<1x1x384xf32> to vector<1x384xf32>
    %15 = vector.broadcast %14 : vector<1x384xf32> to vector<8x384xf32>
    %16 = arith.addf %12, %15 : vector<8x384xf32>
    %cst_13 = arith.constant 0.000000e+00 : f32
    %17 = vector.broadcast %cst_13 : f32 to vector<8x384xf32>
    %18 = arith.maximumf %16, %17 : vector<8x384xf32>
    %19 = arith.truncf %18 : vector<8x384xf32> to vector<8x384xbf16>
    %c1 = arith.constant 1 : index
    %c0_14 = arith.constant 0 : index
    %c0_15 = arith.constant 0 : index
    %20 = vector.load %arg4[%c1, %c0_14, %c0_15] : memref<6x384x384xbf16, #tpu.memory_space<vmem>>, vector<1x384x384xbf16>
    %21 = vector.shape_cast %20 : vector<1x384x384xbf16> to vector<384x384xbf16>
    %cst_16 = arith.constant dense<0.000000e+00> : vector<8x384xf32>
    %22 = tpu.matmul %19, %21, %cst_16 {dimension_numbers = #tpu.dot_dimension_numbers<[1], [0], [0], [1], [0, 0, 1, 1], [], []>} : vector<8x384xbf16>, vector<384x384xbf16>, vector<8x384xf32> -> vector<8x384xf32>
    %c1_17 = arith.constant 1 : index
    %c0_18 = arith.constant 0 : index
    %c0_19 = arith.constant 0 : index
    %23 = vector.load %arg5[%c1_17, %c0_18, %c0_19] : memref<6x1x384xf32, #tpu.memory_space<vmem>>, vector<1x1x384xf32>
    %24 = vector.shape_cast %23 : vector<1x1x384xf32> to vector<1x384xf32>
    %25 = vector.broadcast %24 : vector<1x384xf32> to vector<8x384xf32>
    %26 = arith.addf %22, %25 : vector<8x384xf32>
    %27 = arith.extf %9 : vector<8x384xbf16> to vector<8x384xf32>
    %28 = arith.addf %26, %27 : vector<8x384xf32>
    %cst_20 = arith.constant 0.000000e+00 : f32
    %29 = vector.broadcast %cst_20 : f32 to vector<8x384xf32>
    %30 = arith.maximumf %28, %29 : vector<8x384xf32>
    %31 = arith.truncf %30 : vector<8x384xf32> to vector<8x384xbf16>
    %c2 = arith.constant 2 : index
    %c0_21 = arith.constant 0 : index
    %c0_22 = arith.constant 0 : index
    %32 = vector.load %arg4[%c2, %c0_21, %c0_22] : memref<6x384x384xbf16, #tpu.memory_space<vmem>>, vector<1x384x384xbf16>
    %33 = vector.shape_cast %32 : vector<1x384x384xbf16> to vector<384x384xbf16>
    %cst_23 = arith.constant dense<0.000000e+00> : vector<8x384xf32>
    %34 = tpu.matmul %31, %33, %cst_23 {dimension_numbers = #tpu.dot_dimension_numbers<[1], [0], [0], [1], [0, 0, 1, 1], [], []>} : vector<8x384xbf16>, vector<384x384xbf16>, vector<8x384xf32> -> vector<8x384xf32>
    %c2_24 = arith.constant 2 : index
    %c0_25 = arith.constant 0 : index
    %c0_26 = arith.constant 0 : index
    %35 = vector.load %arg5[%c2_24, %c0_25, %c0_26] : memref<6x1x384xf32, #tpu.memory_space<vmem>>, vector<1x1x384xf32>
    %36 = vector.shape_cast %35 : vector<1x1x384xf32> to vector<1x384xf32>
    %37 = vector.broadcast %36 : vector<1x384xf32> to vector<8x384xf32>
    %38 = arith.addf %34, %37 : vector<8x384xf32>
    %cst_27 = arith.constant 0.000000e+00 : f32
    %39 = vector.broadcast %cst_27 : f32 to vector<8x384xf32>
    %40 = arith.maximumf %38, %39 : vector<8x384xf32>
    %41 = arith.truncf %40 : vector<8x384xf32> to vector<8x384xbf16>
    %c3 = arith.constant 3 : index
    %c0_28 = arith.constant 0 : index
    %c0_29 = arith.constant 0 : index
    %42 = vector.load %arg4[%c3, %c0_28, %c0_29] : memref<6x384x384xbf16, #tpu.memory_space<vmem>>, vector<1x384x384xbf16>
    %43 = vector.shape_cast %42 : vector<1x384x384xbf16> to vector<384x384xbf16>
    %cst_30 = arith.constant dense<0.000000e+00> : vector<8x384xf32>
    %44 = tpu.matmul %41, %43, %cst_30 {dimension_numbers = #tpu.dot_dimension_numbers<[1], [0], [0], [1], [0, 0, 1, 1], [], []>} : vector<8x384xbf16>, vector<384x384xbf16>, vector<8x384xf32> -> vector<8x384xf32>
    %c3_31 = arith.constant 3 : index
    %c0_32 = arith.constant 0 : index
    %c0_33 = arith.constant 0 : index
    %45 = vector.load %arg5[%c3_31, %c0_32, %c0_33] : memref<6x1x384xf32, #tpu.memory_space<vmem>>, vector<1x1x384xf32>
    %46 = vector.shape_cast %45 : vector<1x1x384xf32> to vector<1x384xf32>
    %47 = vector.broadcast %46 : vector<1x384xf32> to vector<8x384xf32>
    %48 = arith.addf %44, %47 : vector<8x384xf32>
    %49 = arith.extf %31 : vector<8x384xbf16> to vector<8x384xf32>
    %50 = arith.addf %48, %49 : vector<8x384xf32>
    %cst_34 = arith.constant 0.000000e+00 : f32
    %51 = vector.broadcast %cst_34 : f32 to vector<8x384xf32>
    %52 = arith.maximumf %50, %51 : vector<8x384xf32>
    %53 = arith.truncf %52 : vector<8x384xf32> to vector<8x384xbf16>
    %c4 = arith.constant 4 : index
    %c0_35 = arith.constant 0 : index
    %c0_36 = arith.constant 0 : index
    %54 = vector.load %arg4[%c4, %c0_35, %c0_36] : memref<6x384x384xbf16, #tpu.memory_space<vmem>>, vector<1x384x384xbf16>
    %55 = vector.shape_cast %54 : vector<1x384x384xbf16> to vector<384x384xbf16>
    %cst_37 = arith.constant dense<0.000000e+00> : vector<8x384xf32>
    %56 = tpu.matmul %53, %55, %cst_37 {dimension_numbers = #tpu.dot_dimension_numbers<[1], [0], [0], [1], [0, 0, 1, 1], [], []>} : vector<8x384xbf16>, vector<384x384xbf16>, vector<8x384xf32> -> vector<8x384xf32>
    %c4_38 = arith.constant 4 : index
    %c0_39 = arith.constant 0 : index
    %c0_40 = arith.constant 0 : index
    %57 = vector.load %arg5[%c4_38, %c0_39, %c0_40] : memref<6x1x384xf32, #tpu.memory_space<vmem>>, vector<1x1x384xf32>
    %58 = vector.shape_cast %57 : vector<1x1x384xf32> to vector<1x384xf32>
    %59 = vector.broadcast %58 : vector<1x384xf32> to vector<8x384xf32>
    %60 = arith.addf %56, %59 : vector<8x384xf32>
    %cst_41 = arith.constant 0.000000e+00 : f32
    %61 = vector.broadcast %cst_41 : f32 to vector<8x384xf32>
    %62 = arith.maximumf %60, %61 : vector<8x384xf32>
    %63 = arith.truncf %62 : vector<8x384xf32> to vector<8x384xbf16>
    %c5 = arith.constant 5 : index
    %c0_42 = arith.constant 0 : index
    %c0_43 = arith.constant 0 : index
    %64 = vector.load %arg4[%c5, %c0_42, %c0_43] : memref<6x384x384xbf16, #tpu.memory_space<vmem>>, vector<1x384x384xbf16>
    %65 = vector.shape_cast %64 : vector<1x384x384xbf16> to vector<384x384xbf16>
    %cst_44 = arith.constant dense<0.000000e+00> : vector<8x384xf32>
    %66 = tpu.matmul %63, %65, %cst_44 {dimension_numbers = #tpu.dot_dimension_numbers<[1], [0], [0], [1], [0, 0, 1, 1], [], []>} : vector<8x384xbf16>, vector<384x384xbf16>, vector<8x384xf32> -> vector<8x384xf32>
    %c5_45 = arith.constant 5 : index
    %c0_46 = arith.constant 0 : index
    %c0_47 = arith.constant 0 : index
    %67 = vector.load %arg5[%c5_45, %c0_46, %c0_47] : memref<6x1x384xf32, #tpu.memory_space<vmem>>, vector<1x1x384xf32>
    %68 = vector.shape_cast %67 : vector<1x1x384xf32> to vector<1x384xf32>
    %69 = vector.broadcast %68 : vector<1x384xf32> to vector<8x384xf32>
    %70 = arith.addf %66, %69 : vector<8x384xf32>
    %71 = arith.extf %53 : vector<8x384xbf16> to vector<8x384xf32>
    %72 = arith.addf %70, %71 : vector<8x384xf32>
    %cst_48 = arith.constant 0.000000e+00 : f32
    %73 = vector.broadcast %cst_48 : f32 to vector<8x384xf32>
    %74 = arith.maximumf %72, %73 : vector<8x384xf32>
    %75 = arith.truncf %74 : vector<8x384xf32> to vector<8x384xbf16>
    %c0_49 = arith.constant 0 : index
    %c0_50 = arith.constant 0 : index
    %76 = vector.load %arg6[%c0_49, %c0_50] : memref<384x32xbf16, #tpu.memory_space<vmem>>, vector<384x32xbf16>
    %cst_51 = arith.constant dense<0.000000e+00> : vector<8x32xf32>
    %77 = tpu.matmul %75, %76, %cst_51 {dimension_numbers = #tpu.dot_dimension_numbers<[1], [0], [0], [1], [0, 0, 1, 1], [], []>} : vector<8x384xbf16>, vector<384x32xbf16>, vector<8x32xf32> -> vector<8x32xf32>
    %c0_52 = arith.constant 0 : index
    %c0_53 = arith.constant 0 : index
    %78 = vector.load %arg7[%c0_52, %c0_53] : memref<1x32xf32, #tpu.memory_space<vmem>>, vector<1x32xf32>
    %79 = vector.broadcast %78 : vector<1x32xf32> to vector<8x32xf32>
    %80 = arith.addf %77, %79 : vector<8x32xf32>
    %cst_54 = arith.constant 0.000000e+00 : f32
    %81 = vector.broadcast %cst_54 : f32 to vector<8x32xf32>
    %82 = arith.maximumf %80, %81 : vector<8x32xf32>
    %83 = arith.truncf %82 : vector<8x32xf32> to vector<8x32xbf16>
    %c0_55 = arith.constant 0 : index
    %c0_56 = arith.constant 0 : index
    %84 = vector.load %arg8[%c0_55, %c0_56] : memref<32x256xbf16, #tpu.memory_space<vmem>>, vector<32x256xbf16>
    %cst_57 = arith.constant dense<0.000000e+00> : vector<8x256xf32>
    %85 = tpu.matmul %83, %84, %cst_57 {dimension_numbers = #tpu.dot_dimension_numbers<[1], [0], [0], [1], [0, 0, 1, 1], [], []>} : vector<8x32xbf16>, vector<32x256xbf16>, vector<8x256xf32> -> vector<8x256xf32>
    %c0_58 = arith.constant 0 : index
    %c0_59 = arith.constant 0 : index
    %86 = vector.load %arg9[%c0_58, %c0_59] : memref<1x256xf32, #tpu.memory_space<vmem>>, vector<1x256xf32>
    %87 = vector.broadcast %86 : vector<1x256xf32> to vector<8x256xf32>
    %88 = arith.addf %85, %87 : vector<8x256xf32>
    %89 = vector.extract_strided_slice %88 {offsets = [0, 0], sizes = [8, 128], strides = [1, 1]} : vector<8x256xf32> to vector<8x128xf32>
    %90 = vector.extract_strided_slice %88 {offsets = [0, 128], sizes = [8, 128], strides = [1, 1]} : vector<8x256xf32> to vector<8x128xf32>
    %91 = tpu.iota {dimensions = array<i32: 1>} : vector<8x128xi32>
    %c9_i32 = arith.constant 9 : i32
    %92 = vector.broadcast %c9_i32 : i32 to vector<8x128xi32>
    %93 = arith.cmpi slt, %91, %92 : vector<8x128xi32>
    %cst_60 = arith.constant -1.000000e+30 : f32
    %94 = vector.broadcast %cst_60 : f32 to vector<8x128xf32>
    %95 = arith.select %93, %89, %94 : vector<8x128xi1>, vector<8x128xf32>
    %cst_61 = arith.constant dense<0xFF800000> : vector<8xf32>
    %96 = vector.multi_reduction <maximumf>, %95, %cst_61 [1] : vector<8x128xf32> to vector<8xf32>
    %97 = vector.shape_cast %96 : vector<8xf32> to vector<8x1xf32>
    %98 = vector.broadcast %97 : vector<8x1xf32> to vector<8x128xf32>
    %99 = arith.subf %95, %98 : vector<8x128xf32>
    %100 = math.exp %99 : vector<8x128xf32>
    %cst_62 = arith.constant dense<0.000000e+00> : vector<8xf32>
    %101 = vector.multi_reduction <add>, %100, %cst_62 [1] : vector<8x128xf32> to vector<8xf32>
    %102 = vector.shape_cast %101 : vector<8xf32> to vector<8x1xf32>
    %103 = vector.broadcast %102 : vector<8x1xf32> to vector<8x128xf32>
    %104 = arith.divf %100, %103 : vector<8x128xf32>
    %cst_63 = arith.constant 0.000000e+00 : f32
    %105 = vector.broadcast %cst_63 : f32 to vector<8x128xf32>
    %106 = arith.maximumf %90, %105 : vector<8x128xf32>
    %c0_64 = arith.constant 0 : index
    %c0_65 = arith.constant 0 : index
    %107 = vector.load %arg10[%c0_64, %c0_65] : memref<1x128xf32, #tpu.memory_space<vmem>>, vector<1x128xf32>
    %108 = vector.broadcast %107 : vector<1x128xf32> to vector<8x128xf32>
    %109 = arith.mulf %106, %108 : vector<8x128xf32>
    %cst_66 = arith.constant dense<0.000000e+00> : vector<8xf32>
    %110 = vector.multi_reduction <add>, %109, %cst_66 [1] : vector<8x128xf32> to vector<8xf32>
    %111 = vector.shape_cast %110 : vector<8xf32> to vector<8x1xf32>
    %c0_67 = arith.constant 0 : index
    %c0_68 = arith.constant 0 : index
    %112 = vector.load %arg11[%c0_67, %c0_68] : memref<1x1xf32, #tpu.memory_space<vmem>>, vector<1x1xf32>
    %113 = vector.broadcast %112 : vector<1x1xf32> to vector<8x1xf32>
    %114 = arith.addf %111, %113 : vector<8x1xf32>
    %115 = math.tanh %114 : vector<8x1xf32>
    %c9_i32_69 = arith.constant 9 : i32
    %116 = vector.broadcast %c9_i32_69 : i32 to vector<8x128xi32>
    %117 = arith.cmpi eq, %91, %116 : vector<8x128xi32>
    %118 = vector.shape_cast %115 : vector<8x1xf32> to vector<8x1xf32>
    %119 = vector.broadcast %118 : vector<8x1xf32> to vector<8x128xf32>
    %120 = arith.select %117, %119, %104 : vector<8x128xi1>, vector<8x128xf32>
    %c0_70 = arith.constant 0 : index
    %c0_71 = arith.constant 0 : index
    %121 = vector.load %arg12[%c0_70, %c0_71] : memref<8x128xf32, #tpu.memory_space<vmem>>, vector<8x128xf32>
    tpu.vector_store %arg12[%c0_70, %c0_71], %120 {strides = array<i32>} : memref<8x128xf32, #tpu.memory_space<vmem>>, vector<8x128xf32>,
    return
  }
  func.func @transform_0(%arg0: i32) -> (i32, i32) {
    %c0_i32 = arith.constant 0 : i32
    %c0_i32_0 = arith.constant 0 : i32
    return %arg0, %c0_i32 : i32, i32
  }
  func.func @transform_1(%arg0: i32) -> (i32, i32) {
    %c0_i32 = arith.constant 0 : i32
    %c0_i32_0 = arith.constant 0 : i32
    %c0_i32_1 = arith.constant 0 : i32
    return %c0_i32, %c0_i32_0 : i32, i32
  }
  func.func @transform_2(%arg0: i32) -> (i32, i32) {
    %c0_i32 = arith.constant 0 : i32
    %c0_i32_0 = arith.constant 0 : i32
    %c0_i32_1 = arith.constant 0 : i32
    return %c0_i32, %c0_i32_0 : i32, i32
  }
  func.func @transform_3(%arg0: i32) -> (i32, i32, i32) {
    %c0_i32 = arith.constant 0 : i32
    %c0_i32_0 = arith.constant 0 : i32
    %c0_i32_1 = arith.constant 0 : i32
    %c0_i32_2 = arith.constant 0 : i32
    return %c0_i32, %c0_i32_0, %c0_i32_1 : i32, i32, i32
  }
  func.func @transform_4(%arg0: i32) -> (i32, i32, i32) {
    %c0_i32 = arith.constant 0 : i32
    %c0_i32_0 = arith.constant 0 : i32
    %c0_i32_1 = arith.constant 0 : i32
    %c0_i32_2 = arith.constant 0 : i32
    return %c0_i32, %c0_i32_0, %c0_i32_1 : i32, i32, i32
  }
  func.func @transform_5(%arg0: i32) -> (i32, i32) {
    %c0_i32 = arith.constant 0 : i32
    %c0_i32_0 = arith.constant 0 : i32
    %c0_i32_1 = arith.constant 0 : i32
    return %c0_i32, %c0_i32_0 : i32, i32
  }
  func.func @transform_6(%arg0: i32) -> (i32, i32) {
    %c0_i32 = arith.constant 0 : i32
    %c0_i32_0 = arith.constant 0 : i32
    %c0_i32_1 = arith.constant 0 : i32
    return %c0_i32, %c0_i32_0 : i32, i32
  }
  func.func @transform_7(%arg0: i32) -> (i32, i32) {
    %c0_i32 = arith.constant 0 : i32
    %c0_i32_0 = arith.constant 0 : i32
    %c0_i32_1 = arith.constant 0 : i32
    return %c0_i32, %c0_i32_0 : i32, i32
  }
  func.func @transform_8(%arg0: i32) -> (i32, i32) {
    %c0_i32 = arith.constant 0 : i32
    %c0_i32_0 = arith.constant 0 : i32
    %c0_i32_1 = arith.constant 0 : i32
    return %c0_i32, %c0_i32_0 : i32, i32
  }
  func.func @transform_9(%arg0: i32) -> (i32, i32) {
    %c0_i32 = arith.constant 0 : i32
    %c0_i32_0 = arith.constant 0 : i32
    %c0_i32_1 = arith.constant 0 : i32
    return %c0_i32, %c0_i32_0 : i32, i32
  }
  func.func @transform_10(%arg0: i32) -> (i32, i32) {
    %c0_i32 = arith.constant 0 : i32
    %c0_i32_0 = arith.constant 0 : i32
    %c0_i32_1 = arith.constant 0 : i32
    return %c0_i32, %c0_i32_0 : i32, i32
  }
  func.func @transform_11(%arg0: i32) -> (i32, i32) {
    %c0_i32 = arith.constant 0 : i32
    %c0_i32_0 = arith.constant 0 : i32
    return %arg0, %c0_i32 : i32, i32
  }
}

</mosaic_0001>

<llo_original>
// kernel: tpu_custom_call.1
$region0: #{tpu_custom_call.1}
  #allocation0 [shape = 'u32[]', space=smem, size = 0x4, offset = 0x4, fixed_abs, tag = 'smem constant byte address 0x4 - core index']
  #allocation1 [shape = 'u32[144,128]{1,0:T(1,128)}', space=vmem, size = 0x12000, scoped, tag = 'internal scratch']
  #allocation2 [shape = 'f32[1,1]{1,0:T(1,128)S(1)}', space=vmem, size = 0x200, scoped, tag = 'scoped memory for tpu_custom_call.1']
  %s0 = inlined_call_operand.hbm [shape: f32[16,9], index: 0, kind: input, shape index: {}]
  %s1 = inlined_call_operand.hbm [shape: bf16[9,384], index: 1, kind: input, shape index: {}]
  %s2 = inlined_call_operand.hbm [shape: f32[1,384], index: 2, kind: input, shape index: {}]
  %s3 = inlined_call_operand.hbm [shape: bf16[6,384,384], index: 3, kind: input, shape index: {}]
  %s4 = inlined_call_operand.hbm [shape: f32[6,1,384], index: 4, kind: input, shape index: {}]
  %s5 = inlined_call_operand.vmem [shape: bf16[384,32], index: 5, kind: input, shape index: {}]
  %s6 = inlined_call_operand.hbm [shape: f32[1,32], index: 6, kind: input, shape index: {}]
  %s7 = inlined_call_operand.hbm [shape: bf16[32,256], index: 7, kind: input, shape index: {}]
  %s8 = inlined_call_operand.hbm [shape: f32[1,256], index: 8, kind: input, shape index: {}]
  %s9 = inlined_call_operand.hbm [shape: f32[1,128], index: 9, kind: input, shape index: {}]
  %s10 = inlined_call_operand.<no memory space> [shape: f32[1,1], index: 10, kind: input, shape index: {}]
  %s11 = inlined_call_operand.hbm [shape: f32[16,128], index: 11, kind: output, shape index: {}]
  %s12 = sld [smem:[#allocation0]]
  $region113: #{tpu_custom_call.1} parent=0
    _
  %s14 = ssub.s32 1, %s12
  %s15 = scalar_select 0, %s14, %s12
  %v16 = vstv %s10
  %17 = vst [vmem:[#allocation2] sm:$0x1] %v16
  $region1: #{tpu_custom_call.1} parent=0
    #allocation3 [shape = 'u8[8192]{0}', space=vmem, size = 0x2000, scoped, tag = 'input window, operand 0']
    #allocation4 [shape = 's32[2]{0}', space=sflag, size = 0x8, scoped, tag = 'scoped memory for tpu_custom_call.1']
    #allocation5 [shape = 's32[2]{0}', space=sflag, size = 0x8, scoped, tag = 'scoped memory for tpu_custom_call.1']
    #allocation6 [shape = 'u8[12288]{0}', space=vmem, size = 0x3000, scoped, tag = 'input window, operand 1, single buffered']
    #allocation7 [shape = 's32[1]{0}', space=sflag, size = 0x4, scoped, tag = 'scoped memory for tpu_custom_call.1']
    #allocation8 [shape = 'u8[1536]{0}', space=vmem, size = 0x800, scoped, tag = 'input window, operand 2, single buffered']
    #allocation9 [shape = 'u8[1769472]{0}', space=vmem, size = 0x1b0000, scoped, tag = 'input window, operand 3, single buffered']
    #allocation10 [shape = 's32[1]{0}', space=sflag, size = 0x4, scoped, tag = 'scoped memory for tpu_custom_call.1']
    #allocation11 [shape = 'u8[9216]{0}', space=vmem, size = 0x2400, scoped, tag = 'input window, operand 4, single buffered']
    #allocation12 [shape = 'u8[512]{0}', space=vmem, size = 0x400, scoped, tag = 'input window, operand 6, single buffered']
    #allocation13 [shape = 's32[1]{0}', space=sflag, size = 0x4, scoped, tag = 'scoped memory for tpu_custom_call.1']
    #allocation14 [shape = 'u8[16384]{0}', space=vmem, size = 0x4000, scoped, tag = 'input window, operand 7, single buffered']
    #allocation15 [shape = 'u8[1024]{0}', space=vmem, size = 0x400, scoped, tag = 'input window, operand 8, single buffered']
    #allocation16 [shape = 's32[1]{0}', space=sflag, size = 0x4, scoped, tag = 'scoped memory for tpu_custom_call.1']
    #allocation17 [shape = 'u8[512]{0}', space=vmem, size = 0x400, scoped, tag = 'input window, operand 9, single buffered']
    #allocation18 [shape = 'u8[8192]{0}', space=vmem, size = 0x2000, scoped, tag = 'output window, operand 0']
    %18 = vsyncpa [#allocation4], 0
    %s19 = scalar_lea.sflag [#allocation4], 1
    %20 = vsyncpa %s19, 0
    %21 = vsyncpa [#allocation7], 0
    %22 = vsyncpa [#allocation10], 0
    %23 = vsyncpa [#allocation13], 0
    %24 = vsyncpa [#allocation16], 0
    %25 = vsyncpa [#allocation5], 0
    %s26 = scalar_lea.sflag [#allocation5], 1
    %27 = vsyncpa %s26, 0
    loop: start=0, step=1, limit=4
    $region2: #{tpu_custom_call.1} parent=1 // loop_pre_header
      _
    $region3: #{tpu_custom_call.1} parent=1 // loop_header
      %s29 = sphi 0, %s33
      %p30 = scmp.ge.s32.totalorder %s29, 4
      %s39 = sphi 0, %s41
      %s42 = sphi 0, %s39
      %s43 = sphi 0, %s42
      %s59 = sphi 0, %s43
      %s63 = sphi 0, %s63
      %s65 = sphi 0, %s63
      %s66 = sphi 0, %s65
      %s80 = sphi 0, %s66
      %s84 = sphi 0, %s84
      %s86 = sphi 0, %s84
      %s87 = sphi 0, %s86
      %s101 = sphi 0, %s87
      %s105 = sphi 0, %s105
      %s107 = sphi 0, %s105
      %s108 = sphi 0, %s107
      %s122 = sphi 0, %s108
      %s126 = sphi 0, %s126
      %s128 = sphi 0, %s126
      %s129 = sphi 0, %s128
      %s143 = sphi 0, %s129
      %s147 = sphi 0, %s147
      %s149 = sphi 0, %s147
      %s150 = sphi 0, %s149
      %s164 = sphi 0, %s150
      %s168 = sphi 0, %s168
      %s170 = sphi 0, %s168
      %s171 = sphi 0, %s170
      %s185 = sphi 0, %s171
      %s189 = sphi 0, %s189
      %s191 = sphi 0, %s189
      %s192 = sphi 0, %s191
      %s206 = sphi 0, %s192
      %s210 = sphi 0, %s210
      %s212 = sphi 0, %s210
      %s213 = sphi 0, %s212
      %s227 = sphi 0, %s213
      %s231 = sphi 0, %s231
      %s233 = sphi 0, %s231
      %s234 = sphi 0, %s233
      %s248 = sphi 0, %s234
      %s252 = sphi 0, %s252
      %s254 = sphi 0, %s252
      %s255 = sphi 0, %s254
      %s269 = sphi 0, %s255
      %s275 = sphi 0, %s277
      %s278 = sphi 0, %s275
      %s279 = sphi 0, %s278
      %s295 = sphi 0, %s279
    $region4: #{tpu_custom_call.1} parent=1 // loop_header_branch
      %32 = sbr.rel (%p30) target = $region8
    $region5: #{tpu_custom_call.1} parent=1 // loop_body
      %s34 = ssub.s32 %s29, 1
      %s35 = ssub.s32 %s29, 2
      %s36 = sadd.s32 %s29, 1
      %s37 = ssub.s32 %s29, %s36
      %p38 = scmp.eq.s32.totalorder %s37, 0
      %s40 = sadd.s32 %s39, 1
      %s41 = scalar_select %p38, %s39, %s40
      %p44 = pneg %p38
      %p45 = scmp.eq.s32.totalorder %s29, 1
      %p46 = por %p44, %p45
      %p47 = scmp.ne.s32.totalorder %s39, %s42
      %p48 = scmp.eq.s32.totalorder %s29, 0
      %p49 = por %p47, %p48
      %p50 = scmp.ne.s32.totalorder %s39, %s42
      %p51 = scmp.eq.s32.totalorder %s34, 1
      %p52 = por %p50, %p51
      %p53 = scmp.ne.s32.totalorder %s42, %s43
      %p54 = scmp.eq.s32.totalorder %s34, 0
      %p55 = por %p53, %p54
      %p56 = scmp.ne.s32.totalorder %s42, %s43
      %p57 = scmp.eq.s32.totalorder %s35, 1
      %p58 = por %p56, %p57
      %p60 = scmp.ne.s32.totalorder %s43, %s59
      %p61 = scmp.eq.s32.totalorder %s35, 0
      %p62 = por %p60, %p61
      %s64 = sadd.s32 %s63, 1
      %p67 = scmp.eq.s32.totalorder %s29, 1
      %p68 = scmp.ne.s32.totalorder %s63, %s65
      %p69 = scmp.eq.s32.totalorder %s29, 0
      %p70 = por %p68, %p69
      %p71 = scmp.ne.s32.totalorder %s63, %s65
      %p72 = scmp.eq.s32.totalorder %s34, 1
      %p73 = por %p71, %p72
      %p74 = scmp.ne.s32.totalorder %s65, %s66
      %p75 = scmp.eq.s32.totalorder %s34, 0
      %p76 = por %p74, %p75
      %p77 = scmp.ne.s32.totalorder %s65, %s66
      %p78 = scmp.eq.s32.totalorder %s35, 1
      %p79 = por %p77, %p78
      %p81 = scmp.ne.s32.totalorder %s66, %s80
      %p82 = scmp.eq.s32.totalorder %s35, 0
      %p83 = por %p81, %p82
      %s85 = sadd.s32 %s84, 1
      %p88 = scmp.eq.s32.totalorder %s29, 1
      %p89 = scmp.ne.s32.totalorder %s84, %s86
      %p90 = scmp.eq.s32.totalorder %s29, 0
      %p91 = por %p89, %p90
      %p92 = scmp.ne.s32.totalorder %s84, %s86
      %p93 = scmp.eq.s32.totalorder %s34, 1
      %p94 = por %p92, %p93
      %p95 = scmp.ne.s32.totalorder %s86, %s87
      %p96 = scmp.eq.s32.totalorder %s34, 0
      %p97 = por %p95, %p96
      %p98 = scmp.ne.s32.totalorder %s86, %s87
      %p99 = scmp.eq.s32.totalorder %s35, 1
      %p100 = por %p98, %p99
      %p102 = scmp.ne.s32.totalorder %s87, %s101
      %p103 = scmp.eq.s32.totalorder %s35, 0
      %p104 = por %p102, %p103
      %s106 = sadd.s32 %s105, 1
      %p109 = scmp.eq.s32.totalorder %s29, 1
      %p110 = scmp.ne.s32.totalorder %s105, %s107
      %p111 = scmp.eq.s32.totalorder %s29, 0
      %p112 = por %p110, %p111
      %p113 = scmp.ne.s32.totalorder %s105, %s107
      %p114 = scmp.eq.s32.totalorder %s34, 1
      %p115 = por %p113, %p114
      %p116 = scmp.ne.s32.totalorder %s107, %s108
      %p117 = scmp.eq.s32.totalorder %s34, 0
      %p118 = por %p116, %p117
      %p119 = scmp.ne.s32.totalorder %s107, %s108
      %p120 = scmp.eq.s32.totalorder %s35, 1
      %p121 = por %p119, %p120
      %p123 = scmp.ne.s32.totalorder %s108, %s122
      %p124 = scmp.eq.s32.totalorder %s35, 0
      %p125 = por %p123, %p124
      %s127 = sadd.s32 %s126, 1
      %p130 = scmp.eq.s32.totalorder %s29, 1
      %p131 = scmp.ne.s32.totalorder %s126, %s128
      %p132 = scmp.eq.s32.totalorder %s29, 0
      %p133 = por %p131, %p132
      %p134 = scmp.ne.s32.totalorder %s126, %s128
      %p135 = scmp.eq.s32.totalorder %s34, 1
      %p136 = por %p134, %p135
      %p137 = scmp.ne.s32.totalorder %s128, %s129
      %p138 = scmp.eq.s32.totalorder %s34, 0
      %p139 = por %p137, %p138
      %p140 = scmp.ne.s32.totalorder %s128, %s129
      %p141 = scmp.eq.s32.totalorder %s35, 1
      %p142 = por %p140, %p141
      %p144 = scmp.ne.s32.totalorder %s129, %s143
      %p145 = scmp.eq.s32.totalorder %s35, 0
      %p146 = por %p144, %p145
      %s148 = sadd.s32 %s147, 1
      %p151 = scmp.eq.s32.totalorder %s29, 1
      %p152 = scmp.ne.s32.totalorder %s147, %s149
      %p153 = scmp.eq.s32.totalorder %s29, 0
      %p154 = por %p152, %p153
      %p155 = scmp.ne.s32.totalorder %s147, %s149
      %p156 = scmp.eq.s32.totalorder %s34, 1
      %p157 = por %p155, %p156
      %p158 = scmp.ne.s32.totalorder %s149, %s150
      %p159 = scmp.eq.s32.totalorder %s34, 0
      %p160 = por %p158, %p159
      %p161 = scmp.ne.s32.totalorder %s149, %s150
      %p162 = scmp.eq.s32.totalorder %s35, 1
      %p163 = por %p161, %p162
      %p165 = scmp.ne.s32.totalorder %s150, %s164
      %p166 = scmp.eq.s32.totalorder %s35, 0
      %p167 = por %p165, %p166
      %s169 = sadd.s32 %s168, 1
      %p172 = scmp.eq.s32.totalorder %s29, 1
      %p173 = scmp.ne.s32.totalorder %s168, %s170
      %p174 = scmp.eq.s32.totalorder %s29, 0
      %p175 = por %p173, %p174
      %p176 = scmp.ne.s32.totalorder %s168, %s170
      %p177 = scmp.eq.s32.totalorder %s34, 1
      %p178 = por %p176, %p177
      %p179 = scmp.ne.s32.totalorder %s170, %s171
      %p180 = scmp.eq.s32.totalorder %s34, 0
      %p181 = por %p179, %p180
      %p182 = scmp.ne.s32.totalorder %s170, %s171
      %p183 = scmp.eq.s32.totalorder %s35, 1
      %p184 = por %p182, %p183
      %p186 = scmp.ne.s32.totalorder %s171, %s185
      %p187 = scmp.eq.s32.totalorder %s35, 0
      %p188 = por %p186, %p187
      %s190 = sadd.s32 %s189, 1
      %p193 = scmp.eq.s32.totalorder %s29, 1
      %p194 = scmp.ne.s32.totalorder %s189, %s191
      %p195 = scmp.eq.s32.totalorder %s29, 0
      %p196 = por %p194, %p195
      %p197 = scmp.ne.s32.totalorder %s189, %s191
      %p198 = scmp.eq.s32.totalorder %s34, 1
      %p199 = por %p197, %p198
      %p200 = scmp.ne.s32.totalorder %s191, %s192
      %p201 = scmp.eq.s32.totalorder %s34, 0
      %p202 = por %p200, %p201
      %p203 = scmp.ne.s32.totalorder %s191, %s192
      %p204 = scmp.eq.s32.totalorder %s35, 1
      %p205 = por %p203, %p204
      %p207 = scmp.ne.s32.totalorder %s192, %s206
      %p208 = scmp.eq.s32.totalorder %s35, 0
      %p209 = por %p207, %p208
      %s211 = sadd.s32 %s210, 1
      %p214 = scmp.eq.s32.totalorder %s29, 1
      %p215 = scmp.ne.s32.totalorder %s210, %s212
      %p216 = scmp.eq.s32.totalorder %s29, 0
      %p217 = por %p215, %p216
      %p218 = scmp.ne.s32.totalorder %s210, %s212
      %p219 = scmp.eq.s32.totalorder %s34, 1
      %p220 = por %p218, %p219
      %p221 = scmp.ne.s32.totalorder %s212, %s213
      %p222 = scmp.eq.s32.totalorder %s34, 0
      %p223 = por %p221, %p222
      %p224 = scmp.ne.s32.totalorder %s212, %s213
      %p225 = scmp.eq.s32.totalorder %s35, 1
      %p226 = por %p224, %p225
      %p228 = scmp.ne.s32.totalorder %s213, %s227
      %p229 = scmp.eq.s32.totalorder %s35, 0
      %p230 = por %p228, %p229
      %s232 = sadd.s32 %s231, 1
      %p235 = scmp.eq.s32.totalorder %s29, 1
      %p236 = scmp.ne.s32.totalorder %s231, %s233
      %p237 = scmp.eq.s32.totalorder %s29, 0
      %p238 = por %p236, %p237
      %p239 = scmp.ne.s32.totalorder %s231, %s233
      %p240 = scmp.eq.s32.totalorder %s34, 1
      %p241 = por %p239, %p240
      %p242 = scmp.ne.s32.totalorder %s233, %s234
      %p243 = scmp.eq.s32.totalorder %s34, 0
      %p244 = por %p242, %p243
      %p245 = scmp.ne.s32.totalorder %s233, %s234
      %p246 = scmp.eq.s32.totalorder %s35, 1
      %p247 = por %p245, %p246
      %p249 = scmp.ne.s32.totalorder %s234, %s248
      %p250 = scmp.eq.s32.totalorder %s35, 0
      %p251 = por %p249, %p250
      %s253 = sadd.s32 %s252, 1
      %p256 = scmp.eq.s32.totalorder %s29, 1
      %p257 = scmp.ne.s32.totalorder %s252, %s254
      %p258 = scmp.eq.s32.totalorder %s29, 0
      %p259 = por %p257, %p258
      %p260 = scmp.ne.s32.totalorder %s252, %s254
      %p261 = scmp.eq.s32.totalorder %s34, 1
      %p262 = por %p260, %p261
      %p263 = scmp.ne.s32.totalorder %s254, %s255
      %p264 = scmp.eq.s32.totalorder %s34, 0
      %p265 = por %p263, %p264
      %p266 = scmp.ne.s32.totalorder %s254, %s255
      %p267 = scmp.eq.s32.totalorder %s35, 1
      %p268 = por %p266, %p267
      %p270 = scmp.ne.s32.totalorder %s255, %s269
      %p271 = scmp.eq.s32.totalorder %s35, 0
      %p272 = por %p270, %p271
      %s273 = ssub.s32 %s29, %s36
      %p274 = scmp.eq.s32.totalorder %s273, 0
      %s276 = sadd.s32 %s275, 1
      %s277 = scalar_select %p274, %s275, %s276
      %p280 = pneg %p274
      %p281 = scmp.eq.s32.totalorder %s29, 1
      %p282 = por %p280, %p281
      %p283 = scmp.ne.s32.totalorder %s275, %s278
      %p284 = scmp.eq.s32.totalorder %s29, 0
      %p285 = por %p283, %p284
      %p286 = scmp.ne.s32.totalorder %s275, %s278
      %p287 = scmp.eq.s32.totalorder %s34, 1
      %p288 = por %p286, %p287
      %p289 = scmp.ne.s32.totalorder %s278, %s279
      %p290 = scmp.eq.s32.totalorder %s34, 0
      %p291 = por %p289, %p290
      %p292 = scmp.ne.s32.totalorder %s278, %s279
      %p293 = scmp.eq.s32.totalorder %s35, 1
      %p294 = por %p292, %p293
      %p296 = scmp.ne.s32.totalorder %s279, %s295
      %p297 = scmp.eq.s32.totalorder %s35, 0
      %p298 = por %p296, %p297
      %p299 = scmp.le.s32.totalorder 1, %s29
      %p300 = scmp.lt.s32.totalorder %s29, 3
      %p301 = pnand %p299, %p300
      %p302 = pneg %p301
      // Predicated region
      $region9: #{tpu_custom_call.1} parent=5 // pred_check
        _
      $region10: #{tpu_custom_call.1} parent=5 // pred_check_branch
        %304 = sbr.rel (%p301) target = $region12
      $region11: #{tpu_custom_call.1} parent=5 // pred_region
        %s305 = ssub.s32 %s29, 1
        // Predicated region
        $region13: #{tpu_custom_call.1} parent=11 // pred_check
          %p306 = pneg %p76
        $region14: #{tpu_custom_call.1} parent=11 // pred_check_branch
          %308 = sbr.rel (%p306) target = $region16
        $region15: #{tpu_custom_call.1} parent=11 // pred_region
          %s310 = ssub.s32 384, 384
          %311 = vsyncadd [#allocation7], %s310
          %s312 = sshll.u32 [#allocation6], 4
          %s313 = int_to_ptr.vmem [resolvable:$true] %s312
          %318 = dma.hbm_to_vmem [thread:$0]  %s1, 384, %s313, [#allocation7], 192, 192, 12
        $region16: #{tpu_custom_call.1} parent=11 // pred_fallthru
          _
        // Predicated region
        $region17: #{tpu_custom_call.1} parent=11 // pred_check
          %p319 = pneg %p97
        $region18: #{tpu_custom_call.1} parent=11 // pred_check_branch
          %321 = sbr.rel (%p319) target = $region20
        $region19: #{tpu_custom_call.1} parent=11 // pred_region
          %s323 = ssub.s32 48, 48
          %324 = vsyncadd [#allocation7], %s323
          %s326 = sshll.u32 [#allocation8], 4
          %s327 = int_to_ptr.vmem [resolvable:$true] %s326
          %329 = dma.hbm_to_vmem [thread:$0]  %s2, 48, %s327, [#allocation7]
        $region20: #{tpu_custom_call.1} parent=11 // pred_fallthru
          _
        // Predicated region
        $region21: #{tpu_custom_call.1} parent=11 // pred_check
          %p330 = pneg %p118
        $region22: #{tpu_custom_call.1} parent=11 // pred_check_branch
          %332 = sbr.rel (%p330) target = $region24
        $region23: #{tpu_custom_call.1} parent=11 // pred_region
          %s334 = ssub.s32 55296, 55296
          %335 = vsyncadd [#allocation10], %s334
          %s336 = sshll.u32 [#allocation9], 4
          %s337 = int_to_ptr.vmem [resolvable:$true] %s336
          %342 = dma.hbm_to_vmem [thread:$0]  %s3, 55296, %s337, [#allocation10], 192, 192, 12
        $region24: #{tpu_custom_call.1} parent=11 // pred_fallthru
          _
        // Predicated region
        $region25: #{tpu_custom_call.1} parent=11 // pred_check
          %p343 = pneg %p139
        $region26: #{tpu_custom_call.1} parent=11 // pred_check_branch
          %345 = sbr.rel (%p343) target = $region28
        $region27: #{tpu_custom_call.1} parent=11 // pred_region
          %s347 = ssub.s32 288, 288
          %348 = vsyncadd [#allocation10], %s347
          %s349 = sshll.u32 [#allocation11], 4
          %s350 = int_to_ptr.vmem [resolvable:$true] %s349
          %355 = dma.hbm_to_vmem [thread:$0]  %s4, 288, %s350, [#allocation10], 48, 48, 3
        $region28: #{tpu_custom_call.1} parent=11 // pred_fallthru
          _
        // Predicated region
        $region29: #{tpu_custom_call.1} parent=11 // pred_check
          %p356 = pneg %p160
        $region30: #{tpu_custom_call.1} parent=11 // pred_check_branch
          %358 = sbr.rel (%p356) target = $region32
        $region31: #{tpu_custom_call.1} parent=11 // pred_region
          _
        $region32: #{tpu_custom_call.1} parent=11 // pred_fallthru
          _
        // Predicated region
        $region33: #{tpu_custom_call.1} parent=11 // pred_check
          %p359 = pneg %p181
        $region34: #{tpu_custom_call.1} parent=11 // pred_check_branch
          %361 = sbr.rel (%p359) target = $region36
        $region35: #{tpu_custom_call.1} parent=11 // pred_region
          %s363 = ssub.s32 16, 16
          %364 = vsyncadd [#allocation13], %s363
          %s366 = sshll.u32 [#allocation12], 4
          %s367 = int_to_ptr.vmem [resolvable:$true] %s366
          %369 = dma.hbm_to_vmem [thread:$0]  %s6, 16, %s367, [#allocation13]
        $region36: #{tpu_custom_call.1} parent=11 // pred_fallthru
          _
        // Predicated region
        $region37: #{tpu_custom_call.1} parent=11 // pred_check
          %p370 = pneg %p202
        $region38: #{tpu_custom_call.1} parent=11 // pred_check_branch
          %372 = sbr.rel (%p370) target = $region40
        $region39: #{tpu_custom_call.1} parent=11 // pred_region
          %s374 = ssub.s32 512, 512
          %375 = vsyncadd [#allocation13], %s374
          %s376 = sshll.u32 [#allocation14], 4
          %s377 = int_to_ptr.vmem [resolvable:$true] %s376
          %382 = dma.hbm_to_vmem [thread:$0]  %s7, 512, %s377, [#allocation13], 128, 128, 8
        $region40: #{tpu_custom_call.1} parent=11 // pred_fallthru
          _
        // Predicated region
        $region41: #{tpu_custom_call.1} parent=11 // pred_check
          %p383 = pneg %p223
        $region42: #{tpu_custom_call.1} parent=11 // pred_check_branch
          %385 = sbr.rel (%p383) target = $region44
        $region43: #{tpu_custom_call.1} parent=11 // pred_region
          %s387 = ssub.s32 32, 32
          %388 = vsyncadd [#allocation16], %s387
          %s390 = sshll.u32 [#allocation15], 4
          %s391 = int_to_ptr.vmem [resolvable:$true] %s390
          %393 = dma.hbm_to_vmem [thread:$0]  %s8, 32, %s391, [#allocation16]
        $region44: #{tpu_custom_call.1} parent=11 // pred_fallthru
          _
        // Predicated region
        $region45: #{tpu_custom_call.1} parent=11 // pred_check
          %p394 = pneg %p244
        $region46: #{tpu_custom_call.1} parent=11 // pred_check_branch
          %396 = sbr.rel (%p394) target = $region48
        $region47: #{tpu_custom_call.1} parent=11 // pred_region
          %s398 = ssub.s32 16, 16
          %399 = vsyncadd [#allocation16], %s398
          %s401 = sshll.u32 [#allocation17], 4
          %s402 = int_to_ptr.vmem [resolvable:$true] %s401
          %404 = dma.hbm_to_vmem [thread:$0]  %s9, 16, %s402, [#allocation16]
        $region48: #{tpu_custom_call.1} parent=11 // pred_fallthru
          _
        // Predicated region
        $region49: #{tpu_custom_call.1} parent=11 // pred_check
          %p405 = pneg %p265
        $region50: #{tpu_custom_call.1} parent=11 // pred_check_branch
          %407 = sbr.rel (%p405) target = $region52
        $region51: #{tpu_custom_call.1} parent=11 // pred_region
          _
        $region52: #{tpu_custom_call.1} parent=11 // pred_fallthru
          _
      $region12: #{tpu_custom_call.1} parent=5 // pred_fallthru
        _
      %p408 = scmp.lt.s32.totalorder %s29, 2
      // Predicated region
      $region53: #{tpu_custom_call.1} parent=5 // pred_check
        %p409 = pneg %p408
      $region54: #{tpu_custom_call.1} parent=5 // pred_check_branch
        %411 = sbr.rel (%p409) target = $region56
      $region55: #{tpu_custom_call.1} parent=5 // pred_region
        // Predicated region
        $region57: #{tpu_custom_call.1} parent=55 // pred_check
          %p412 = pneg %p49
        $region58: #{tpu_custom_call.1} parent=55 // pred_check_branch
          %414 = sbr.rel (%p412) target = $region60
        $region59: #{tpu_custom_call.1} parent=55 // pred_region
          %s415 = sand.u32 %s39, 1
          %s416 = scalar_lea.sflag [#allocation4], %s415
          %s417 = sand.u32 %s39, 1
          %s418 = smul.addr %s417, 8
          %s419 = scalar_lea.vmem [#allocation3], %s418
          %s421 = ssub.s32 128, 128
          %422 = vsyncadd %s416, %s421
          %s423 = smul.addr %s29, 128
          %s424 = scalar_lea.hbm %s0, %s423
          %s426 = sshll.u32 %s419, 4
          %s427 = int_to_ptr.vmem [resolvable:$true] %s426
          %429 = dma.hbm_to_vmem [thread:$0]  %s424, 128, %s427, %s416
        $region60: #{tpu_custom_call.1} parent=55 // pred_fallthru
          _
      $region56: #{tpu_custom_call.1} parent=5 // pred_fallthru
        _
      %p430 = scmp.le.s32.totalorder 1, %s29
      %p431 = scmp.lt.s32.totalorder %s29, 3
      %p432 = pnand %p430, %p431
      %p433 = pneg %p432
      // Predicated region
      $region61: #{tpu_custom_call.1} parent=5 // pred_check
        _
      $region62: #{tpu_custom_call.1} parent=5 // pred_check_branch
        %435 = sbr.rel (%p432) target = $region64
      $region63: #{tpu_custom_call.1} parent=5 // pred_region
        %s436 = ssub.s32 %s29, 1
        %s437 = sand.u32 %s42, 1
        %s438 = scalar_lea.sflag [#allocation4], %s437
        %s439 = sand.u32 %s42, 1
        %s440 = smul.addr %s439, 8
        %s441 = scalar_lea.vmem [#allocation3], %s440
        // Predicated region
        $region65: #{tpu_custom_call.1} parent=63 // pred_check
          %p442 = pneg %p55
        $region66: #{tpu_custom_call.1} parent=63 // pred_check_branch
          %444 = sbr.rel (%p442) target = $region68
        $region67: #{tpu_custom_call.1} parent=63 // pred_region
          %445 = dma.done %s438, 128
        $region68: #{tpu_custom_call.1} parent=63 // pred_fallthru
          _
        // Predicated region
        $region69: #{tpu_custom_call.1} parent=63 // pred_check
          %p446 = pneg %p76
        $region70: #{tpu_custom_call.1} parent=63 // pred_check_branch
          %448 = sbr.rel (%p446) target = $region72
        $region71: #{tpu_custom_call.1} parent=63 // pred_region
          %449 = dma.done [#allocation7], 384
        $region72: #{tpu_custom_call.1} parent=63 // pred_fallthru
          _
        // Predicated region
        $region73: #{tpu_custom_call.1} parent=63 // pred_check
          %p450 = pneg %p97
        $region74: #{tpu_custom_call.1} parent=63 // pred_check_branch
          %452 = sbr.rel (%p450) target = $region76
        $region75: #{tpu_custom_call.1} parent=63 // pred_region
          %453 = dma.done [#allocation7], 48
        $region76: #{tpu_custom_call.1} parent=63 // pred_fallthru
          _
        // Predicated region
        $region77: #{tpu_custom_call.1} parent=63 // pred_check
          %p454 = pneg %p118
        $region78: #{tpu_custom_call.1} parent=63 // pred_check_branch
          %456 = sbr.rel (%p454) target = $region80
        $region79: #{tpu_custom_call.1} parent=63 // pred_region
          %457 = dma.done [#allocation10], 55296
        $region80: #{tpu_custom_call.1} parent=63 // pred_fallthru
          _
        // Predicated region
        $region81: #{tpu_custom_call.1} parent=63 // pred_check
          %p458 = pneg %p139
        $region82: #{tpu_custom_call.1} parent=63 // pred_check_branch
          %460 = sbr.rel (%p458) target = $region84
        $region83: #{tpu_custom_call.1} parent=63 // pred_region
          %461 = dma.done [#allocation10], 288
        $region84: #{tpu_custom_call.1} parent=63 // pred_fallthru
          _
        // Predicated region
        $region85: #{tpu_custom_call.1} parent=63 // pred_check
          %p462 = pneg %p181
        $region86: #{tpu_custom_call.1} parent=63 // pred_check_branch
          %464 = sbr.rel (%p462) target = $region88
        $region87: #{tpu_custom_call.1} parent=63 // pred_region
          %465 = dma.done [#allocation13], 16
        $region88: #{tpu_custom_call.1} parent=63 // pred_fallthru
          _
        // Predicated region
        $region89: #{tpu_custom_call.1} parent=63 // pred_check
          %p466 = pneg %p202
        $region90: #{tpu_custom_call.1} parent=63 // pred_check_branch
          %468 = sbr.rel (%p466) target = $region92
        $region91: #{tpu_custom_call.1} parent=63 // pred_region
          %469 = dma.done [#allocation13], 512
        $region92: #{tpu_custom_call.1} parent=63 // pred_fallthru
          _
        // Predicated region
        $region93: #{tpu_custom_call.1} parent=63 // pred_check
          %p470 = pneg %p223
        $region94: #{tpu_custom_call.1} parent=63 // pred_check_branch
          %472 = sbr.rel (%p470) target = $region96
        $region95: #{tpu_custom_call.1} parent=63 // pred_region
          %473 = dma.done [#allocation16], 32
        $region96: #{tpu_custom_call.1} parent=63 // pred_fallthru
          _
        // Predicated region
        $region97: #{tpu_custom_call.1} parent=63 // pred_check
          %p474 = pneg %p244
        $region98: #{tpu_custom_call.1} parent=63 // pred_check_branch
          %476 = sbr.rel (%p474) target = $region100
        $region99: #{tpu_custom_call.1} parent=63 // pred_region
          %477 = dma.done [#allocation16], 16
        $region100: #{tpu_custom_call.1} parent=63 // pred_fallthru
          _
        %s478 = sand.u32 %s42, 1
        %s479 = scalar_lea.sflag [#allocation4], %s478
        %s480 = sand.u32 %s42, 1
        %s481 = smul.addr %s480, 8
        %s482 = scalar_lea.vmem [#allocation3], %s481
        %p483 = pneg %p55
        %p484 = pneg %p52
        %p485 = pneg %p76
        %p486 = pneg %p73
        %p487 = pneg %p97
        %p488 = pneg %p94
        %p489 = pneg %p118
        %p490 = pneg %p115
        %p491 = pneg %p139
        %p492 = pneg %p136
        %p493 = pneg %p160
        %p494 = pneg %p157
        %p495 = pneg %p181
        %p496 = pneg %p178
        %p497 = pneg %p202
        %p498 = pneg %p199
        %p499 = pneg %p223
        %p500 = pneg %p220
        %p501 = pneg %p244
        %p502 = pneg %p241
        %p503 = pneg %p265
        %p504 = pneg %p262
        %p505 = pneg %p291
        %p506 = pneg %p288
        %s507 = sand.u32 %s278, 1
        %s508 = scalar_lea.sflag [#allocation5], %s507
        %s509 = sand.u32 %s278, 1
        %s510 = smul.addr %s509, 8
        %s511 = scalar_lea.vmem [#allocation18], %s510
        %v513 = vld [vmem:[%s441] sm:$0xff]
        %v514 = vpack.c.bf16 %v513, %v513
        %v515 = vld [vmem:[#allocation6] sm:$0xff]
        %v516 = vld [vmem:[#allocation6 + $0x8] sm:$0xf]
        %v517 = vld [vmem:[#allocation6 + $0xc] sm:$0x11]
        %v518 = vld [vmem:[#allocation6 + $0x14] sm:$0x1]
        %v519 = vld [vmem:[#allocation8] sm:$0x7]
        %v521 = vlaneseq
        %v522 = vshrl.u32 %v521, 7
        %v523 = vsub.s32 0, %v522
        %v524 = vrot.slane %v519, %v523
        %v525 = vlaneseq
        %v526 = vshrl.u32 %v525, 7
        %v527 = vsub.s32 1, %v526
        %v528 = vrot.slane %v519, %v527
        %v529 = vlaneseq
        %v530 = vshrl.u32 %v529, 7
        %v531 = vsub.s32 2, %v530
        %v532 = vrot.slane %v519, %v531
        %v540 = vunpack.c.l.b16 %v515
        %v541 = vunpack.c.h.b16 %v515
        %v542 = vunpack.c.l.b16 %v516
        %v543 = vunpack.c.l.b16 %v517
        %v544 = vunpack.c.h.b16 %v517
        %v545 = vunpack.c.l.b16 %v518
        %v546 = vpack.c.b16 %v543, %v540
        %v547 = vpack.c.b16 %v544, %v541
        %v548 = vpack.c.b16 %v545, %v542
        %vm549 = vcmask 72704
        %v551 = vsel %vm549, %v514, 0
        %vm553 = vcmask 1043456
        %vm554 = vcmask 1044480
        %v555 = vsel %vm553, 4294967295, 65535
        %v556 = vsel %vm554, %v555, 0
        %v558 = vand.u32 %v546, %v556
        %v561 = vand.u32 %v547, %v556
        %v564 = vand.u32 %v548, %v556
        %566 = vmatprep.subr.bf16.mxu0 %v561
        %567 = vmatpush1.bf16.msra.mxu0 %v558
        %568 = vmatprep.subr.bf16.mxu0 0
        %569 = vmatpush1.bf16.msra.mxu0 0
        %570 = vmatprep.subr.bf16.mxu0 0
        %571 = vmatpush1.bf16.msra.mxu0 0
        %572 = vmatprep.subr.bf16.mxu0 0
        %573 = vmatpush1.bf16.msra.mxu0 0
        %574 = vmatprep.subr.bf16.mxu0 0
        %575 = vmatpush1.bf16.msra.mxu0 0
        %576 = vmatprep.subr.bf16.mxu0 0
        %577 = vmatpush1.bf16.msra.mxu0 0
        %578 = vmatprep.subr.bf16.mxu0 0
        %579 = vmatpush1.bf16.msra.mxu0 0
        %580 = vmatprep.subr.bf16.mxu0 0
        %581 = vmatpush1.bf16.msra.mxu0 0
        %582 = vmatprep.subr.bf16.mxu0 0
        %583 = vmatpush1.bf16.msra.mxu0 0
        %584 = vmatprep.subr.bf16.mxu0 0
        %585 = vmatpush1.bf16.msra.mxu0 0
        %586 = vmatprep.subr.bf16.mxu0 0
        %587 = vmatpush1.bf16.msra.mxu0 0
        %588 = vmatprep.subr.bf16.mxu0 0
        %589 = vmatpush1.bf16.msra.mxu0 0
        %590 = vmatprep.subr.bf16.mxu0 0
        %591 = vmatpush1.bf16.msra.mxu0 0
        %592 = vmatprep.subr.bf16.mxu0 0
        %593 = vmatpush1.bf16.msra.mxu0 0
        %594 = vmatprep.subr.bf16.mxu0 0
        %595 = vmatpush1.bf16.msra.mxu0 0
        %596 = vmatprep.subr.bf16.mxu0 0
        %597 = vmatpush1.bf16.msra.mxu0 0
        %598 = vmatprep.mubr.bf16.mxu0 0
        %599 = vmatmul.mubr.bf16.gmra.mrb[0].mxu0 %v551
        %v600 = vpop.f32.mrb[0].mxu0
        %v601 = vadd.f32 %v524, %v600
        %v602 = vpop.f32.mrb[0].mxu0
        %v603 = vadd.f32 %v528, %v602
        %v604 = vpop.f32.mrb[0].mxu0
        %v605 = vpop.f32.mrb[0].mxu0
        %606 = vdwg.mxu0
        %607 = vmatprep.subr.bf16.mxu0 0
        %608 = vmatpush1.bf16.msra.mxu0 %v564
        %609 = vmatprep.subr.bf16.mxu0 0
        %610 = vmatpush1.bf16.msra.mxu0 0
        %611 = vmatprep.subr.bf16.mxu0 0
        %612 = vmatpush1.bf16.msra.mxu0 0
        %613 = vmatprep.subr.bf16.mxu0 0
        %614 = vmatpush1.bf16.msra.mxu0 0
        %615 = vmatprep.subr.bf16.mxu0 0
        %616 = vmatpush1.bf16.msra.mxu0 0
        %617 = vmatprep.subr.bf16.mxu0 0
        %618 = vmatpush1.bf16.msra.mxu0 0
        %619 = vmatprep.subr.bf16.mxu0 0
        %620 = vmatpush1.bf16.msra.mxu0 0
        %621 = vmatprep.subr.bf16.mxu0 0
        %622 = vmatpush1.bf16.msra.mxu0 0
        %623 = vmatprep.subr.bf16.mxu0 0
        %624 = vmatpush1.bf16.msra.mxu0 0
        %625 = vmatprep.subr.bf16.mxu0 0
        %626 = vmatpush1.bf16.msra.mxu0 0
        %627 = vmatprep.subr.bf16.mxu0 0
        %628 = vmatpush1.bf16.msra.mxu0 0
        %629 = vmatprep.subr.bf16.mxu0 0
        %630 = vmatpush1.bf16.msra.mxu0 0
        %631 = vmatprep.subr.bf16.mxu0 0
        %632 = vmatpush1.bf16.msra.mxu0 0
        %633 = vmatprep.subr.bf16.mxu0 0
        %634 = vmatpush1.bf16.msra.mxu0 0
        %635 = vmatprep.subr.bf16.mxu0 0
        %636 = vmatpush1.bf16.msra.mxu0 0
        %637 = vmatprep.subr.bf16.mxu0 0
        %638 = vmatpush1.bf16.msra.mxu0 0
        %639 = vmatprep.mubr.bf16.mxu0 0
        %640 = vmatmul.mubr.bf16.gmra.mrb[0].mxu0 %v551
        %v641 = vpop.f32.mrb[0].mxu0
        %v642 = vadd.f32 %v532, %v641
        %v643 = vpop.f32.mrb[0].mxu0
        %v644 = vpop.f32.mrb[0].mxu0
        %v645 = vpop.f32.mrb[0].mxu0
        %646 = vdwg.mxu0
        %v647 = vmax.f32 %v601, 0.0
        %v648 = vmax.f32 %v603, 0.0
        %v649 = vmax.f32 %v642, 0.0
        %v650 = vpack.c.bf16 %v647, %v647
        %v651 = vpack.c.bf16 %v648, %v648
        %v652 = vpack.c.bf16 %v649, %v649
        %v653 = vld [vmem:[#allocation9] sm:$0xff]
        %v654 = vld [vmem:[#allocation9 + $0x8] sm:$0xf]
        %v655 = vld [vmem:[#allocation9 + $0xc] sm:$0xff]
        %v656 = vld [vmem:[#allocation9 + $0x14] sm:$0xf]
        %v657 = vld [vmem:[#allocation9 + $0x18] sm:$0xff]
        %v658 = vld [vmem:[#allocation9 + $0x20] sm:$0xf]
        %v659 = vld [vmem:[#allocation9 + $0x24] sm:$0xff]
        %v660 = vld [vmem:[#allocation9 + $0x2c] sm:$0xf]
        %v661 = vld [vmem:[#allocation9 + $0x30] sm:$0xff]
        %v662 = vld [vmem:[#allocation9 + $0x38] sm:$0xf]
        %v663 = vld [vmem:[#allocation9 + $0x3c] sm:$0xff]
        %v664 = vld [vmem:[#allocation9 + $0x44] sm:$0xf]
        %v665 = vld [vmem:[#allocation9 + $0x48] sm:$0xff]
        %v666 = vld [vmem:[#allocation9 + $0x50] sm:$0xf]
        %v667 = vld [vmem:[#allocation9 + $0x54] sm:$0xff]
        %v668 = vld [vmem:[#allocation9 + $0x5c] sm:$0xf]
        %v669 = vld [vmem:[#allocation9 + $0x60] sm:$0xff]
        %v670 = vld [vmem:[#allocation9 + $0x68] sm:$0xf]
        %v671 = vld [vmem:[#allocation9 + $0x6c] sm:$0xff]
        %v672 = vld [vmem:[#allocation9 + $0x74] sm:$0xf]
        %v673 = vld [vmem:[#allocation9 + $0x78] sm:$0xff]
        %v674 = vld [vmem:[#allocation9 + $0x80] sm:$0xf]
        %v675 = vld [vmem:[#allocation9 + $0x84] sm:$0xff]
        %v676 = vld [vmem:[#allocation9 + $0x8c] sm:$0xf]
        %v677 = vld [vmem:[#allocation9 + $0x90] sm:$0xff]
        %v678 = vld [vmem:[#allocation9 + $0x98] sm:$0xf]
        %v679 = vld [vmem:[#allocation9 + $0x9c] sm:$0xff]
        %v680 = vld [vmem:[#allocation9 + $0xa4] sm:$0xf]
        %v681 = vld [vmem:[#allocation9 + $0xa8] sm:$0xff]
        %v682 = vld [vmem:[#allocation9 + $0xb0] sm:$0xf]
        %v683 = vld [vmem:[#allocation9 + $0xb4] sm:$0xff]
        %v684 = vld [vmem:[#allocation9 + $0xbc] sm:$0xf]
        %v685 = vld [vmem:[#allocation9 + $0xc0] sm:$0xff]
        %v686 = vld [vmem:[#allocation9 + $0xc8] sm:$0xf]
        %v687 = vld [vmem:[#allocation9 + $0xcc] sm:$0xff]
        %v688 = vld [vmem:[#allocation9 + $0xd4] sm:$0xf]
        %v689 = vld [vmem:[#allocation9 + $0xd8] sm:$0xff]
        %v690 = vld [vmem:[#allocation9 + $0xe0] sm:$0xf]
        %v691 = vld [vmem:[#allocation9 + $0xe4] sm:$0xff]
        %v692 = vld [vmem:[#allocation9 + $0xec] sm:$0xf]
        %v693 = vld [vmem:[#allocation9 + $0xf0] sm:$0xff]
        %v694 = vld [vmem:[#allocation9 + $0xf8] sm:$0xf]
        %v695 = vld [vmem:[#allocation9 + $0xfc] sm:$0xff]
        %v696 = vld [vmem:[#allocation9 + $0x104] sm:$0xf]
        %v697 = vld [vmem:[#allocation9 + $0x108] sm:$0xff]
        %v698 = vld [vmem:[#allocation9 + $0x110] sm:$0xf]
        %v699 = vld [vmem:[#allocation9 + $0x114] sm:$0xff]
        %v700 = vld [vmem:[#allocation9 + $0x11c] sm:$0xf]
        %v701 = vld [vmem:[#allocation9 + $0x120] sm:$0xff]
        %v702 = vld [vmem:[#allocation9 + $0x128] sm:$0xf]
        %v703 = vld [vmem:[#allocation9 + $0x12c] sm:$0xff]
        %v704 = vld [vmem:[#allocation9 + $0x134] sm:$0xf]
        %v705 = vld [vmem:[#allocation9 + $0x138] sm:$0xff]
        %v706 = vld [vmem:[#allocation9 + $0x140] sm:$0xf]
        %v707 = vld [vmem:[#allocation9 + $0x144] sm:$0xff]
        %v708 = vld [vmem:[#allocation9 + $0x14c] sm:$0xf]
        %v709 = vld [vmem:[#allocation9 + $0x150] sm:$0xff]
        %v710 = vld [vmem:[#allocation9 + $0x158] sm:$0xf]
        %v711 = vld [vmem:[#allocation9 + $0x15c] sm:$0xff]
        %v712 = vld [vmem:[#allocation9 + $0x164] sm:$0xf]
        %v713 = vld [vmem:[#allocation9 + $0x168] sm:$0xff]
        %v714 = vld [vmem:[#allocation9 + $0x170] sm:$0xf]
        %v715 = vld [vmem:[#allocation9 + $0x174] sm:$0xff]
        %v716 = vld [vmem:[#allocation9 + $0x17c] sm:$0xf]
        %v717 = vld [vmem:[#allocation9 + $0x180] sm:$0xff]
        %v718 = vld [vmem:[#allocation9 + $0x188] sm:$0xf]
        %v719 = vld [vmem:[#allocation9 + $0x18c] sm:$0xff]
        %v720 = vld [vmem:[#allocation9 + $0x194] sm:$0xf]
        %v721 = vld [vmem:[#allocation9 + $0x198] sm:$0xff]
        %v722 = vld [vmem:[#allocation9 + $0x1a0] sm:$0xf]
        %v723 = vld [vmem:[#allocation9 + $0x1a4] sm:$0xff]
        %v724 = vld [vmem:[#allocation9 + $0x1ac] sm:$0xf]
        %v725 = vld [vmem:[#allocation9 + $0x1b0] sm:$0xff]
        %v726 = vld [vmem:[#allocation9 + $0x1b8] sm:$0xf]
        %v727 = vld [vmem:[#allocation9 + $0x1bc] sm:$0xff]
        %v728 = vld [vmem:[#allocation9 + $0x1c4] sm:$0xf]
        %v729 = vld [vmem:[#allocation9 + $0x1c8] sm:$0xff]
        %v730 = vld [vmem:[#allocation9 + $0x1d0] sm:$0xf]
        %v731 = vld [vmem:[#allocation9 + $0x1d4] sm:$0xff]
        %v732 = vld [vmem:[#allocation9 + $0x1dc] sm:$0xf]
        %v733 = vld [vmem:[#allocation9 + $0x1e0] sm:$0xff]
        %v734 = vld [vmem:[#allocation9 + $0x1e8] sm:$0xf]
        %v735 = vld [vmem:[#allocation9 + $0x1ec] sm:$0xff]
        %v736 = vld [vmem:[#allocation9 + $0x1f4] sm:$0xf]
        %v737 = vld [vmem:[#allocation9 + $0x1f8] sm:$0xff]
        %v738 = vld [vmem:[#allocation9 + $0x200] sm:$0xf]
        %v739 = vld [vmem:[#allocation9 + $0x204] sm:$0xff]
        %v740 = vld [vmem:[#allocation9 + $0x20c] sm:$0xf]
        %v741 = vld [vmem:[#allocation9 + $0x210] sm:$0xff]
        %v742 = vld [vmem:[#allocation9 + $0x218] sm:$0xf]
        %v743 = vld [vmem:[#allocation9 + $0x21c] sm:$0xff]
        %v744 = vld [vmem:[#allocation9 + $0x224] sm:$0xf]
        %v745 = vld [vmem:[#allocation9 + $0x228] sm:$0xff]
        %v746 = vld [vmem:[#allocation9 + $0x230] sm:$0xf]
        %v747 = vld [vmem:[#allocation9 + $0x234] sm:$0xff]
        %v748 = vld [vmem:[#allocation9 + $0x23c] sm:$0xf]
        %v749 = vld [vmem:[#allocation11] sm:$0x7]
        %v751 = vlaneseq
        %v752 = vshrl.u32 %v751, 7
        %v753 = vsub.s32 0, %v752
        %v754 = vrot.slane %v749, %v753
        %v755 = vlaneseq
        %v756 = vshrl.u32 %v755, 7
        %v757 = vsub.s32 1, %v756
        %v758 = vrot.slane %v749, %v757
        %v759 = vlaneseq
        %v760 = vshrl.u32 %v759, 7
        %v761 = vsub.s32 2, %v760
        %v762 = vrot.slane %v749, %v761
        %v862 = vunpack.c.l.b16 %v653
        %v863 = vunpack.c.h.b16 %v653
        %v864 = vunpack.c.l.b16 %v654
        %v865 = vunpack.c.l.b16 %v655
        %v866 = vunpack.c.h.b16 %v655
        %v867 = vunpack.c.l.b16 %v656
        %v868 = vunpack.c.l.b16 %v657
        %v869 = vunpack.c.h.b16 %v657
        %v870 = vunpack.c.l.b16 %v658
        %v871 = vunpack.c.l.b16 %v659
        %v872 = vunpack.c.h.b16 %v659
        %v873 = vunpack.c.l.b16 %v660
        %v874 = vunpack.c.l.b16 %v661
        %v875 = vunpack.c.h.b16 %v661
        %v876 = vunpack.c.l.b16 %v662
        %v877 = vunpack.c.l.b16 %v663
        %v878 = vunpack.c.h.b16 %v663
        %v879 = vunpack.c.l.b16 %v664
        %v880 = vunpack.c.l.b16 %v665
        %v881 = vunpack.c.h.b16 %v665
        %v882 = vunpack.c.l.b16 %v666
        %v883 = vunpack.c.l.b16 %v667
        %v884 = vunpack.c.h.b16 %v667
        %v885 = vunpack.c.l.b16 %v668
        %v886 = vunpack.c.l.b16 %v669
        %v887 = vunpack.c.h.b16 %v669
        %v888 = vunpack.c.l.b16 %v670
        %v889 = vunpack.c.l.b16 %v671
        %v890 = vunpack.c.h.b16 %v671
        %v891 = vunpack.c.l.b16 %v672
        %v892 = vunpack.c.l.b16 %v673
        %v893 = vunpack.c.h.b16 %v673
        %v894 = vunpack.c.l.b16 %v674
        %v895 = vunpack.c.l.b16 %v675
        %v896 = vunpack.c.h.b16 %v675
        %v897 = vunpack.c.l.b16 %v676
        %v898 = vunpack.c.l.b16 %v677
        %v899 = vunpack.c.h.b16 %v677
        %v900 = vunpack.c.l.b16 %v678
        %v901 = vunpack.c.l.b16 %v679
        %v902 = vunpack.c.h.b16 %v679
        %v903 = vunpack.c.l.b16 %v680
        %v904 = vunpack.c.l.b16 %v681
        %v905 = vunpack.c.h.b16 %v681
        %v906 = vunpack.c.l.b16 %v682
        %v907 = vunpack.c.l.b16 %v683
        %v908 = vunpack.c.h.b16 %v683
        %v909 = vunpack.c.l.b16 %v684
        %v910 = vunpack.c.l.b16 %v685
        %v911 = vunpack.c.h.b16 %v685
        %v912 = vunpack.c.l.b16 %v686
        %v913 = vunpack.c.l.b16 %v687
        %v914 = vunpack.c.h.b16 %v687
        %v915 = vunpack.c.l.b16 %v688
        %v916 = vunpack.c.l.b16 %v689
        %v917 = vunpack.c.h.b16 %v689
        %v918 = vunpack.c.l.b16 %v690
        %v919 = vunpack.c.l.b16 %v691
        %v920 = vunpack.c.h.b16 %v691
        %v921 = vunpack.c.l.b16 %v692
        %v922 = vunpack.c.l.b16 %v693
        %v923 = vunpack.c.h.b16 %v693
        %v924 = vunpack.c.l.b16 %v694
        %v925 = vunpack.c.l.b16 %v695
        %v926 = vunpack.c.h.b16 %v695
        %v927 = vunpack.c.l.b16 %v696
        %v928 = vunpack.c.l.b16 %v697
        %v929 = vunpack.c.h.b16 %v697
        %v930 = vunpack.c.l.b16 %v698
        %v931 = vunpack.c.l.b16 %v699
        %v932 = vunpack.c.h.b16 %v699
        %v933 = vunpack.c.l.b16 %v700
        %v934 = vunpack.c.l.b16 %v701
        %v935 = vunpack.c.h.b16 %v701
        %v936 = vunpack.c.l.b16 %v702
        %v937 = vunpack.c.l.b16 %v703
        %v938 = vunpack.c.h.b16 %v703
        %v939 = vunpack.c.l.b16 %v704
        %v940 = vunpack.c.l.b16 %v705
        %v941 = vunpack.c.h.b16 %v705
        %v942 = vunpack.c.l.b16 %v706
        %v943 = vunpack.c.l.b16 %v707
        %v944 = vunpack.c.h.b16 %v707
        %v945 = vunpack.c.l.b16 %v708
        %v946 = vunpack.c.l.b16 %v709
        %v947 = vunpack.c.h.b16 %v709
        %v948 = vunpack.c.l.b16 %v710
        %v949 = vunpack.c.l.b16 %v711
        %v950 = vunpack.c.h.b16 %v711
        %v951 = vunpack.c.l.b16 %v712
        %v952 = vunpack.c.l.b16 %v713
        %v953 = vunpack.c.h.b16 %v713
        %v954 = vunpack.c.l.b16 %v714
        %v955 = vunpack.c.l.b16 %v715
        %v956 = vunpack.c.h.b16 %v715
        %v957 = vunpack.c.l.b16 %v716
        %v958 = vunpack.c.l.b16 %v717
        %v959 = vunpack.c.h.b16 %v717
        %v960 = vunpack.c.l.b16 %v718
        %v961 = vunpack.c.l.b16 %v719
        %v962 = vunpack.c.h.b16 %v719
        %v963 = vunpack.c.l.b16 %v720
        %v964 = vunpack.c.l.b16 %v721
        %v965 = vunpack.c.h.b16 %v721
        %v966 = vunpack.c.l.b16 %v722
        %v967 = vunpack.c.l.b16 %v723
        %v968 = vunpack.c.h.b16 %v723
        %v969 = vunpack.c.l.b16 %v724
        %v970 = vunpack.c.l.b16 %v725
        %v971 = vunpack.c.h.b16 %v725
        %v972 = vunpack.c.l.b16 %v726
        %v973 = vunpack.c.l.b16 %v727
        %v974 = vunpack.c.h.b16 %v727
        %v975 = vunpack.c.l.b16 %v728
        %v976 = vunpack.c.l.b16 %v729
        %v977 = vunpack.c.h.b16 %v729
        %v978 = vunpack.c.l.b16 %v730
        %v979 = vunpack.c.l.b16 %v731
        %v980 = vunpack.c.h.b16 %v731
        %v981 = vunpack.c.l.b16 %v732
        %v982 = vunpack.c.l.b16 %v733
        %v983 = vunpack.c.h.b16 %v733
        %v984 = vunpack.c.l.b16 %v734
        %v985 = vunpack.c.l.b16 %v735
        %v986 = vunpack.c.h.b16 %v735
        %v987 = vunpack.c.l.b16 %v736
        %v988 = vunpack.c.l.b16 %v737
        %v989 = vunpack.c.h.b16 %v737
        %v990 = vunpack.c.l.b16 %v738
        %v991 = vunpack.c.l.b16 %v739
        %v992 = vunpack.c.h.b16 %v739
        %v993 = vunpack.c.l.b16 %v740
        %v994 = vunpack.c.l.b16 %v741
        %v995 = vunpack.c.h.b16 %v741
        %v996 = vunpack.c.l.b16 %v742
        %v997 = vunpack.c.l.b16 %v743
        %v998 = vunpack.c.h.b16 %v743
        %v999 = vunpack.c.l.b16 %v744
        %v1000 = vunpack.c.l.b16 %v745
        %v1001 = vunpack.c.h.b16 %v745
        %v1002 = vunpack.c.l.b16 %v746
        %v1003 = vunpack.c.l.b16 %v747
        %v1004 = vunpack.c.h.b16 %v747
        %v1005 = vunpack.c.l.b16 %v748
        %v1006 = vpack.c.b16 %v865, %v862
        %v1007 = vpack.c.b16 %v866, %v863
        %v1008 = vpack.c.b16 %v867, %v864
        %v1009 = vpack.c.b16 %v871, %v868
        %v1010 = vpack.c.b16 %v872, %v869
        %v1011 = vpack.c.b16 %v873, %v870
        %v1012 = vpack.c.b16 %v877, %v874
        %v1013 = vpack.c.b16 %v878, %v875
        %v1014 = vpack.c.b16 %v879, %v876
        %v1015 = vpack.c.b16 %v883, %v880
        %v1016 = vpack.c.b16 %v884, %v881
        %v1017 = vpack.c.b16 %v885, %v882
        %v1018 = vpack.c.b16 %v889, %v886
        %v1019 = vpack.c.b16 %v890, %v887
        %v1020 = vpack.c.b16 %v891, %v888
        %v1021 = vpack.c.b16 %v895, %v892
        %v1022 = vpack.c.b16 %v896, %v893
        %v1023 = vpack.c.b16 %v897, %v894
        %v1024 = vpack.c.b16 %v901, %v898
        %v1025 = vpack.c.b16 %v902, %v899
        %v1026 = vpack.c.b16 %v903, %v900
        %v1027 = vpack.c.b16 %v907, %v904
        %v1028 = vpack.c.b16 %v908, %v905
        %v1029 = vpack.c.b16 %v909, %v906
        %v1030 = vpack.c.b16 %v913, %v910
        %v1031 = vpack.c.b16 %v914, %v911
        %v1032 = vpack.c.b16 %v915, %v912
        %v1033 = vpack.c.b16 %v919, %v916
        %v1034 = vpack.c.b16 %v920, %v917
        %v1035 = vpack.c.b16 %v921, %v918
        %v1036 = vpack.c.b16 %v925, %v922
        %v1037 = vpack.c.b16 %v926, %v923
        %v1038 = vpack.c.b16 %v927, %v924
        %v1039 = vpack.c.b16 %v931, %v928
        %v1040 = vpack.c.b16 %v932, %v929
        %v1041 = vpack.c.b16 %v933, %v930
        %v1042 = vpack.c.b16 %v937, %v934
        %v1043 = vpack.c.b16 %v938, %v935
        %v1044 = vpack.c.b16 %v939, %v936
        %v1045 = vpack.c.b16 %v943, %v940
        %v1046 = vpack.c.b16 %v944, %v941
        %v1047 = vpack.c.b16 %v945, %v942
        %v1048 = vpack.c.b16 %v949, %v946
        %v1049 = vpack.c.b16 %v950, %v947
        %v1050 = vpack.c.b16 %v951, %v948
        %v1051 = vpack.c.b16 %v955, %v952
        %v1052 = vpack.c.b16 %v956, %v953
        %v1053 = vpack.c.b16 %v957, %v954
        %v1054 = vpack.c.b16 %v961, %v958
        %v1055 = vpack.c.b16 %v962, %v959
        %v1056 = vpack.c.b16 %v963, %v960
        %v1057 = vpack.c.b16 %v967, %v964
        %v1058 = vpack.c.b16 %v968, %v965
        %v1059 = vpack.c.b16 %v969, %v966
        %v1060 = vpack.c.b16 %v973, %v970
        %v1061 = vpack.c.b16 %v974, %v971
        %v1062 = vpack.c.b16 %v975, %v972
        %v1063 = vpack.c.b16 %v979, %v976
        %v1064 = vpack.c.b16 %v980, %v977
        %v1065 = vpack.c.b16 %v981, %v978
        %v1066 = vpack.c.b16 %v985, %v982
        %v1067 = vpack.c.b16 %v986, %v983
        %v1068 = vpack.c.b16 %v987, %v984
        %v1069 = vpack.c.b16 %v991, %v988
        %v1070 = vpack.c.b16 %v992, %v989
        %v1071 = vpack.c.b16 %v993, %v990
        %v1072 = vpack.c.b16 %v997, %v994
        %v1073 = vpack.c.b16 %v998, %v995
        %v1074 = vpack.c.b16 %v999, %v996
        %v1075 = vpack.c.b16 %v1003, %v1000
        %v1076 = vpack.c.b16 %v1004, %v1001
        %v1077 = vpack.c.b16 %v1005, %v1002
        %1150 = vmatprep.subr.bf16.mxu0 %v1007
        %1151 = vmatpush1.bf16.msra.mxu0 %v1006
        %1152 = vmatprep.subr.bf16.mxu0 %v1010
        %1153 = vmatpush1.bf16.msra.mxu0 %v1009
        %1154 = vmatprep.subr.bf16.mxu0 %v1013
        %1155 = vmatpush1.bf16.msra.mxu0 %v1012
        %1156 = vmatprep.subr.bf16.mxu0 %v1016
        %1157 = vmatpush1.bf16.msra.mxu0 %v1015
        %1158 = vmatprep.subr.bf16.mxu0 %v1019
        %1159 = vmatpush1.bf16.msra.mxu0 %v1018
        %1160 = vmatprep.subr.bf16.mxu0 %v1022
        %1161 = vmatpush1.bf16.msra.mxu0 %v1021
        %1162 = vmatprep.subr.bf16.mxu0 %v1025
        %1163 = vmatpush1.bf16.msra.mxu0 %v1024
        %1164 = vmatprep.subr.bf16.mxu0 %v1028
        %1165 = vmatpush1.bf16.msra.mxu0 %v1027
        %1166 = vmatprep.subr.bf16.mxu0 %v1031
        %1167 = vmatpush1.bf16.msra.mxu0 %v1030
        %1168 = vmatprep.subr.bf16.mxu0 %v1034
        %1169 = vmatpush1.bf16.msra.mxu0 %v1033
        %1170 = vmatprep.subr.bf16.mxu0 %v1037
        %1171 = vmatpush1.bf16.msra.mxu0 %v1036
        %1172 = vmatprep.subr.bf16.mxu0 %v1040
        %1173 = vmatpush1.bf16.msra.mxu0 %v1039
        %1174 = vmatprep.subr.bf16.mxu0 %v1043
        %1175 = vmatpush1.bf16.msra.mxu0 %v1042
        %1176 = vmatprep.subr.bf16.mxu0 %v1046
        %1177 = vmatpush1.bf16.msra.mxu0 %v1045
        %1178 = vmatprep.subr.bf16.mxu0 %v1049
        %1179 = vmatpush1.bf16.msra.mxu0 %v1048
        %1180 = vmatprep.subr.bf16.mxu0 %v1052
        %1181 = vmatpush1.bf16.msra.mxu0 %v1051
        %1182 = vmatprep.mubr.bf16.mxu0 %v651
        %1183 = vmatmul.mubr.bf16.gmra.mrb[0].mxu0 %v650
        %v1184 = vpop.f32.mrb[0].mxu0
        %v1185 = vadd.f32 %v754, %v1184
        %v1186 = vpop.f32.mrb[0].mxu0
        %v1187 = vadd.f32 %v758, %v1186
        %v1188 = vpop.f32.mrb[0].mxu0
        %v1189 = vpop.f32.mrb[0].mxu0
        %1190 = vdwg.mxu0
        %1191 = vmatprep.subr.bf16.mxu0 %v1055
        %1192 = vmatpush1.bf16.msra.mxu0 %v1054
        %1193 = vmatprep.subr.bf16.mxu0 %v1058
        %1194 = vmatpush1.bf16.msra.mxu0 %v1057
        %1195 = vmatprep.subr.bf16.mxu0 %v1061
        %1196 = vmatpush1.bf16.msra.mxu0 %v1060
        %1197 = vmatprep.subr.bf16.mxu0 %v1064
        %1198 = vmatpush1.bf16.msra.mxu0 %v1063
        %1199 = vmatprep.subr.bf16.mxu0 %v1067
        %1200 = vmatpush1.bf16.msra.mxu0 %v1066
        %1201 = vmatprep.subr.bf16.mxu0 %v1070
        %1202 = vmatpush1.bf16.msra.mxu0 %v1069
        %1203 = vmatprep.subr.bf16.mxu0 %v1073
        %1204 = vmatpush1.bf16.msra.mxu0 %v1072
        %1205 = vmatprep.subr.bf16.mxu0 %v1076
        %1206 = vmatpush1.bf16.msra.mxu0 %v1075
        %1207 = vmatprep.subr.bf16.mxu0 0
        %1208 = vmatpush1.bf16.msra.mxu0 0
        %1209 = vmatprep.subr.bf16.mxu0 0
        %1210 = vmatpush1.bf16.msra.mxu0 0
        %1211 = vmatprep.subr.bf16.mxu0 0
        %1212 = vmatpush1.bf16.msra.mxu0 0
        %1213 = vmatprep.subr.bf16.mxu0 0
        %1214 = vmatpush1.bf16.msra.mxu0 0
        %1215 = vmatprep.subr.bf16.mxu0 0
        %1216 = vmatpush1.bf16.msra.mxu0 0
        %1217 = vmatprep.subr.bf16.mxu0 0
        %1218 = vmatpush1.bf16.msra.mxu0 0
        %1219 = vmatprep.subr.bf16.mxu0 0
        %1220 = vmatpush1.bf16.msra.mxu0 0
        %1221 = vmatprep.subr.bf16.mxu0 0
        %1222 = vmatpush1.bf16.msra.mxu0 0
        %1223 = vmatprep.mubr.bf16.mxu0 0
        %1224 = vmatmul.mubr.bf16.gmra.mrb[0].mxu0 %v652
        %v1225 = vpop.f32.mrb[0].mxu0
        %v1226 = vadd.f32 %v1185, %v1225
        %v1227 = vpop.f32.mrb[0].mxu0
        %v1228 = vadd.f32 %v1187, %v1227
        %v1229 = vpop.f32.mrb[0].mxu0
        %v1230 = vpop.f32.mrb[0].mxu0
        %1231 = vdwg.mxu0
        %1232 = vmatprep.subr.bf16.mxu0 0
        %1233 = vmatpush1.bf16.msra.mxu0 %v1008
        %1234 = vmatprep.subr.bf16.mxu0 0
        %1235 = vmatpush1.bf16.msra.mxu0 %v1011
        %1236 = vmatprep.subr.bf16.mxu0 0
        %1237 = vmatpush1.bf16.msra.mxu0 %v1014
        %1238 = vmatprep.subr.bf16.mxu0 0
        %1239 = vmatpush1.bf16.msra.mxu0 %v1017
        %1240 = vmatprep.subr.bf16.mxu0 0
        %1241 = vmatpush1.bf16.msra.mxu0 %v1020
        %1242 = vmatprep.subr.bf16.mxu0 0
        %1243 = vmatpush1.bf16.msra.mxu0 %v1023
        %1244 = vmatprep.subr.bf16.mxu0 0
        %1245 = vmatpush1.bf16.msra.mxu0 %v1026
        %1246 = vmatprep.subr.bf16.mxu0 0
        %1247 = vmatpush1.bf16.msra.mxu0 %v1029
        %1248 = vmatprep.subr.bf16.mxu0 0
        %1249 = vmatpush1.bf16.msra.mxu0 %v1032
        %1250 = vmatprep.subr.bf16.mxu0 0
        %1251 = vmatpush1.bf16.msra.mxu0 %v1035
        %1252 = vmatprep.subr.bf16.mxu0 0
        %1253 = vmatpush1.bf16.msra.mxu0 %v1038
        %1254 = vmatprep.subr.bf16.mxu0 0
        %1255 = vmatpush1.bf16.msra.mxu0 %v1041
        %1256 = vmatprep.subr.bf16.mxu0 0
        %1257 = vmatpush1.bf16.msra.mxu0 %v1044
        %1258 = vmatprep.subr.bf16.mxu0 0
        %1259 = vmatpush1.bf16.msra.mxu0 %v1047
        %1260 = vmatprep.subr.bf16.mxu0 0
        %1261 = vmatpush1.bf16.msra.mxu0 %v1050
        %1262 = vmatprep.subr.bf16.mxu0 0
        %1263 = vmatpush1.bf16.msra.mxu0 %v1053
        %1264 = vmatprep.mubr.bf16.mxu0 %v651
        %1265 = vmatmul.mubr.bf16.gmra.mrb[0].mxu0 %v650
        %v1266 = vpop.f32.mrb[0].mxu0
        %v1267 = vadd.f32 %v762, %v1266
        %v1268 = vpop.f32.mrb[0].mxu0
        %v1269 = vpop.f32.mrb[0].mxu0
        %v1270 = vpop.f32.mrb[0].mxu0
        %1271 = vdwg.mxu0
        %1272 = vmatprep.subr.bf16.mxu0 0
        %1273 = vmatpush1.bf16.msra.mxu0 %v1056
        %1274 = vmatprep.subr.bf16.mxu0 0
        %1275 = vmatpush1.bf16.msra.mxu0 %v1059
        %1276 = vmatprep.subr.bf16.mxu0 0
        %1277 = vmatpush1.bf16.msra.mxu0 %v1062
        %1278 = vmatprep.subr.bf16.mxu0 0
        %1279 = vmatpush1.bf16.msra.mxu0 %v1065
        %1280 = vmatprep.subr.bf16.mxu0 0
        %1281 = vmatpush1.bf16.msra.mxu0 %v1068
        %1282 = vmatprep.subr.bf16.mxu0 0
        %1283 = vmatpush1.bf16.msra.mxu0 %v1071
        %1284 = vmatprep.subr.bf16.mxu0 0
        %1285 = vmatpush1.bf16.msra.mxu0 %v1074
        %1286 = vmatprep.subr.bf16.mxu0 0
        %1287 = vmatpush1.bf16.msra.mxu0 %v1077
        %1288 = vmatprep.subr.bf16.mxu0 0
        %1289 = vmatpush1.bf16.msra.mxu0 0
        %1290 = vmatprep.subr.bf16.mxu0 0
        %1291 = vmatpush1.bf16.msra.mxu0 0
        %1292 = vmatprep.subr.bf16.mxu0 0
        %1293 = vmatpush1.bf16.msra.mxu0 0
        %1294 = vmatprep.subr.bf16.mxu0 0
        %1295 = vmatpush1.bf16.msra.mxu0 0
        %1296 = vmatprep.subr.bf16.mxu0 0
        %1297 = vmatpush1.bf16.msra.mxu0 0
        %1298 = vmatprep.subr.bf16.mxu0 0
        %1299 = vmatpush1.bf16.msra.mxu0 0
        %1300 = vmatprep.subr.bf16.mxu0 0
        %1301 = vmatpush1.bf16.msra.mxu0 0
        %1302 = vmatprep.subr.bf16.mxu0 0
        %1303 = vmatpush1.bf16.msra.mxu0 0
        %1304 = vmatprep.mubr.bf16.mxu0 0
        %1305 = vmatmul.mubr.bf16.gmra.mrb[0].mxu0 %v652
        %v1306 = vpop.f32.mrb[0].mxu0
        %v1307 = vadd.f32 %v1267, %v1306
        %v1308 = vpop.f32.mrb[0].mxu0
        %v1309 = vpop.f32.mrb[0].mxu0
        %v1310 = vpop.f32.mrb[0].mxu0
        %1311 = vdwg.mxu0
        %v1312 = vmax.f32 %v1226, 0.0
        %v1313 = vmax.f32 %v1228, 0.0
        %v1314 = vmax.f32 %v1307, 0.0
        %v1315 = vpack.c.bf16 %v1312, %v1312
        %v1316 = vpack.c.bf16 %v1313, %v1313
        %v1317 = vpack.c.bf16 %v1314, %v1314
        %s1318 = scalar_lea.vmem [#allocation9], 576
        %v1319 = vld [vmem:[%s1318] sm:$0xff]
        %v1320 = vld [vmem:[%s1318 + $0x8] sm:$0xf]
        %v1321 = vld [vmem:[%s1318 + $0xc] sm:$0xff]
        %v1322 = vld [vmem:[%s1318 + $0x14] sm:$0xf]
        %v1323 = vld [vmem:[%s1318 + $0x18] sm:$0xff]
        %v1324 = vld [vmem:[%s1318 + $0x20] sm:$0xf]
        %v1325 = vld [vmem:[%s1318 + $0x24] sm:$0xff]
        %v1326 = vld [vmem:[%s1318 + $0x2c] sm:$0xf]
        %v1327 = vld [vmem:[%s1318 + $0x30] sm:$0xff]
        %v1328 = vld [vmem:[%s1318 + $0x38] sm:$0xf]
        %v1329 = vld [vmem:[%s1318 + $0x3c] sm:$0xff]
        %v1330 = vld [vmem:[%s1318 + $0x44] sm:$0xf]
        %v1331 = vld [vmem:[%s1318 + $0x48] sm:$0xff]
        %v1332 = vld [vmem:[%s1318 + $0x50] sm:$0xf]
        %v1333 = vld [vmem:[%s1318 + $0x54] sm:$0xff]
        %v1334 = vld [vmem:[%s1318 + $0x5c] sm:$0xf]
        %v1335 = vld [vmem:[%s1318 + $0x60] sm:$0xff]
        %v1336 = vld [vmem:[%s1318 + $0x68] sm:$0xf]
        %v1337 = vld [vmem:[%s1318 + $0x6c] sm:$0xff]
        %v1338 = vld [vmem:[%s1318 + $0x74] sm:$0xf]
        %v1339 = vld [vmem:[%s1318 + $0x78] sm:$0xff]
        %v1340 = vld [vmem:[%s1318 + $0x80] sm:$0xf]
        %v1341 = vld [vmem:[%s1318 + $0x84] sm:$0xff]
        %v1342 = vld [vmem:[%s1318 + $0x8c] sm:$0xf]
        %v1343 = vld [vmem:[%s1318 + $0x90] sm:$0xff]
        %v1344 = vld [vmem:[%s1318 + $0x98] sm:$0xf]
        %v1345 = vld [vmem:[%s1318 + $0x9c] sm:$0xff]
        %v1346 = vld [vmem:[%s1318 + $0xa4] sm:$0xf]
        %v1347 = vld [vmem:[%s1318 + $0xa8] sm:$0xff]
        %v1348 = vld [vmem:[%s1318 + $0xb0] sm:$0xf]
        %v1349 = vld [vmem:[%s1318 + $0xb4] sm:$0xff]
        %v1350 = vld [vmem:[%s1318 + $0xbc] sm:$0xf]
        %v1351 = vld [vmem:[%s1318 + $0xc0] sm:$0xff]
        %v1352 = vld [vmem:[%s1318 + $0xc8] sm:$0xf]
        %v1353 = vld [vmem:[%s1318 + $0xcc] sm:$0xff]
        %v1354 = vld [vmem:[%s1318 + $0xd4] sm:$0xf]
        %v1355 = vld [vmem:[%s1318 + $0xd8] sm:$0xff]
        %v1356 = vld [vmem:[%s1318 + $0xe0] sm:$0xf]
        %v1357 = vld [vmem:[%s1318 + $0xe4] sm:$0xff]
        %v1358 = vld [vmem:[%s1318 + $0xec] sm:$0xf]
        %v1359 = vld [vmem:[%s1318 + $0xf0] sm:$0xff]
        %v1360 = vld [vmem:[%s1318 + $0xf8] sm:$0xf]
        %v1361 = vld [vmem:[%s1318 + $0xfc] sm:$0xff]
        %v1362 = vld [vmem:[%s1318 + $0x104] sm:$0xf]
        %v1363 = vld [vmem:[%s1318 + $0x108] sm:$0xff]
        %v1364 = vld [vmem:[%s1318 + $0x110] sm:$0xf]
        %v1365 = vld [vmem:[%s1318 + $0x114] sm:$0xff]
        %v1366 = vld [vmem:[%s1318 + $0x11c] sm:$0xf]
        %v1367 = vld [vmem:[%s1318 + $0x120] sm:$0xff]
        %v1368 = vld [vmem:[%s1318 + $0x128] sm:$0xf]
        %v1369 = vld [vmem:[%s1318 + $0x12c] sm:$0xff]
        %v1370 = vld [vmem:[%s1318 + $0x134] sm:$0xf]
        %v1371 = vld [vmem:[%s1318 + $0x138] sm:$0xff]
        %v1372 = vld [vmem:[%s1318 + $0x140] sm:$0xf]
        %v1373 = vld [vmem:[%s1318 + $0x144] sm:$0xff]
        %v1374 = vld [vmem:[%s1318 + $0x14c] sm:$0xf]
        %v1375 = vld [vmem:[%s1318 + $0x150] sm:$0xff]
        %v1376 = vld [vmem:[%s1318 + $0x158] sm:$0xf]
        %v1377 = vld [vmem:[%s1318 + $0x15c] sm:$0xff]
        %v1378 = vld [vmem:[%s1318 + $0x164] sm:$0xf]
        %v1379 = vld [vmem:[%s1318 + $0x168] sm:$0xff]
        %v1380 = vld [vmem:[%s1318 + $0x170] sm:$0xf]
        %v1381 = vld [vmem:[%s1318 + $0x174] sm:$0xff]
        %v1382 = vld [vmem:[%s1318 + $0x17c] sm:$0xf]
        %v1383 = vld [vmem:[%s1318 + $0x180] sm:$0xff]
        %v1384 = vld [vmem:[%s1318 + $0x188] sm:$0xf]
        %v1385 = vld [vmem:[%s1318 + $0x18c] sm:$0xff]
        %v1386 = vld [vmem:[%s1318 + $0x194] sm:$0xf]
        %v1387 = vld [vmem:[%s1318 + $0x198] sm:$0xff]
        %v1388 = vld [vmem:[%s1318 + $0x1a0] sm:$0xf]
        %v1389 = vld [vmem:[%s1318 + $0x1a4] sm:$0xff]
        %v1390 = vld [vmem:[%s1318 + $0x1ac] sm:$0xf]
        %v1391 = vld [vmem:[%s1318 + $0x1b0] sm:$0xff]
        %v1392 = vld [vmem:[%s1318 + $0x1b8] sm:$0xf]
        %v1393 = vld [vmem:[%s1318 + $0x1bc] sm:$0xff]
        %v1394 = vld [vmem:[%s1318 + $0x1c4] sm:$0xf]
        %v1395 = vld [vmem:[%s1318 + $0x1c8] sm:$0xff]
        %v1396 = vld [vmem:[%s1318 + $0x1d0] sm:$0xf]
        %v1397 = vld [vmem:[%s1318 + $0x1d4] sm:$0xff]
        %v1398 = vld [vmem:[%s1318 + $0x1dc] sm:$0xf]
        %v1399 = vld [vmem:[%s1318 + $0x1e0] sm:$0xff]
        %v1400 = vld [vmem:[%s1318 + $0x1e8] sm:$0xf]
        %v1401 = vld [vmem:[%s1318 + $0x1ec] sm:$0xff]
        %v1402 = vld [vmem:[%s1318 + $0x1f4] sm:$0xf]
        %v1403 = vld [vmem:[%s1318 + $0x1f8] sm:$0xff]
        %v1404 = vld [vmem:[%s1318 + $0x200] sm:$0xf]
        %v1405 = vld [vmem:[%s1318 + $0x204] sm:$0xff]
        %v1406 = vld [vmem:[%s1318 + $0x20c] sm:$0xf]
        %v1407 = vld [vmem:[%s1318 + $0x210] sm:$0xff]
        %v1408 = vld [vmem:[%s1318 + $0x218] sm:$0xf]
        %v1409 = vld [vmem:[%s1318 + $0x21c] sm:$0xff]
        %v1410 = vld [vmem:[%s1318 + $0x224] sm:$0xf]
        %v1411 = vld [vmem:[%s1318 + $0x228] sm:$0xff]
        %v1412 = vld [vmem:[%s1318 + $0x230] sm:$0xf]
        %v1413 = vld [vmem:[%s1318 + $0x234] sm:$0xff]
        %v1414 = vld [vmem:[%s1318 + $0x23c] sm:$0xf]
        %s1415 = scalar_lea.vmem [#allocation11], 3
        %v1416 = vld [vmem:[%s1415] sm:$0x7]
        %v1418 = vlaneseq
        %v1419 = vshrl.u32 %v1418, 7
        %v1420 = vsub.s32 0, %v1419
        %v1421 = vrot.slane %v1416, %v1420
        %v1422 = vlaneseq
        %v1423 = vshrl.u32 %v1422, 7
        %v1424 = vsub.s32 1, %v1423
        %v1425 = vrot.slane %v1416, %v1424
        %v1426 = vlaneseq
        %v1427 = vshrl.u32 %v1426, 7
        %v1428 = vsub.s32 2, %v1427
        %v1429 = vrot.slane %v1416, %v1428
        %v1529 = vunpack.c.l.b16 %v1319
        %v1530 = vunpack.c.h.b16 %v1319
        %v1531 = vunpack.c.l.b16 %v1320
        %v1532 = vunpack.c.l.b16 %v1321
        %v1533 = vunpack.c.h.b16 %v1321
        %v1534 = vunpack.c.l.b16 %v1322
        %v1535 = vunpack.c.l.b16 %v1323
        %v1536 = vunpack.c.h.b16 %v1323
        %v1537 = vunpack.c.l.b16 %v1324
        %v1538 = vunpack.c.l.b16 %v1325
        %v1539 = vunpack.c.h.b16 %v1325
        %v1540 = vunpack.c.l.b16 %v1326
        %v1541 = vunpack.c.l.b16 %v1327
        %v1542 = vunpack.c.h.b16 %v1327
        %v1543 = vunpack.c.l.b16 %v1328
        %v1544 = vunpack.c.l.b16 %v1329
        %v1545 = vunpack.c.h.b16 %v1329
        %v1546 = vunpack.c.l.b16 %v1330
        %v1547 = vunpack.c.l.b16 %v1331
        %v1548 = vunpack.c.h.b16 %v1331
        %v1549 = vunpack.c.l.b16 %v1332
        %v1550 = vunpack.c.l.b16 %v1333
        %v1551 = vunpack.c.h.b16 %v1333
        %v1552 = vunpack.c.l.b16 %v1334
        %v1553 = vunpack.c.l.b16 %v1335
        %v1554 = vunpack.c.h.b16 %v1335
        %v1555 = vunpack.c.l.b16 %v1336
        %v1556 = vunpack.c.l.b16 %v1337
        %v1557 = vunpack.c.h.b16 %v1337
        %v1558 = vunpack.c.l.b16 %v1338
        %v1559 = vunpack.c.l.b16 %v1339
        %v1560 = vunpack.c.h.b16 %v1339
        %v1561 = vunpack.c.l.b16 %v1340
        %v1562 = vunpack.c.l.b16 %v1341
        %v1563 = vunpack.c.h.b16 %v1341
        %v1564 = vunpack.c.l.b16 %v1342
        %v1565 = vunpack.c.l.b16 %v1343
        %v1566 = vunpack.c.h.b16 %v1343
        %v1567 = vunpack.c.l.b16 %v1344
        %v1568 = vunpack.c.l.b16 %v1345
        %v1569 = vunpack.c.h.b16 %v1345
        %v1570 = vunpack.c.l.b16 %v1346
        %v1571 = vunpack.c.l.b16 %v1347
        %v1572 = vunpack.c.h.b16 %v1347
        %v1573 = vunpack.c.l.b16 %v1348
        %v1574 = vunpack.c.l.b16 %v1349
        %v1575 = vunpack.c.h.b16 %v1349
        %v1576 = vunpack.c.l.b16 %v1350
        %v1577 = vunpack.c.l.b16 %v1351
        %v1578 = vunpack.c.h.b16 %v1351
        %v1579 = vunpack.c.l.b16 %v1352
        %v1580 = vunpack.c.l.b16 %v1353
        %v1581 = vunpack.c.h.b16 %v1353
        %v1582 = vunpack.c.l.b16 %v1354
        %v1583 = vunpack.c.l.b16 %v1355
        %v1584 = vunpack.c.h.b16 %v1355
        %v1585 = vunpack.c.l.b16 %v1356
        %v1586 = vunpack.c.l.b16 %v1357
        %v1587 = vunpack.c.h.b16 %v1357
        %v1588 = vunpack.c.l.b16 %v1358
        %v1589 = vunpack.c.l.b16 %v1359
        %v1590 = vunpack.c.h.b16 %v1359
        %v1591 = vunpack.c.l.b16 %v1360
        %v1592 = vunpack.c.l.b16 %v1361
        %v1593 = vunpack.c.h.b16 %v1361
        %v1594 = vunpack.c.l.b16 %v1362
        %v1595 = vunpack.c.l.b16 %v1363
        %v1596 = vunpack.c.h.b16 %v1363
        %v1597 = vunpack.c.l.b16 %v1364
        %v1598 = vunpack.c.l.b16 %v1365
        %v1599 = vunpack.c.h.b16 %v1365
        %v1600 = vunpack.c.l.b16 %v1366
        %v1601 = vunpack.c.l.b16 %v1367
        %v1602 = vunpack.c.h.b16 %v1367
        %v1603 = vunpack.c.l.b16 %v1368
        %v1604 = vunpack.c.l.b16 %v1369
        %v1605 = vunpack.c.h.b16 %v1369
        %v1606 = vunpack.c.l.b16 %v1370
        %v1607 = vunpack.c.l.b16 %v1371
        %v1608 = vunpack.c.h.b16 %v1371
        %v1609 = vunpack.c.l.b16 %v1372
        %v1610 = vunpack.c.l.b16 %v1373
        %v1611 = vunpack.c.h.b16 %v1373
        %v1612 = vunpack.c.l.b16 %v1374
        %v1613 = vunpack.c.l.b16 %v1375
        %v1614 = vunpack.c.h.b16 %v1375
        %v1615 = vunpack.c.l.b16 %v1376
        %v1616 = vunpack.c.l.b16 %v1377
        %v1617 = vunpack.c.h.b16 %v1377
        %v1618 = vunpack.c.l.b16 %v1378
        %v1619 = vunpack.c.l.b16 %v1379
        %v1620 = vunpack.c.h.b16 %v1379
        %v1621 = vunpack.c.l.b16 %v1380
        %v1622 = vunpack.c.l.b16 %v1381
        %v1623 = vunpack.c.h.b16 %v1381
        %v1624 = vunpack.c.l.b16 %v1382
        %v1625 = vunpack.c.l.b16 %v1383
        %v1626 = vunpack.c.h.b16 %v1383
        %v1627 = vunpack.c.l.b16 %v1384
        %v1628 = vunpack.c.l.b16 %v1385
        %v1629 = vunpack.c.h.b16 %v1385
        %v1630 = vunpack.c.l.b16 %v1386
        %v1631 = vunpack.c.l.b16 %v1387
        %v1632 = vunpack.c.h.b16 %v1387
        %v1633 = vunpack.c.l.b16 %v1388
        %v1634 = vunpack.c.l.b16 %v1389
        %v1635 = vunpack.c.h.b16 %v1389
        %v1636 = vunpack.c.l.b16 %v1390
        %v1637 = vunpack.c.l.b16 %v1391
        %v1638 = vunpack.c.h.b16 %v1391
        %v1639 = vunpack.c.l.b16 %v1392
        %v1640 = vunpack.c.l.b16 %v1393
        %v1641 = vunpack.c.h.b16 %v1393
        %v1642 = vunpack.c.l.b16 %v1394
        %v1643 = vunpack.c.l.b16 %v1395
        %v1644 = vunpack.c.h.b16 %v1395
        %v1645 = vunpack.c.l.b16 %v1396
        %v1646 = vunpack.c.l.b16 %v1397
        %v1647 = vunpack.c.h.b16 %v1397
        %v1648 = vunpack.c.l.b16 %v1398
        %v1649 = vunpack.c.l.b16 %v1399
        %v1650 = vunpack.c.h.b16 %v1399
        %v1651 = vunpack.c.l.b16 %v1400
        %v1652 = vunpack.c.l.b16 %v1401
        %v1653 = vunpack.c.h.b16 %v1401
        %v1654 = vunpack.c.l.b16 %v1402
        %v1655 = vunpack.c.l.b16 %v1403
        %v1656 = vunpack.c.h.b16 %v1403
        %v1657 = vunpack.c.l.b16 %v1404
        %v1658 = vunpack.c.l.b16 %v1405
        %v1659 = vunpack.c.h.b16 %v1405
        %v1660 = vunpack.c.l.b16 %v1406
        %v1661 = vunpack.c.l.b16 %v1407
        %v1662 = vunpack.c.h.b16 %v1407
        %v1663 = vunpack.c.l.b16 %v1408
        %v1664 = vunpack.c.l.b16 %v1409
        %v1665 = vunpack.c.h.b16 %v1409
        %v1666 = vunpack.c.l.b16 %v1410
        %v1667 = vunpack.c.l.b16 %v1411
        %v1668 = vunpack.c.h.b16 %v1411
        %v1669 = vunpack.c.l.b16 %v1412
        %v1670 = vunpack.c.l.b16 %v1413
        %v1671 = vunpack.c.h.b16 %v1413
        %v1672 = vunpack.c.l.b16 %v1414
        %v1673 = vpack.c.b16 %v1532, %v1529
        %v1674 = vpack.c.b16 %v1533, %v1530
        %v1675 = vpack.c.b16 %v1534, %v1531
        %v1676 = vpack.c.b16 %v1538, %v1535
        %v1677 = vpack.c.b16 %v1539, %v1536
        %v1678 = vpack.c.b16 %v1540, %v1537
        %v1679 = vpack.c.b16 %v1544, %v1541
        %v1680 = vpack.c.b16 %v1545, %v1542
        %v1681 = vpack.c.b16 %v1546, %v1543
        %v1682 = vpack.c.b16 %v1550, %v1547
        %v1683 = vpack.c.b16 %v1551, %v1548
        %v1684 = vpack.c.b16 %v1552, %v1549
        %v1685 = vpack.c.b16 %v1556, %v1553
        %v1686 = vpack.c.b16 %v1557, %v1554
        %v1687 = vpack.c.b16 %v1558, %v1555
        %v1688 = vpack.c.b16 %v1562, %v1559
        %v1689 = vpack.c.b16 %v1563, %v1560
        %v1690 = vpack.c.b16 %v1564, %v1561
        %v1691 = vpack.c.b16 %v1568, %v1565
        %v1692 = vpack.c.b16 %v1569, %v1566
        %v1693 = vpack.c.b16 %v1570, %v1567
        %v1694 = vpack.c.b16 %v1574, %v1571
        %v1695 = vpack.c.b16 %v1575, %v1572
        %v1696 = vpack.c.b16 %v1576, %v1573
        %v1697 = vpack.c.b16 %v1580, %v1577
        %v1698 = vpack.c.b16 %v1581, %v1578
        %v1699 = vpack.c.b16 %v1582, %v1579
        %v1700 = vpack.c.b16 %v1586, %v1583
        %v1701 = vpack.c.b16 %v1587, %v1584
        %v1702 = vpack.c.b16 %v1588, %v1585
        %v1703 = vpack.c.b16 %v1592, %v1589
        %v1704 = vpack.c.b16 %v1593, %v1590
        %v1705 = vpack.c.b16 %v1594, %v1591
        %v1706 = vpack.c.b16 %v1598, %v1595
        %v1707 = vpack.c.b16 %v1599, %v1596
        %v1708 = vpack.c.b16 %v1600, %v1597
        %v1709 = vpack.c.b16 %v1604, %v1601
        %v1710 = vpack.c.b16 %v1605, %v1602
        %v1711 = vpack.c.b16 %v1606, %v1603
        %v1712 = vpack.c.b16 %v1610, %v1607
        %v1713 = vpack.c.b16 %v1611, %v1608
        %v1714 = vpack.c.b16 %v1612, %v1609
        %v1715 = vpack.c.b16 %v1616, %v1613
        %v1716 = vpack.c.b16 %v1617, %v1614
        %v1717 = vpack.c.b16 %v1618, %v1615
        %v1718 = vpack.c.b16 %v1622, %v1619
        %v1719 = vpack.c.b16 %v1623, %v1620
        %v1720 = vpack.c.b16 %v1624, %v1621
        %v1721 = vpack.c.b16 %v1628, %v1625
        %v1722 = vpack.c.b16 %v1629, %v1626
        %v1723 = vpack.c.b16 %v1630, %v1627
        %v1724 = vpack.c.b16 %v1634, %v1631
        %v1725 = vpack.c.b16 %v1635, %v1632
        %v1726 = vpack.c.b16 %v1636, %v1633
        %v1727 = vpack.c.b16 %v1640, %v1637
        %v1728 = vpack.c.b16 %v1641, %v1638
        %v1729 = vpack.c.b16 %v1642, %v1639
        %v1730 = vpack.c.b16 %v1646, %v1643
        %v1731 = vpack.c.b16 %v1647, %v1644
        %v1732 = vpack.c.b16 %v1648, %v1645
        %v1733 = vpack.c.b16 %v1652, %v1649
        %v1734 = vpack.c.b16 %v1653, %v1650
        %v1735 = vpack.c.b16 %v1654, %v1651
        %v1736 = vpack.c.b16 %v1658, %v1655
        %v1737 = vpack.c.b16 %v1659, %v1656
        %v1738 = vpack.c.b16 %v1660, %v1657
        %v1739 = vpack.c.b16 %v1664, %v1661
        %v1740 = vpack.c.b16 %v1665, %v1662
        %v1741 = vpack.c.b16 %v1666, %v1663
        %v1742 = vpack.c.b16 %v1670, %v1667
        %v1743 = vpack.c.b16 %v1671, %v1668
        %v1744 = vpack.c.b16 %v1672, %v1669
        %1817 = vmatprep.subr.bf16.mxu0 %v1674
        %1818 = vmatpush1.bf16.msra.mxu0 %v1673
        %1819 = vmatprep.subr.bf16.mxu0 %v1677
        %1820 = vmatpush1.bf16.msra.mxu0 %v1676
        %1821 = vmatprep.subr.bf16.mxu0 %v1680
        %1822 = vmatpush1.bf16.msra.mxu0 %v1679
        %1823 = vmatprep.subr.bf16.mxu0 %v1683
        %1824 = vmatpush1.bf16.msra.mxu0 %v1682
        %1825 = vmatprep.subr.bf16.mxu0 %v1686
        %1826 = vmatpush1.bf16.msra.mxu0 %v1685
        %1827 = vmatprep.subr.bf16.mxu0 %v1689
        %1828 = vmatpush1.bf16.msra.mxu0 %v1688
        %1829 = vmatprep.subr.bf16.mxu0 %v1692
        %1830 = vmatpush1.bf16.msra.mxu0 %v1691
        %1831 = vmatprep.subr.bf16.mxu0 %v1695
        %1832 = vmatpush1.bf16.msra.mxu0 %v1694
        %1833 = vmatprep.subr.bf16.mxu0 %v1698
        %1834 = vmatpush1.bf16.msra.mxu0 %v1697
        %1835 = vmatprep.subr.bf16.mxu0 %v1701
        %1836 = vmatpush1.bf16.msra.mxu0 %v1700
        %1837 = vmatprep.subr.bf16.mxu0 %v1704
        %1838 = vmatpush1.bf16.msra.mxu0 %v1703
        %1839 = vmatprep.subr.bf16.mxu0 %v1707
        %1840 = vmatpush1.bf16.msra.mxu0 %v1706
        %1841 = vmatprep.subr.bf16.mxu0 %v1710
        %1842 = vmatpush1.bf16.msra.mxu0 %v1709
        %1843 = vmatprep.subr.bf16.mxu0 %v1713
        %1844 = vmatpush1.bf16.msra.mxu0 %v1712
        %1845 = vmatprep.subr.bf16.mxu0 %v1716
        %1846 = vmatpush1.bf16.msra.mxu0 %v1715
        %1847 = vmatprep.subr.bf16.mxu0 %v1719
        %1848 = vmatpush1.bf16.msra.mxu0 %v1718
        %1849 = vmatprep.mubr.bf16.mxu0 %v1316
        %1850 = vmatmul.mubr.bf16.gmra.mrb[0].mxu0 %v1315
        %v1851 = vpop.f32.mrb[0].mxu0
        %v1852 = vadd.f32 %v1421, %v1851
        %v1853 = vpop.f32.mrb[0].mxu0
        %v1854 = vadd.f32 %v1425, %v1853
        %v1855 = vpop.f32.mrb[0].mxu0
        %v1856 = vpop.f32.mrb[0].mxu0
        %1857 = vdwg.mxu0
        %1858 = vmatprep.subr.bf16.mxu0 %v1722
        %1859 = vmatpush1.bf16.msra.mxu0 %v1721
        %1860 = vmatprep.subr.bf16.mxu0 %v1725
        %1861 = vmatpush1.bf16.msra.mxu0 %v1724
        %1862 = vmatprep.subr.bf16.mxu0 %v1728
        %1863 = vmatpush1.bf16.msra.mxu0 %v1727
        %1864 = vmatprep.subr.bf16.mxu0 %v1731
        %1865 = vmatpush1.bf16.msra.mxu0 %v1730
        %1866 = vmatprep.subr.bf16.mxu0 %v1734
        %1867 = vmatpush1.bf16.msra.mxu0 %v1733
        %1868 = vmatprep.subr.bf16.mxu0 %v1737
        %1869 = vmatpush1.bf16.msra.mxu0 %v1736
        %1870 = vmatprep.subr.bf16.mxu0 %v1740
        %1871 = vmatpush1.bf16.msra.mxu0 %v1739
        %1872 = vmatprep.subr.bf16.mxu0 %v1743
        %1873 = vmatpush1.bf16.msra.mxu0 %v1742
        %1874 = vmatprep.subr.bf16.mxu0 0
        %1875 = vmatpush1.bf16.msra.mxu0 0
        %1876 = vmatprep.subr.bf16.mxu0 0
        %1877 = vmatpush1.bf16.msra.mxu0 0
        %1878 = vmatprep.subr.bf16.mxu0 0
        %1879 = vmatpush1.bf16.msra.mxu0 0
        %1880 = vmatprep.subr.bf16.mxu0 0
        %1881 = vmatpush1.bf16.msra.mxu0 0
        %1882 = vmatprep.subr.bf16.mxu0 0
        %1883 = vmatpush1.bf16.msra.mxu0 0
        %1884 = vmatprep.subr.bf16.mxu0 0
        %1885 = vmatpush1.bf16.msra.mxu0 0
        %1886 = vmatprep.subr.bf16.mxu0 0
        %1887 = vmatpush1.bf16.msra.mxu0 0
        %1888 = vmatprep.subr.bf16.mxu0 0
        %1889 = vmatpush1.bf16.msra.mxu0 0
        %1890 = vmatprep.mubr.bf16.mxu0 0
        %1891 = vmatmul.mubr.bf16.gmra.mrb[0].mxu0 %v1317
        %v1892 = vpop.f32.mrb[0].mxu0
        %v1893 = vadd.f32 %v1852, %v1892
        %v1894 = vpop.f32.mrb[0].mxu0
        %v1895 = vadd.f32 %v1854, %v1894
        %v1896 = vpop.f32.mrb[0].mxu0
        %v1897 = vpop.f32.mrb[0].mxu0
        %1898 = vdwg.mxu0
        %1899 = vmatprep.subr.bf16.mxu0 0
        %1900 = vmatpush1.bf16.msra.mxu0 %v1675
        %1901 = vmatprep.subr.bf16.mxu0 0
        %1902 = vmatpush1.bf16.msra.mxu0 %v1678
        %1903 = vmatprep.subr.bf16.mxu0 0
        %1904 = vmatpush1.bf16.msra.mxu0 %v1681
        %1905 = vmatprep.subr.bf16.mxu0 0
        %1906 = vmatpush1.bf16.msra.mxu0 %v1684
        %1907 = vmatprep.subr.bf16.mxu0 0
        %1908 = vmatpush1.bf16.msra.mxu0 %v1687
        %1909 = vmatprep.subr.bf16.mxu0 0
        %1910 = vmatpush1.bf16.msra.mxu0 %v1690
        %1911 = vmatprep.subr.bf16.mxu0 0
        %1912 = vmatpush1.bf16.msra.mxu0 %v1693
        %1913 = vmatprep.subr.bf16.mxu0 0
        %1914 = vmatpush1.bf16.msra.mxu0 %v1696
        %1915 = vmatprep.subr.bf16.mxu0 0
        %1916 = vmatpush1.bf16.msra.mxu0 %v1699
        %1917 = vmatprep.subr.bf16.mxu0 0
        %1918 = vmatpush1.bf16.msra.mxu0 %v1702
        %1919 = vmatprep.subr.bf16.mxu0 0
        %1920 = vmatpush1.bf16.msra.mxu0 %v1705
        %1921 = vmatprep.subr.bf16.mxu0 0
        %1922 = vmatpush1.bf16.msra.mxu0 %v1708
        %1923 = vmatprep.subr.bf16.mxu0 0
        %1924 = vmatpush1.bf16.msra.mxu0 %v1711
        %1925 = vmatprep.subr.bf16.mxu0 0
        %1926 = vmatpush1.bf16.msra.mxu0 %v1714
        %1927 = vmatprep.subr.bf16.mxu0 0
        %1928 = vmatpush1.bf16.msra.mxu0 %v1717
        %1929 = vmatprep.subr.bf16.mxu0 0
        %1930 = vmatpush1.bf16.msra.mxu0 %v1720
        %1931 = vmatprep.mubr.bf16.mxu0 %v1316
        %1932 = vmatmul.mubr.bf16.gmra.mrb[0].mxu0 %v1315
        %v1933 = vpop.f32.mrb[0].mxu0
        %v1934 = vadd.f32 %v1429, %v1933
        %v1935 = vpop.f32.mrb[0].mxu0
        %v1936 = vpop.f32.mrb[0].mxu0
        %v1937 = vpop.f32.mrb[0].mxu0
        %1938 = vdwg.mxu0
        %1939 = vmatprep.subr.bf16.mxu0 0
        %1940 = vmatpush1.bf16.msra.mxu0 %v1723
        %1941 = vmatprep.subr.bf16.mxu0 0
        %1942 = vmatpush1.bf16.msra.mxu0 %v1726
        %1943 = vmatprep.subr.bf16.mxu0 0
        %1944 = vmatpush1.bf16.msra.mxu0 %v1729
        %1945 = vmatprep.subr.bf16.mxu0 0
        %1946 = vmatpush1.bf16.msra.mxu0 %v1732
        %1947 = vmatprep.subr.bf16.mxu0 0
        %1948 = vmatpush1.bf16.msra.mxu0 %v1735
        %1949 = vmatprep.subr.bf16.mxu0 0
        %1950 = vmatpush1.bf16.msra.mxu0 %v1738
        %1951 = vmatprep.subr.bf16.mxu0 0
        %1952 = vmatpush1.bf16.msra.mxu0 %v1741
        %1953 = vmatprep.subr.bf16.mxu0 0
        %1954 = vmatpush1.bf16.msra.mxu0 %v1744
        %1955 = vmatprep.subr.bf16.mxu0 0
        %1956 = vmatpush1.bf16.msra.mxu0 0
        %1957 = vmatprep.subr.bf16.mxu0 0
        %1958 = vmatpush1.bf16.msra.mxu0 0
        %1959 = vmatprep.subr.bf16.mxu0 0
        %1960 = vmatpush1.bf16.msra.mxu0 0
        %1961 = vmatprep.subr.bf16.mxu0 0
        %1962 = vmatpush1.bf16.msra.mxu0 0
        %1963 = vmatprep.subr.bf16.mxu0 0
        %1964 = vmatpush1.bf16.msra.mxu0 0
        %1965 = vmatprep.subr.bf16.mxu0 0
        %1966 = vmatpush1.bf16.msra.mxu0 0
        %1967 = vmatprep.subr.bf16.mxu0 0
        %1968 = vmatpush1.bf16.msra.mxu0 0
        %1969 = vmatprep.subr.bf16.mxu0 0
        %1970 = vmatpush1.bf16.msra.mxu0 0
        %1971 = vmatprep.mubr.bf16.mxu0 0
        %1972 = vmatmul.mubr.bf16.gmra.mrb[0].mxu0 %v1317
        %v1973 = vpop.f32.mrb[0].mxu0
        %v1974 = vadd.f32 %v1934, %v1973
        %v1975 = vpop.f32.mrb[0].mxu0
        %v1976 = vpop.f32.mrb[0].mxu0
        %v1977 = vpop.f32.mrb[0].mxu0
        %1978 = vdwg.mxu0
        %v1979 = vunpack.c.l.bf16 %v650
        %v1980 = vunpack.c.l.bf16 %v651
        %v1981 = vunpack.c.l.bf16 %v652
        %v1982 = vadd.f32 %v1893, %v1979
        %v1983 = vadd.f32 %v1895, %v1980
        %v1984 = vadd.f32 %v1974, %v1981
        %v1985 = vmax.f32 %v1982, 0.0
        %v1986 = vmax.f32 %v1983, 0.0
        %v1987 = vmax.f32 %v1984, 0.0
        %v1988 = vpack.c.bf16 %v1985, %v1985
        %v1989 = vpack.c.bf16 %v1986, %v1986
        %v1990 = vpack.c.bf16 %v1987, %v1987
        %s1991 = scalar_lea.vmem [#allocation9], 1152
        %v1992 = vld [vmem:[%s1991] sm:$0xff]
        %v1993 = vld [vmem:[%s1991 + $0x8] sm:$0xf]
        %v1994 = vld [vmem:[%s1991 + $0xc] sm:$0xff]
        %v1995 = vld [vmem:[%s1991 + $0x14] sm:$0xf]
        %v1996 = vld [vmem:[%s1991 + $0x18] sm:$0xff]
        %v1997 = vld [vmem:[%s1991 + $0x20] sm:$0xf]
        %v1998 = vld [vmem:[%s1991 + $0x24] sm:$0xff]
        %v1999 = vld [vmem:[%s1991 + $0x2c] sm:$0xf]
        %v2000 = vld [vmem:[%s1991 + $0x30] sm:$0xff]
        %v2001 = vld [vmem:[%s1991 + $0x38] sm:$0xf]
        %v2002 = vld [vmem:[%s1991 + $0x3c] sm:$0xff]
        %v2003 = vld [vmem:[%s1991 + $0x44] sm:$0xf]
        %v2004 = vld [vmem:[%s1991 + $0x48] sm:$0xff]
        %v2005 = vld [vmem:[%s1991 + $0x50] sm:$0xf]
        %v2006 = vld [vmem:[%s1991 + $0x54] sm:$0xff]
        %v2007 = vld [vmem:[%s1991 + $0x5c] sm:$0xf]
        %v2008 = vld [vmem:[%s1991 + $0x60] sm:$0xff]
        %v2009 = vld [vmem:[%s1991 + $0x68] sm:$0xf]
        %v2010 = vld [vmem:[%s1991 + $0x6c] sm:$0xff]
        %v2011 = vld [vmem:[%s1991 + $0x74] sm:$0xf]
        %v2012 = vld [vmem:[%s1991 + $0x78] sm:$0xff]
        %v2013 = vld [vmem:[%s1991 + $0x80] sm:$0xf]
        %v2014 = vld [vmem:[%s1991 + $0x84] sm:$0xff]
        %v2015 = vld [vmem:[%s1991 + $0x8c] sm:$0xf]
        %v2016 = vld [vmem:[%s1991 + $0x90] sm:$0xff]
        %v2017 = vld [vmem:[%s1991 + $0x98] sm:$0xf]
        %v2018 = vld [vmem:[%s1991 + $0x9c] sm:$0xff]
        %v2019 = vld [vmem:[%s1991 + $0xa4] sm:$0xf]
        %v2020 = vld [vmem:[%s1991 + $0xa8] sm:$0xff]
        %v2021 = vld [vmem:[%s1991 + $0xb0] sm:$0xf]
        %v2022 = vld [vmem:[%s1991 + $0xb4] sm:$0xff]
        %v2023 = vld [vmem:[%s1991 + $0xbc] sm:$0xf]
        %v2024 = vld [vmem:[%s1991 + $0xc0] sm:$0xff]
        %v2025 = vld [vmem:[%s1991 + $0xc8] sm:$0xf]
        %v2026 = vld [vmem:[%s1991 + $0xcc] sm:$0xff]
        %v2027 = vld [vmem:[%s1991 + $0xd4] sm:$0xf]
        %v2028 = vld [vmem:[%s1991 + $0xd8] sm:$0xff]
        %v2029 = vld [vmem:[%s1991 + $0xe0] sm:$0xf]
        %v2030 = vld [vmem:[%s1991 + $0xe4] sm:$0xff]
        %v2031 = vld [vmem:[%s1991 + $0xec] sm:$0xf]
        %v2032 = vld [vmem:[%s1991 + $0xf0] sm:$0xff]
        %v2033 = vld [vmem:[%s1991 + $0xf8] sm:$0xf]
        %v2034 = vld [vmem:[%s1991 + $0xfc] sm:$0xff]
        %v2035 = vld [vmem:[%s1991 + $0x104] sm:$0xf]
        %v2036 = vld [vmem:[%s1991 + $0x108] sm:$0xff]
        %v2037 = vld [vmem:[%s1991 + $0x110] sm:$0xf]
        %v2038 = vld [vmem:[%s1991 + $0x114] sm:$0xff]
        %v2039 = vld [vmem:[%s1991 + $0x11c] sm:$0xf]
        %v2040 = vld [vmem:[%s1991 + $0x120] sm:$0xff]
        %v2041 = vld [vmem:[%s1991 + $0x128] sm:$0xf]
        %v2042 = vld [vmem:[%s1991 + $0x12c] sm:$0xff]
        %v2043 = vld [vmem:[%s1991 + $0x134] sm:$0xf]
        %v2044 = vld [vmem:[%s1991 + $0x138] sm:$0xff]
        %v2045 = vld [vmem:[%s1991 + $0x140] sm:$0xf]
        %v2046 = vld [vmem:[%s1991 + $0x144] sm:$0xff]
        %v2047 = vld [vmem:[%s1991 + $0x14c] sm:$0xf]
        %v2048 = vld [vmem:[%s1991 + $0x150] sm:$0xff]
        %v2049 = vld [vmem:[%s1991 + $0x158] sm:$0xf]
        %v2050 = vld [vmem:[%s1991 + $0x15c] sm:$0xff]
        %v2051 = vld [vmem:[%s1991 + $0x164] sm:$0xf]
        %v2052 = vld [vmem:[%s1991 + $0x168] sm:$0xff]
        %v2053 = vld [vmem:[%s1991 + $0x170] sm:$0xf]
        %v2054 = vld [vmem:[%s1991 + $0x174] sm:$0xff]
        %v2055 = vld [vmem:[%s1991 + $0x17c] sm:$0xf]
        %v2056 = vld [vmem:[%s1991 + $0x180] sm:$0xff]
        %v2057 = vld [vmem:[%s1991 + $0x188] sm:$0xf]
        %v2058 = vld [vmem:[%s1991 + $0x18c] sm:$0xff]
        %v2059 = vld [vmem:[%s1991 + $0x194] sm:$0xf]
        %v2060 = vld [vmem:[%s1991 + $0x198] sm:$0xff]
        %v2061 = vld [vmem:[%s1991 + $0x1a0] sm:$0xf]
        %v2062 = vld [vmem:[%s1991 + $0x1a4] sm:$0xff]
        %v2063 = vld [vmem:[%s1991 + $0x1ac] sm:$0xf]
        %v2064 = vld [vmem:[%s1991 + $0x1b0] sm:$0xff]
        %v2065 = vld [vmem:[%s1991 + $0x1b8] sm:$0xf]
        %v2066 = vld [vmem:[%s1991 + $0x1bc] sm:$0xff]
        %v2067 = vld [vmem:[%s1991 + $0x1c4] sm:$0xf]
        %v2068 = vld [vmem:[%s1991 + $0x1c8] sm:$0xff]
        %v2069 = vld [vmem:[%s1991 + $0x1d0] sm:$0xf]
        %v2070 = vld [vmem:[%s1991 + $0x1d4] sm:$0xff]
        %v2071 = vld [vmem:[%s1991 + $0x1dc] sm:$0xf]
        %v2072 = vld [vmem:[%s1991 + $0x1e0] sm:$0xff]
        %v2073 = vld [vmem:[%s1991 + $0x1e8] sm:$0xf]
        %v2074 = vld [vmem:[%s1991 + $0x1ec] sm:$0xff]
        %v2075 = vld [vmem:[%s1991 + $0x1f4] sm:$0xf]
        %v2076 = vld [vmem:[%s1991 + $0x1f8] sm:$0xff]
        %v2077 = vld [vmem:[%s1991 + $0x200] sm:$0xf]
        %v2078 = vld [vmem:[%s1991 + $0x204] sm:$0xff]
        %v2079 = vld [vmem:[%s1991 + $0x20c] sm:$0xf]
        %v2080 = vld [vmem:[%s1991 + $0x210] sm:$0xff]
        %v2081 = vld [vmem:[%s1991 + $0x218] sm:$0xf]
        %v2082 = vld [vmem:[%s1991 + $0x21c] sm:$0xff]
        %v2083 = vld [vmem:[%s1991 + $0x224] sm:$0xf]
        %v2084 = vld [vmem:[%s1991 + $0x228] sm:$0xff]
        %v2085 = vld [vmem:[%s1991 + $0x230] sm:$0xf]
        %v2086 = vld [vmem:[%s1991 + $0x234] sm:$0xff]
        %v2087 = vld [vmem:[%s1991 + $0x23c] sm:$0xf]
        %s2088 = scalar_lea.vmem [#allocation11], 6
        %v2089 = vld [vmem:[%s2088] sm:$0x7]
        %v2091 = vlaneseq
        %v2092 = vshrl.u32 %v2091, 7
        %v2093 = vsub.s32 0, %v2092
        %v2094 = vrot.slane %v2089, %v2093
        %v2095 = vlaneseq
        %v2096 = vshrl.u32 %v2095, 7
        %v2097 = vsub.s32 1, %v2096
        %v2098 = vrot.slane %v2089, %v2097
        %v2099 = vlaneseq
        %v2100 = vshrl.u32 %v2099, 7
        %v2101 = vsub.s32 2, %v2100
        %v2102 = vrot.slane %v2089, %v2101
        %v2202 = vunpack.c.l.b16 %v1992
        %v2203 = vunpack.c.h.b16 %v1992
        %v2204 = vunpack.c.l.b16 %v1993
        %v2205 = vunpack.c.l.b16 %v1994
        %v2206 = vunpack.c.h.b16 %v1994
        %v2207 = vunpack.c.l.b16 %v1995
        %v2208 = vunpack.c.l.b16 %v1996
        %v2209 = vunpack.c.h.b16 %v1996
        %v2210 = vunpack.c.l.b16 %v1997
        %v2211 = vunpack.c.l.b16 %v1998
        %v2212 = vunpack.c.h.b16 %v1998
        %v2213 = vunpack.c.l.b16 %v1999
        %v2214 = vunpack.c.l.b16 %v2000
        %v2215 = vunpack.c.h.b16 %v2000
        %v2216 = vunpack.c.l.b16 %v2001
        %v2217 = vunpack.c.l.b16 %v2002
        %v2218 = vunpack.c.h.b16 %v2002
        %v2219 = vunpack.c.l.b16 %v2003
        %v2220 = vunpack.c.l.b16 %v2004
        %v2221 = vunpack.c.h.b16 %v2004
        %v2222 = vunpack.c.l.b16 %v2005
        %v2223 = vunpack.c.l.b16 %v2006
        %v2224 = vunpack.c.h.b16 %v2006
        %v2225 = vunpack.c.l.b16 %v2007
        %v2226 = vunpack.c.l.b16 %v2008
        %v2227 = vunpack.c.h.b16 %v2008
        %v2228 = vunpack.c.l.b16 %v2009
        %v2229 = vunpack.c.l.b16 %v2010
        %v2230 = vunpack.c.h.b16 %v2010
        %v2231 = vunpack.c.l.b16 %v2011
        %v2232 = vunpack.c.l.b16 %v2012
        %v2233 = vunpack.c.h.b16 %v2012
        %v2234 = vunpack.c.l.b16 %v2013
        %v2235 = vunpack.c.l.b16 %v2014
        %v2236 = vunpack.c.h.b16 %v2014
        %v2237 = vunpack.c.l.b16 %v2015
        %v2238 = vunpack.c.l.b16 %v2016
        %v2239 = vunpack.c.h.b16 %v2016
        %v2240 = vunpack.c.l.b16 %v2017
        %v2241 = vunpack.c.l.b16 %v2018
        %v2242 = vunpack.c.h.b16 %v2018
        %v2243 = vunpack.c.l.b16 %v2019
        %v2244 = vunpack.c.l.b16 %v2020
        %v2245 = vunpack.c.h.b16 %v2020
        %v2246 = vunpack.c.l.b16 %v2021
        %v2247 = vunpack.c.l.b16 %v2022
        %v2248 = vunpack.c.h.b16 %v2022
        %v2249 = vunpack.c.l.b16 %v2023
        %v2250 = vunpack.c.l.b16 %v2024
        %v2251 = vunpack.c.h.b16 %v2024
        %v2252 = vunpack.c.l.b16 %v2025
        %v2253 = vunpack.c.l.b16 %v2026
        %v2254 = vunpack.c.h.b16 %v2026
        %v2255 = vunpack.c.l.b16 %v2027
        %v2256 = vunpack.c.l.b16 %v2028
        %v2257 = vunpack.c.h.b16 %v2028
        %v2258 = vunpack.c.l.b16 %v2029
        %v2259 = vunpack.c.l.b16 %v2030
        %v2260 = vunpack.c.h.b16 %v2030
        %v2261 = vunpack.c.l.b16 %v2031
        %v2262 = vunpack.c.l.b16 %v2032
        %v2263 = vunpack.c.h.b16 %v2032
        %v2264 = vunpack.c.l.b16 %v2033
        %v2265 = vunpack.c.l.b16 %v2034
        %v2266 = vunpack.c.h.b16 %v2034
        %v2267 = vunpack.c.l.b16 %v2035
        %v2268 = vunpack.c.l.b16 %v2036
        %v2269 = vunpack.c.h.b16 %v2036
        %v2270 = vunpack.c.l.b16 %v2037
        %v2271 = vunpack.c.l.b16 %v2038
        %v2272 = vunpack.c.h.b16 %v2038
        %v2273 = vunpack.c.l.b16 %v2039
        %v2274 = vunpack.c.l.b16 %v2040
        %v2275 = vunpack.c.h.b16 %v2040
        %v2276 = vunpack.c.l.b16 %v2041
        %v2277 = vunpack.c.l.b16 %v2042
        %v2278 = vunpack.c.h.b16 %v2042
        %v2279 = vunpack.c.l.b16 %v2043
        %v2280 = vunpack.c.l.b16 %v2044
        %v2281 = vunpack.c.h.b16 %v2044
        %v2282 = vunpack.c.l.b16 %v2045
        %v2283 = vunpack.c.l.b16 %v2046
        %v2284 = vunpack.c.h.b16 %v2046
        %v2285 = vunpack.c.l.b16 %v2047
        %v2286 = vunpack.c.l.b16 %v2048
        %v2287 = vunpack.c.h.b16 %v2048
        %v2288 = vunpack.c.l.b16 %v2049
        %v2289 = vunpack.c.l.b16 %v2050
        %v2290 = vunpack.c.h.b16 %v2050
        %v2291 = vunpack.c.l.b16 %v2051
        %v2292 = vunpack.c.l.b16 %v2052
        %v2293 = vunpack.c.h.b16 %v2052
        %v2294 = vunpack.c.l.b16 %v2053
        %v2295 = vunpack.c.l.b16 %v2054
        %v2296 = vunpack.c.h.b16 %v2054
        %v2297 = vunpack.c.l.b16 %v2055
        %v2298 = vunpack.c.l.b16 %v2056
        %v2299 = vunpack.c.h.b16 %v2056
        %v2300 = vunpack.c.l.b16 %v2057
        %v2301 = vunpack.c.l.b16 %v2058
        %v2302 = vunpack.c.h.b16 %v2058
        %v2303 = vunpack.c.l.b16 %v2059
        %v2304 = vunpack.c.l.b16 %v2060
        %v2305 = vunpack.c.h.b16 %v2060
        %v2306 = vunpack.c.l.b16 %v2061
        %v2307 = vunpack.c.l.b16 %v2062
        %v2308 = vunpack.c.h.b16 %v2062
        %v2309 = vunpack.c.l.b16 %v2063
        %v2310 = vunpack.c.l.b16 %v2064
        %v2311 = vunpack.c.h.b16 %v2064
        %v2312 = vunpack.c.l.b16 %v2065
        %v2313 = vunpack.c.l.b16 %v2066
        %v2314 = vunpack.c.h.b16 %v2066
        %v2315 = vunpack.c.l.b16 %v2067
        %v2316 = vunpack.c.l.b16 %v2068
        %v2317 = vunpack.c.h.b16 %v2068
        %v2318 = vunpack.c.l.b16 %v2069
        %v2319 = vunpack.c.l.b16 %v2070
        %v2320 = vunpack.c.h.b16 %v2070
        %v2321 = vunpack.c.l.b16 %v2071
        %v2322 = vunpack.c.l.b16 %v2072
        %v2323 = vunpack.c.h.b16 %v2072
        %v2324 = vunpack.c.l.b16 %v2073
        %v2325 = vunpack.c.l.b16 %v2074
        %v2326 = vunpack.c.h.b16 %v2074
        %v2327 = vunpack.c.l.b16 %v2075
        %v2328 = vunpack.c.l.b16 %v2076
        %v2329 = vunpack.c.h.b16 %v2076
        %v2330 = vunpack.c.l.b16 %v2077
        %v2331 = vunpack.c.l.b16 %v2078
        %v2332 = vunpack.c.h.b16 %v2078
        %v2333 = vunpack.c.l.b16 %v2079
        %v2334 = vunpack.c.l.b16 %v2080
        %v2335 = vunpack.c.h.b16 %v2080
        %v2336 = vunpack.c.l.b16 %v2081
        %v2337 = vunpack.c.l.b16 %v2082
        %v2338 = vunpack.c.h.b16 %v2082
        %v2339 = vunpack.c.l.b16 %v2083
        %v2340 = vunpack.c.l.b16 %v2084
        %v2341 = vunpack.c.h.b16 %v2084
        %v2342 = vunpack.c.l.b16 %v2085
        %v2343 = vunpack.c.l.b16 %v2086
        %v2344 = vunpack.c.h.b16 %v2086
        %v2345 = vunpack.c.l.b16 %v2087
        %v2346 = vpack.c.b16 %v2205, %v2202
        %v2347 = vpack.c.b16 %v2206, %v2203
        %v2348 = vpack.c.b16 %v2207, %v2204
        %v2349 = vpack.c.b16 %v2211, %v2208
        %v2350 = vpack.c.b16 %v2212, %v2209
        %v2351 = vpack.c.b16 %v2213, %v2210
        %v2352 = vpack.c.b16 %v2217, %v2214
        %v2353 = vpack.c.b16 %v2218, %v2215
        %v2354 = vpack.c.b16 %v2219, %v2216
        %v2355 = vpack.c.b16 %v2223, %v2220
        %v2356 = vpack.c.b16 %v2224, %v2221
        %v2357 = vpack.c.b16 %v2225, %v2222
        %v2358 = vpack.c.b16 %v2229, %v2226
        %v2359 = vpack.c.b16 %v2230, %v2227
        %v2360 = vpack.c.b16 %v2231, %v2228
        %v2361 = vpack.c.b16 %v2235, %v2232
        %v2362 = vpack.c.b16 %v2236, %v2233
        %v2363 = vpack.c.b16 %v2237, %v2234
        %v2364 = vpack.c.b16 %v2241, %v2238
        %v2365 = vpack.c.b16 %v2242, %v2239
        %v2366 = vpack.c.b16 %v2243, %v2240
        %v2367 = vpack.c.b16 %v2247, %v2244
        %v2368 = vpack.c.b16 %v2248, %v2245
        %v2369 = vpack.c.b16 %v2249, %v2246
        %v2370 = vpack.c.b16 %v2253, %v2250
        %v2371 = vpack.c.b16 %v2254, %v2251
        %v2372 = vpack.c.b16 %v2255, %v2252
        %v2373 = vpack.c.b16 %v2259, %v2256
        %v2374 = vpack.c.b16 %v2260, %v2257
        %v2375 = vpack.c.b16 %v2261, %v2258
        %v2376 = vpack.c.b16 %v2265, %v2262
        %v2377 = vpack.c.b16 %v2266, %v2263
        %v2378 = vpack.c.b16 %v2267, %v2264
        %v2379 = vpack.c.b16 %v2271, %v2268
        %v2380 = vpack.c.b16 %v2272, %v2269
        %v2381 = vpack.c.b16 %v2273, %v2270
        %v2382 = vpack.c.b16 %v2277, %v2274
        %v2383 = vpack.c.b16 %v2278, %v2275
        %v2384 = vpack.c.b16 %v2279, %v2276
        %v2385 = vpack.c.b16 %v2283, %v2280
        %v2386 = vpack.c.b16 %v2284, %v2281
        %v2387 = vpack.c.b16 %v2285, %v2282
        %v2388 = vpack.c.b16 %v2289, %v2286
        %v2389 = vpack.c.b16 %v2290, %v2287
        %v2390 = vpack.c.b16 %v2291, %v2288
        %v2391 = vpack.c.b16 %v2295, %v2292
        %v2392 = vpack.c.b16 %v2296, %v2293
        %v2393 = vpack.c.b16 %v2297, %v2294
        %v2394 = vpack.c.b16 %v2301, %v2298
        %v2395 = vpack.c.b16 %v2302, %v2299
        %v2396 = vpack.c.b16 %v2303, %v2300
        %v2397 = vpack.c.b16 %v2307, %v2304
        %v2398 = vpack.c.b16 %v2308, %v2305
        %v2399 = vpack.c.b16 %v2309, %v2306
        %v2400 = vpack.c.b16 %v2313, %v2310
        %v2401 = vpack.c.b16 %v2314, %v2311
        %v2402 = vpack.c.b16 %v2315, %v2312
        %v2403 = vpack.c.b16 %v2319, %v2316
        %v2404 = vpack.c.b16 %v2320, %v2317
        %v2405 = vpack.c.b16 %v2321, %v2318
        %v2406 = vpack.c.b16 %v2325, %v2322
        %v2407 = vpack.c.b16 %v2326, %v2323
        %v2408 = vpack.c.b16 %v2327, %v2324
        %v2409 = vpack.c.b16 %v2331, %v2328
        %v2410 = vpack.c.b16 %v2332, %v2329
        %v2411 = vpack.c.b16 %v2333, %v2330
        %v2412 = vpack.c.b16 %v2337, %v2334
        %v2413 = vpack.c.b16 %v2338, %v2335
        %v2414 = vpack.c.b16 %v2339, %v2336
        %v2415 = vpack.c.b16 %v2343, %v2340
        %v2416 = vpack.c.b16 %v2344, %v2341
        %v2417 = vpack.c.b16 %v2345, %v2342
        %2490 = vmatprep.subr.bf16.mxu0 %v2347
        %2491 = vmatpush1.bf16.msra.mxu0 %v2346
        %2492 = vmatprep.subr.bf16.mxu0 %v2350
        %2493 = vmatpush1.bf16.msra.mxu0 %v2349
        %2494 = vmatprep.subr.bf16.mxu0 %v2353
        %2495 = vmatpush1.bf16.msra.mxu0 %v2352
        %2496 = vmatprep.subr.bf16.mxu0 %v2356
        %2497 = vmatpush1.bf16.msra.mxu0 %v2355
        %2498 = vmatprep.subr.bf16.mxu0 %v2359
        %2499 = vmatpush1.bf16.msra.mxu0 %v2358
        %2500 = vmatprep.subr.bf16.mxu0 %v2362
        %2501 = vmatpush1.bf16.msra.mxu0 %v2361
        %2502 = vmatprep.subr.bf16.mxu0 %v2365
        %2503 = vmatpush1.bf16.msra.mxu0 %v2364
        %2504 = vmatprep.subr.bf16.mxu0 %v2368
        %2505 = vmatpush1.bf16.msra.mxu0 %v2367
        %2506 = vmatprep.subr.bf16.mxu0 %v2371
        %2507 = vmatpush1.bf16.msra.mxu0 %v2370
        %2508 = vmatprep.subr.bf16.mxu0 %v2374
        %2509 = vmatpush1.bf16.msra.mxu0 %v2373
        %2510 = vmatprep.subr.bf16.mxu0 %v2377
        %2511 = vmatpush1.bf16.msra.mxu0 %v2376
        %2512 = vmatprep.subr.bf16.mxu0 %v2380
        %2513 = vmatpush1.bf16.msra.mxu0 %v2379
        %2514 = vmatprep.subr.bf16.mxu0 %v2383
        %2515 = vmatpush1.bf16.msra.mxu0 %v2382
        %2516 = vmatprep.subr.bf16.mxu0 %v2386
        %2517 = vmatpush1.bf16.msra.mxu0 %v2385
        %2518 = vmatprep.subr.bf16.mxu0 %v2389
        %2519 = vmatpush1.bf16.msra.mxu0 %v2388
        %2520 = vmatprep.subr.bf16.mxu0 %v2392
        %2521 = vmatpush1.bf16.msra.mxu0 %v2391
        %2522 = vmatprep.mubr.bf16.mxu0 %v1989
        %2523 = vmatmul.mubr.bf16.gmra.mrb[0].mxu0 %v1988
        %v2524 = vpop.f32.mrb[0].mxu0
        %v2525 = vadd.f32 %v2094, %v2524
        %v2526 = vpop.f32.mrb[0].mxu0
        %v2527 = vadd.f32 %v2098, %v2526
        %v2528 = vpop.f32.mrb[0].mxu0
        %v2529 = vpop.f32.mrb[0].mxu0
        %2530 = vdwg.mxu0
        %2531 = vmatprep.subr.bf16.mxu0 %v2395
        %2532 = vmatpush1.bf16.msra.mxu0 %v2394
        %2533 = vmatprep.subr.bf16.mxu0 %v2398
        %2534 = vmatpush1.bf16.msra.mxu0 %v2397
        %2535 = vmatprep.subr.bf16.mxu0 %v2401
        %2536 = vmatpush1.bf16.msra.mxu0 %v2400
        %2537 = vmatprep.subr.bf16.mxu0 %v2404
        %2538 = vmatpush1.bf16.msra.mxu0 %v2403
        %2539 = vmatprep.subr.bf16.mxu0 %v2407
        %2540 = vmatpush1.bf16.msra.mxu0 %v2406
        %2541 = vmatprep.subr.bf16.mxu0 %v2410
        %2542 = vmatpush1.bf16.msra.mxu0 %v2409
        %2543 = vmatprep.subr.bf16.mxu0 %v2413
        %2544 = vmatpush1.bf16.msra.mxu0 %v2412
        %2545 = vmatprep.subr.bf16.mxu0 %v2416
        %2546 = vmatpush1.bf16.msra.mxu0 %v2415
        %2547 = vmatprep.subr.bf16.mxu0 0
        %2548 = vmatpush1.bf16.msra.mxu0 0
        %2549 = vmatprep.subr.bf16.mxu0 0
        %2550 = vmatpush1.bf16.msra.mxu0 0
        %2551 = vmatprep.subr.bf16.mxu0 0
        %2552 = vmatpush1.bf16.msra.mxu0 0
        %2553 = vmatprep.subr.bf16.mxu0 0
        %2554 = vmatpush1.bf16.msra.mxu0 0
        %2555 = vmatprep.subr.bf16.mxu0 0
        %2556 = vmatpush1.bf16.msra.mxu0 0
        %2557 = vmatprep.subr.bf16.mxu0 0
        %2558 = vmatpush1.bf16.msra.mxu0 0
        %2559 = vmatprep.subr.bf16.mxu0 0
        %2560 = vmatpush1.bf16.msra.mxu0 0
        %2561 = vmatprep.subr.bf16.mxu0 0
        %2562 = vmatpush1.bf16.msra.mxu0 0
        %2563 = vmatprep.mubr.bf16.mxu0 0
        %2564 = vmatmul.mubr.bf16.gmra.mrb[0].mxu0 %v1990
        %v2565 = vpop.f32.mrb[0].mxu0
        %v2566 = vadd.f32 %v2525, %v2565
        %v2567 = vpop.f32.mrb[0].mxu0
        %v2568 = vadd.f32 %v2527, %v2567
        %v2569 = vpop.f32.mrb[0].mxu0
        %v2570 = vpop.f32.mrb[0].mxu0
        %2571 = vdwg.mxu0
        %2572 = vmatprep.subr.bf16.mxu0 0
        %2573 = vmatpush1.bf16.msra.mxu0 %v2348
        %2574 = vmatprep.subr.bf16.mxu0 0
        %2575 = vmatpush1.bf16.msra.mxu0 %v2351
        %2576 = vmatprep.subr.bf16.mxu0 0
        %2577 = vmatpush1.bf16.msra.mxu0 %v2354
        %2578 = vmatprep.subr.bf16.mxu0 0
        %2579 = vmatpush1.bf16.msra.mxu0 %v2357
        %2580 = vmatprep.subr.bf16.mxu0 0
        %2581 = vmatpush1.bf16.msra.mxu0 %v2360
        %2582 = vmatprep.subr.bf16.mxu0 0
        %2583 = vmatpush1.bf16.msra.mxu0 %v2363
        %2584 = vmatprep.subr.bf16.mxu0 0
        %2585 = vmatpush1.bf16.msra.mxu0 %v2366
        %2586 = vmatprep.subr.bf16.mxu0 0
        %2587 = vmatpush1.bf16.msra.mxu0 %v2369
        %2588 = vmatprep.subr.bf16.mxu0 0
        %2589 = vmatpush1.bf16.msra.mxu0 %v2372
        %2590 = vmatprep.subr.bf16.mxu0 0
        %2591 = vmatpush1.bf16.msra.mxu0 %v2375
        %2592 = vmatprep.subr.bf16.mxu0 0
        %2593 = vmatpush1.bf16.msra.mxu0 %v2378
        %2594 = vmatprep.subr.bf16.mxu0 0
        %2595 = vmatpush1.bf16.msra.mxu0 %v2381
        %2596 = vmatprep.subr.bf16.mxu0 0
        %2597 = vmatpush1.bf16.msra.mxu0 %v2384
        %2598 = vmatprep.subr.bf16.mxu0 0
        %2599 = vmatpush1.bf16.msra.mxu0 %v2387
        %2600 = vmatprep.subr.bf16.mxu0 0
        %2601 = vmatpush1.bf16.msra.mxu0 %v2390
        %2602 = vmatprep.subr.bf16.mxu0 0
        %2603 = vmatpush1.bf16.msra.mxu0 %v2393
        %2604 = vmatprep.mubr.bf16.mxu0 %v1989
        %2605 = vmatmul.mubr.bf16.gmra.mrb[0].mxu0 %v1988
        %v2606 = vpop.f32.mrb[0].mxu0
        %v2607 = vadd.f32 %v2102, %v2606
        %v2608 = vpop.f32.mrb[0].mxu0
        %v2609 = vpop.f32.mrb[0].mxu0
        %v2610 = vpop.f32.mrb[0].mxu0
        %2611 = vdwg.mxu0
        %2612 = vmatprep.subr.bf16.mxu0 0
        %2613 = vmatpush1.bf16.msra.mxu0 %v2396
        %2614 = vmatprep.subr.bf16.mxu0 0
        %2615 = vmatpush1.bf16.msra.mxu0 %v2399
        %2616 = vmatprep.subr.bf16.mxu0 0
        %2617 = vmatpush1.bf16.msra.mxu0 %v2402
        %2618 = vmatprep.subr.bf16.mxu0 0
        %2619 = vmatpush1.bf16.msra.mxu0 %v2405
        %2620 = vmatprep.subr.bf16.mxu0 0
        %2621 = vmatpush1.bf16.msra.mxu0 %v2408
        %2622 = vmatprep.subr.bf16.mxu0 0
        %2623 = vmatpush1.bf16.msra.mxu0 %v2411
        %2624 = vmatprep.subr.bf16.mxu0 0
        %2625 = vmatpush1.bf16.msra.mxu0 %v2414
        %2626 = vmatprep.subr.bf16.mxu0 0
        %2627 = vmatpush1.bf16.msra.mxu0 %v2417
        %2628 = vmatprep.subr.bf16.mxu0 0
        %2629 = vmatpush1.bf16.msra.mxu0 0
        %2630 = vmatprep.subr.bf16.mxu0 0
        %2631 = vmatpush1.bf16.msra.mxu0 0
        %2632 = vmatprep.subr.bf16.mxu0 0
        %2633 = vmatpush1.bf16.msra.mxu0 0
        %2634 = vmatprep.subr.bf16.mxu0 0
        %2635 = vmatpush1.bf16.msra.mxu0 0
        %2636 = vmatprep.subr.bf16.mxu0 0
        %2637 = vmatpush1.bf16.msra.mxu0 0
        %2638 = vmatprep.subr.bf16.mxu0 0
        %2639 = vmatpush1.bf16.msra.mxu0 0
        %2640 = vmatprep.subr.bf16.mxu0 0
        %2641 = vmatpush1.bf16.msra.mxu0 0
        %2642 = vmatprep.subr.bf16.mxu0 0
        %2643 = vmatpush1.bf16.msra.mxu0 0
        %2644 = vmatprep.mubr.bf16.mxu0 0
        %2645 = vmatmul.mubr.bf16.gmra.mrb[0].mxu0 %v1990
        %v2646 = vpop.f32.mrb[0].mxu0
        %v2647 = vadd.f32 %v2607, %v2646
        %v2648 = vpop.f32.mrb[0].mxu0
        %v2649 = vpop.f32.mrb[0].mxu0
        %v2650 = vpop.f32.mrb[0].mxu0
        %2651 = vdwg.mxu0
        %v2652 = vmax.f32 %v2566, 0.0
        %v2653 = vmax.f32 %v2568, 0.0
        %v2654 = vmax.f32 %v2647, 0.0
        %v2655 = vpack.c.bf16 %v2652, %v2652
        %v2656 = vpack.c.bf16 %v2653, %v2653
        %v2657 = vpack.c.bf16 %v2654, %v2654
        %s2658 = scalar_lea.vmem [#allocation9], 1728
        %v2659 = vld [vmem:[%s2658] sm:$0xff]
        %v2660 = vld [vmem:[%s2658 + $0x8] sm:$0xf]
        %v2661 = vld [vmem:[%s2658 + $0xc] sm:$0xff]
        %v2662 = vld [vmem:[%s2658 + $0x14] sm:$0xf]
        %v2663 = vld [vmem:[%s2658 + $0x18] sm:$0xff]
        %v2664 = vld [vmem:[%s2658 + $0x20] sm:$0xf]
        %v2665 = vld [vmem:[%s2658 + $0x24] sm:$0xff]
        %v2666 = vld [vmem:[%s2658 + $0x2c] sm:$0xf]
        %v2667 = vld [vmem:[%s2658 + $0x30] sm:$0xff]
        %v2668 = vld [vmem:[%s2658 + $0x38] sm:$0xf]
        %v2669 = vld [vmem:[%s2658 + $0x3c] sm:$0xff]
        %v2670 = vld [vmem:[%s2658 + $0x44] sm:$0xf]
        %v2671 = vld [vmem:[%s2658 + $0x48] sm:$0xff]
        %v2672 = vld [vmem:[%s2658 + $0x50] sm:$0xf]
        %v2673 = vld [vmem:[%s2658 + $0x54] sm:$0xff]
        %v2674 = vld [vmem:[%s2658 + $0x5c] sm:$0xf]
        %v2675 = vld [vmem:[%s2658 + $0x60] sm:$0xff]
        %v2676 = vld [vmem:[%s2658 + $0x68] sm:$0xf]
        %v2677 = vld [vmem:[%s2658 + $0x6c] sm:$0xff]
        %v2678 = vld [vmem:[%s2658 + $0x74] sm:$0xf]
        %v2679 = vld [vmem:[%s2658 + $0x78] sm:$0xff]
        %v2680 = vld [vmem:[%s2658 + $0x80] sm:$0xf]
        %v2681 = vld [vmem:[%s2658 + $0x84] sm:$0xff]
        %v2682 = vld [vmem:[%s2658 + $0x8c] sm:$0xf]
        %v2683 = vld [vmem:[%s2658 + $0x90] sm:$0xff]
        %v2684 = vld [vmem:[%s2658 + $0x98] sm:$0xf]
        %v2685 = vld [vmem:[%s2658 + $0x9c] sm:$0xff]
        %v2686 = vld [vmem:[%s2658 + $0xa4] sm:$0xf]
        %v2687 = vld [vmem:[%s2658 + $0xa8] sm:$0xff]
        %v2688 = vld [vmem:[%s2658 + $0xb0] sm:$0xf]
        %v2689 = vld [vmem:[%s2658 + $0xb4] sm:$0xff]
        %v2690 = vld [vmem:[%s2658 + $0xbc] sm:$0xf]
        %v2691 = vld [vmem:[%s2658 + $0xc0] sm:$0xff]
        %v2692 = vld [vmem:[%s2658 + $0xc8] sm:$0xf]
        %v2693 = vld [vmem:[%s2658 + $0xcc] sm:$0xff]
        %v2694 = vld [vmem:[%s2658 + $0xd4] sm:$0xf]
        %v2695 = vld [vmem:[%s2658 + $0xd8] sm:$0xff]
        %v2696 = vld [vmem:[%s2658 + $0xe0] sm:$0xf]
        %v2697 = vld [vmem:[%s2658 + $0xe4] sm:$0xff]
        %v2698 = vld [vmem:[%s2658 + $0xec] sm:$0xf]
        %v2699 = vld [vmem:[%s2658 + $0xf0] sm:$0xff]
        %v2700 = vld [vmem:[%s2658 + $0xf8] sm:$0xf]
        %v2701 = vld [vmem:[%s2658 + $0xfc] sm:$0xff]
        %v2702 = vld [vmem:[%s2658 + $0x104] sm:$0xf]
        %v2703 = vld [vmem:[%s2658 + $0x108] sm:$0xff]
        %v2704 = vld [vmem:[%s2658 + $0x110] sm:$0xf]
        %v2705 = vld [vmem:[%s2658 + $0x114] sm:$0xff]
        %v2706 = vld [vmem:[%s2658 + $0x11c] sm:$0xf]
        %v2707 = vld [vmem:[%s2658 + $0x120] sm:$0xff]
        %v2708 = vld [vmem:[%s2658 + $0x128] sm:$0xf]
        %v2709 = vld [vmem:[%s2658 + $0x12c] sm:$0xff]
        %v2710 = vld [vmem:[%s2658 + $0x134] sm:$0xf]
        %v2711 = vld [vmem:[%s2658 + $0x138] sm:$0xff]
        %v2712 = vld [vmem:[%s2658 + $0x140] sm:$0xf]
        %v2713 = vld [vmem:[%s2658 + $0x144] sm:$0xff]
        %v2714 = vld [vmem:[%s2658 + $0x14c] sm:$0xf]
        %v2715 = vld [vmem:[%s2658 + $0x150] sm:$0xff]
        %v2716 = vld [vmem:[%s2658 + $0x158] sm:$0xf]
        %v2717 = vld [vmem:[%s2658 + $0x15c] sm:$0xff]
        %v2718 = vld [vmem:[%s2658 + $0x164] sm:$0xf]
        %v2719 = vld [vmem:[%s2658 + $0x168] sm:$0xff]
        %v2720 = vld [vmem:[%s2658 + $0x170] sm:$0xf]
        %v2721 = vld [vmem:[%s2658 + $0x174] sm:$0xff]
        %v2722 = vld [vmem:[%s2658 + $0x17c] sm:$0xf]
        %v2723 = vld [vmem:[%s2658 + $0x180] sm:$0xff]
        %v2724 = vld [vmem:[%s2658 + $0x188] sm:$0xf]
        %v2725 = vld [vmem:[%s2658 + $0x18c] sm:$0xff]
        %v2726 = vld [vmem:[%s2658 + $0x194] sm:$0xf]
        %v2727 = vld [vmem:[%s2658 + $0x198] sm:$0xff]
        %v2728 = vld [vmem:[%s2658 + $0x1a0] sm:$0xf]
        %v2729 = vld [vmem:[%s2658 + $0x1a4] sm:$0xff]
        %v2730 = vld [vmem:[%s2658 + $0x1ac] sm:$0xf]
        %v2731 = vld [vmem:[%s2658 + $0x1b0] sm:$0xff]
        %v2732 = vld [vmem:[%s2658 + $0x1b8] sm:$0xf]
        %v2733 = vld [vmem:[%s2658 + $0x1bc] sm:$0xff]
        %v2734 = vld [vmem:[%s2658 + $0x1c4] sm:$0xf]
        %v2735 = vld [vmem:[%s2658 + $0x1c8] sm:$0xff]
        %v2736 = vld [vmem:[%s2658 + $0x1d0] sm:$0xf]
        %v2737 = vld [vmem:[%s2658 + $0x1d4] sm:$0xff]
        %v2738 = vld [vmem:[%s2658 + $0x1dc] sm:$0xf]
        %v2739 = vld [vmem:[%s2658 + $0x1e0] sm:$0xff]
        %v2740 = vld [vmem:[%s2658 + $0x1e8] sm:$0xf]
        %v2741 = vld [vmem:[%s2658 + $0x1ec] sm:$0xff]
        %v2742 = vld [vmem:[%s2658 + $0x1f4] sm:$0xf]
        %v2743 = vld [vmem:[%s2658 + $0x1f8] sm:$0xff]
        %v2744 = vld [vmem:[%s2658 + $0x200] sm:$0xf]
        %v2745 = vld [vmem:[%s2658 + $0x204] sm:$0xff]
        %v2746 = vld [vmem:[%s2658 + $0x20c] sm:$0xf]
        %v2747 = vld [vmem:[%s2658 + $0x210] sm:$0xff]
        %v2748 = vld [vmem:[%s2658 + $0x218] sm:$0xf]
        %v2749 = vld [vmem:[%s2658 + $0x21c] sm:$0xff]
        %v2750 = vld [vmem:[%s2658 + $0x224] sm:$0xf]
        %v2751 = vld [vmem:[%s2658 + $0x228] sm:$0xff]
        %v2752 = vld [vmem:[%s2658 + $0x230] sm:$0xf]
        %v2753 = vld [vmem:[%s2658 + $0x234] sm:$0xff]
        %v2754 = vld [vmem:[%s2658 + $0x23c] sm:$0xf]
        %s2755 = scalar_lea.vmem [#allocation11], 9
        %v2756 = vld [vmem:[%s2755] sm:$0x7]
        %v2758 = vlaneseq
        %v2759 = vshrl.u32 %v2758, 7
        %v2760 = vsub.s32 0, %v2759
        %v2761 = vrot.slane %v2756, %v2760
        %v2762 = vlaneseq
        %v2763 = vshrl.u32 %v2762, 7
        %v2764 = vsub.s32 1, %v2763
        %v2765 = vrot.slane %v2756, %v2764
        %v2766 = vlaneseq
        %v2767 = vshrl.u32 %v2766, 7
        %v2768 = vsub.s32 2, %v2767
        %v2769 = vrot.slane %v2756, %v2768
        %v2869 = vunpack.c.l.b16 %v2659
        %v2870 = vunpack.c.h.b16 %v2659
        %v2871 = vunpack.c.l.b16 %v2660
        %v2872 = vunpack.c.l.b16 %v2661
        %v2873 = vunpack.c.h.b16 %v2661
        %v2874 = vunpack.c.l.b16 %v2662
        %v2875 = vunpack.c.l.b16 %v2663
        %v2876 = vunpack.c.h.b16 %v2663
        %v2877 = vunpack.c.l.b16 %v2664
        %v2878 = vunpack.c.l.b16 %v2665
        %v2879 = vunpack.c.h.b16 %v2665
        %v2880 = vunpack.c.l.b16 %v2666
        %v2881 = vunpack.c.l.b16 %v2667
        %v2882 = vunpack.c.h.b16 %v2667
        %v2883 = vunpack.c.l.b16 %v2668
        %v2884 = vunpack.c.l.b16 %v2669
        %v2885 = vunpack.c.h.b16 %v2669
        %v2886 = vunpack.c.l.b16 %v2670
        %v2887 = vunpack.c.l.b16 %v2671
        %v2888 = vunpack.c.h.b16 %v2671
        %v2889 = vunpack.c.l.b16 %v2672
        %v2890 = vunpack.c.l.b16 %v2673
        %v2891 = vunpack.c.h.b16 %v2673
        %v2892 = vunpack.c.l.b16 %v2674
        %v2893 = vunpack.c.l.b16 %v2675
        %v2894 = vunpack.c.h.b16 %v2675
        %v2895 = vunpack.c.l.b16 %v2676
        %v2896 = vunpack.c.l.b16 %v2677
        %v2897 = vunpack.c.h.b16 %v2677
        %v2898 = vunpack.c.l.b16 %v2678
        %v2899 = vunpack.c.l.b16 %v2679
        %v2900 = vunpack.c.h.b16 %v2679
        %v2901 = vunpack.c.l.b16 %v2680
        %v2902 = vunpack.c.l.b16 %v2681
        %v2903 = vunpack.c.h.b16 %v2681
        %v2904 = vunpack.c.l.b16 %v2682
        %v2905 = vunpack.c.l.b16 %v2683
        %v2906 = vunpack.c.h.b16 %v2683
        %v2907 = vunpack.c.l.b16 %v2684
        %v2908 = vunpack.c.l.b16 %v2685
        %v2909 = vunpack.c.h.b16 %v2685
        %v2910 = vunpack.c.l.b16 %v2686
        %v2911 = vunpack.c.l.b16 %v2687
        %v2912 = vunpack.c.h.b16 %v2687
        %v2913 = vunpack.c.l.b16 %v2688
        %v2914 = vunpack.c.l.b16 %v2689
        %v2915 = vunpack.c.h.b16 %v2689
        %v2916 = vunpack.c.l.b16 %v2690
        %v2917 = vunpack.c.l.b16 %v2691
        %v2918 = vunpack.c.h.b16 %v2691
        %v2919 = vunpack.c.l.b16 %v2692
        %v2920 = vunpack.c.l.b16 %v2693
        %v2921 = vunpack.c.h.b16 %v2693
        %v2922 = vunpack.c.l.b16 %v2694
        %v2923 = vunpack.c.l.b16 %v2695
        %v2924 = vunpack.c.h.b16 %v2695
        %v2925 = vunpack.c.l.b16 %v2696
        %v2926 = vunpack.c.l.b16 %v2697
        %v2927 = vunpack.c.h.b16 %v2697
        %v2928 = vunpack.c.l.b16 %v2698
        %v2929 = vunpack.c.l.b16 %v2699
        %v2930 = vunpack.c.h.b16 %v2699
        %v2931 = vunpack.c.l.b16 %v2700
        %v2932 = vunpack.c.l.b16 %v2701
        %v2933 = vunpack.c.h.b16 %v2701
        %v2934 = vunpack.c.l.b16 %v2702
        %v2935 = vunpack.c.l.b16 %v2703
        %v2936 = vunpack.c.h.b16 %v2703
        %v2937 = vunpack.c.l.b16 %v2704
        %v2938 = vunpack.c.l.b16 %v2705
        %v2939 = vunpack.c.h.b16 %v2705
        %v2940 = vunpack.c.l.b16 %v2706
        %v2941 = vunpack.c.l.b16 %v2707
        %v2942 = vunpack.c.h.b16 %v2707
        %v2943 = vunpack.c.l.b16 %v2708
        %v2944 = vunpack.c.l.b16 %v2709
        %v2945 = vunpack.c.h.b16 %v2709
        %v2946 = vunpack.c.l.b16 %v2710
        %v2947 = vunpack.c.l.b16 %v2711
        %v2948 = vunpack.c.h.b16 %v2711
        %v2949 = vunpack.c.l.b16 %v2712
        %v2950 = vunpack.c.l.b16 %v2713
        %v2951 = vunpack.c.h.b16 %v2713
        %v2952 = vunpack.c.l.b16 %v2714
        %v2953 = vunpack.c.l.b16 %v2715
        %v2954 = vunpack.c.h.b16 %v2715
        %v2955 = vunpack.c.l.b16 %v2716
        %v2956 = vunpack.c.l.b16 %v2717
        %v2957 = vunpack.c.h.b16 %v2717
        %v2958 = vunpack.c.l.b16 %v2718
        %v2959 = vunpack.c.l.b16 %v2719
        %v2960 = vunpack.c.h.b16 %v2719
        %v2961 = vunpack.c.l.b16 %v2720
        %v2962 = vunpack.c.l.b16 %v2721
        %v2963 = vunpack.c.h.b16 %v2721
        %v2964 = vunpack.c.l.b16 %v2722
        %v2965 = vunpack.c.l.b16 %v2723
        %v2966 = vunpack.c.h.b16 %v2723
        %v2967 = vunpack.c.l.b16 %v2724
        %v2968 = vunpack.c.l.b16 %v2725
        %v2969 = vunpack.c.h.b16 %v2725
        %v2970 = vunpack.c.l.b16 %v2726
        %v2971 = vunpack.c.l.b16 %v2727
        %v2972 = vunpack.c.h.b16 %v2727
        %v2973 = vunpack.c.l.b16 %v2728
        %v2974 = vunpack.c.l.b16 %v2729
        %v2975 = vunpack.c.h.b16 %v2729
        %v2976 = vunpack.c.l.b16 %v2730
        %v2977 = vunpack.c.l.b16 %v2731
        %v2978 = vunpack.c.h.b16 %v2731
        %v2979 = vunpack.c.l.b16 %v2732
        %v2980 = vunpack.c.l.b16 %v2733
        %v2981 = vunpack.c.h.b16 %v2733
        %v2982 = vunpack.c.l.b16 %v2734
        %v2983 = vunpack.c.l.b16 %v2735
        %v2984 = vunpack.c.h.b16 %v2735
        %v2985 = vunpack.c.l.b16 %v2736
        %v2986 = vunpack.c.l.b16 %v2737
        %v2987 = vunpack.c.h.b16 %v2737
        %v2988 = vunpack.c.l.b16 %v2738
        %v2989 = vunpack.c.l.b16 %v2739
        %v2990 = vunpack.c.h.b16 %v2739
        %v2991 = vunpack.c.l.b16 %v2740
        %v2992 = vunpack.c.l.b16 %v2741
        %v2993 = vunpack.c.h.b16 %v2741
        %v2994 = vunpack.c.l.b16 %v2742
        %v2995 = vunpack.c.l.b16 %v2743
        %v2996 = vunpack.c.h.b16 %v2743
        %v2997 = vunpack.c.l.b16 %v2744
        %v2998 = vunpack.c.l.b16 %v2745
        %v2999 = vunpack.c.h.b16 %v2745
        %v3000 = vunpack.c.l.b16 %v2746
        %v3001 = vunpack.c.l.b16 %v2747
        %v3002 = vunpack.c.h.b16 %v2747
        %v3003 = vunpack.c.l.b16 %v2748
        %v3004 = vunpack.c.l.b16 %v2749
        %v3005 = vunpack.c.h.b16 %v2749
        %v3006 = vunpack.c.l.b16 %v2750
        %v3007 = vunpack.c.l.b16 %v2751
        %v3008 = vunpack.c.h.b16 %v2751
        %v3009 = vunpack.c.l.b16 %v2752
        %v3010 = vunpack.c.l.b16 %v2753
        %v3011 = vunpack.c.h.b16 %v2753
        %v3012 = vunpack.c.l.b16 %v2754
        %v3013 = vpack.c.b16 %v2872, %v2869
        %v3014 = vpack.c.b16 %v2873, %v2870
        %v3015 = vpack.c.b16 %v2874, %v2871
        %v3016 = vpack.c.b16 %v2878, %v2875
        %v3017 = vpack.c.b16 %v2879, %v2876
        %v3018 = vpack.c.b16 %v2880, %v2877
        %v3019 = vpack.c.b16 %v2884, %v2881
        %v3020 = vpack.c.b16 %v2885, %v2882
        %v3021 = vpack.c.b16 %v2886, %v2883
        %v3022 = vpack.c.b16 %v2890, %v2887
        %v3023 = vpack.c.b16 %v2891, %v2888
        %v3024 = vpack.c.b16 %v2892, %v2889
        %v3025 = vpack.c.b16 %v2896, %v2893
        %v3026 = vpack.c.b16 %v2897, %v2894
        %v3027 = vpack.c.b16 %v2898, %v2895
        %v3028 = vpack.c.b16 %v2902, %v2899
        %v3029 = vpack.c.b16 %v2903, %v2900
        %v3030 = vpack.c.b16 %v2904, %v2901
        %v3031 = vpack.c.b16 %v2908, %v2905
        %v3032 = vpack.c.b16 %v2909, %v2906
        %v3033 = vpack.c.b16 %v2910, %v2907
        %v3034 = vpack.c.b16 %v2914, %v2911
        %v3035 = vpack.c.b16 %v2915, %v2912
        %v3036 = vpack.c.b16 %v2916, %v2913
        %v3037 = vpack.c.b16 %v2920, %v2917
        %v3038 = vpack.c.b16 %v2921, %v2918
        %v3039 = vpack.c.b16 %v2922, %v2919
        %v3040 = vpack.c.b16 %v2926, %v2923
        %v3041 = vpack.c.b16 %v2927, %v2924
        %v3042 = vpack.c.b16 %v2928, %v2925
        %v3043 = vpack.c.b16 %v2932, %v2929
        %v3044 = vpack.c.b16 %v2933, %v2930
        %v3045 = vpack.c.b16 %v2934, %v2931
        %v3046 = vpack.c.b16 %v2938, %v2935
        %v3047 = vpack.c.b16 %v2939, %v2936
        %v3048 = vpack.c.b16 %v2940, %v2937
        %v3049 = vpack.c.b16 %v2944, %v2941
        %v3050 = vpack.c.b16 %v2945, %v2942
        %v3051 = vpack.c.b16 %v2946, %v2943
        %v3052 = vpack.c.b16 %v2950, %v2947
        %v3053 = vpack.c.b16 %v2951, %v2948
        %v3054 = vpack.c.b16 %v2952, %v2949
        %v3055 = vpack.c.b16 %v2956, %v2953
        %v3056 = vpack.c.b16 %v2957, %v2954
        %v3057 = vpack.c.b16 %v2958, %v2955
        %v3058 = vpack.c.b16 %v2962, %v2959
        %v3059 = vpack.c.b16 %v2963, %v2960
        %v3060 = vpack.c.b16 %v2964, %v2961
        %v3061 = vpack.c.b16 %v2968, %v2965
        %v3062 = vpack.c.b16 %v2969, %v2966
        %v3063 = vpack.c.b16 %v2970, %v2967
        %v3064 = vpack.c.b16 %v2974, %v2971
        %v3065 = vpack.c.b16 %v2975, %v2972
        %v3066 = vpack.c.b16 %v2976, %v2973
        %v3067 = vpack.c.b16 %v2980, %v2977
        %v3068 = vpack.c.b16 %v2981, %v2978
        %v3069 = vpack.c.b16 %v2982, %v2979
        %v3070 = vpack.c.b16 %v2986, %v2983
        %v3071 = vpack.c.b16 %v2987, %v2984
        %v3072 = vpack.c.b16 %v2988, %v2985
        %v3073 = vpack.c.b16 %v2992, %v2989
        %v3074 = vpack.c.b16 %v2993, %v2990
        %v3075 = vpack.c.b16 %v2994, %v2991
        %v3076 = vpack.c.b16 %v2998, %v2995
        %v3077 = vpack.c.b16 %v2999, %v2996
        %v3078 = vpack.c.b16 %v3000, %v2997
        %v3079 = vpack.c.b16 %v3004, %v3001
        %v3080 = vpack.c.b16 %v3005, %v3002
        %v3081 = vpack.c.b16 %v3006, %v3003
        %v3082 = vpack.c.b16 %v3010, %v3007
        %v3083 = vpack.c.b16 %v3011, %v3008
        %v3084 = vpack.c.b16 %v3012, %v3009
        %3157 = vmatprep.subr.bf16.mxu0 %v3014
        %3158 = vmatpush1.bf16.msra.mxu0 %v3013
        %3159 = vmatprep.subr.bf16.mxu0 %v3017
        %3160 = vmatpush1.bf16.msra.mxu0 %v3016
        %3161 = vmatprep.subr.bf16.mxu0 %v3020
        %3162 = vmatpush1.bf16.msra.mxu0 %v3019
        %3163 = vmatprep.subr.bf16.mxu0 %v3023
        %3164 = vmatpush1.bf16.msra.mxu0 %v3022
        %3165 = vmatprep.subr.bf16.mxu0 %v3026
        %3166 = vmatpush1.bf16.msra.mxu0 %v3025
        %3167 = vmatprep.subr.bf16.mxu0 %v3029
        %3168 = vmatpush1.bf16.msra.mxu0 %v3028
        %3169 = vmatprep.subr.bf16.mxu0 %v3032
        %3170 = vmatpush1.bf16.msra.mxu0 %v3031
        %3171 = vmatprep.subr.bf16.mxu0 %v3035
        %3172 = vmatpush1.bf16.msra.mxu0 %v3034
        %3173 = vmatprep.subr.bf16.mxu0 %v3038
        %3174 = vmatpush1.bf16.msra.mxu0 %v3037
        %3175 = vmatprep.subr.bf16.mxu0 %v3041
        %3176 = vmatpush1.bf16.msra.mxu0 %v3040
        %3177 = vmatprep.subr.bf16.mxu0 %v3044
        %3178 = vmatpush1.bf16.msra.mxu0 %v3043
        %3179 = vmatprep.subr.bf16.mxu0 %v3047
        %3180 = vmatpush1.bf16.msra.mxu0 %v3046
        %3181 = vmatprep.subr.bf16.mxu0 %v3050
        %3182 = vmatpush1.bf16.msra.mxu0 %v3049
        %3183 = vmatprep.subr.bf16.mxu0 %v3053
        %3184 = vmatpush1.bf16.msra.mxu0 %v3052
        %3185 = vmatprep.subr.bf16.mxu0 %v3056
        %3186 = vmatpush1.bf16.msra.mxu0 %v3055
        %3187 = vmatprep.subr.bf16.mxu0 %v3059
        %3188 = vmatpush1.bf16.msra.mxu0 %v3058
        %3189 = vmatprep.mubr.bf16.mxu0 %v2656
        %3190 = vmatmul.mubr.bf16.gmra.mrb[0].mxu0 %v2655
        %v3191 = vpop.f32.mrb[0].mxu0
        %v3192 = vadd.f32 %v2761, %v3191
        %v3193 = vpop.f32.mrb[0].mxu0
        %v3194 = vadd.f32 %v2765, %v3193
        %v3195 = vpop.f32.mrb[0].mxu0
        %v3196 = vpop.f32.mrb[0].mxu0
        %3197 = vdwg.mxu0
        %3198 = vmatprep.subr.bf16.mxu0 %v3062
        %3199 = vmatpush1.bf16.msra.mxu0 %v3061
        %3200 = vmatprep.subr.bf16.mxu0 %v3065
        %3201 = vmatpush1.bf16.msra.mxu0 %v3064
        %3202 = vmatprep.subr.bf16.mxu0 %v3068
        %3203 = vmatpush1.bf16.msra.mxu0 %v3067
        %3204 = vmatprep.subr.bf16.mxu0 %v3071
        %3205 = vmatpush1.bf16.msra.mxu0 %v3070
        %3206 = vmatprep.subr.bf16.mxu0 %v3074
        %3207 = vmatpush1.bf16.msra.mxu0 %v3073
        %3208 = vmatprep.subr.bf16.mxu0 %v3077
        %3209 = vmatpush1.bf16.msra.mxu0 %v3076
        %3210 = vmatprep.subr.bf16.mxu0 %v3080
        %3211 = vmatpush1.bf16.msra.mxu0 %v3079
        %3212 = vmatprep.subr.bf16.mxu0 %v3083
        %3213 = vmatpush1.bf16.msra.mxu0 %v3082
        %3214 = vmatprep.subr.bf16.mxu0 0
        %3215 = vmatpush1.bf16.msra.mxu0 0
        %3216 = vmatprep.subr.bf16.mxu0 0
        %3217 = vmatpush1.bf16.msra.mxu0 0
        %3218 = vmatprep.subr.bf16.mxu0 0
        %3219 = vmatpush1.bf16.msra.mxu0 0
        %3220 = vmatprep.subr.bf16.mxu0 0
        %3221 = vmatpush1.bf16.msra.mxu0 0
        %3222 = vmatprep.subr.bf16.mxu0 0
        %3223 = vmatpush1.bf16.msra.mxu0 0
        %3224 = vmatprep.subr.bf16.mxu0 0
        %3225 = vmatpush1.bf16.msra.mxu0 0
        %3226 = vmatprep.subr.bf16.mxu0 0
        %3227 = vmatpush1.bf16.msra.mxu0 0
        %3228 = vmatprep.subr.bf16.mxu0 0
        %3229 = vmatpush1.bf16.msra.mxu0 0
        %3230 = vmatprep.mubr.bf16.mxu0 0
        %3231 = vmatmul.mubr.bf16.gmra.mrb[0].mxu0 %v2657
        %v3232 = vpop.f32.mrb[0].mxu0
        %v3233 = vadd.f32 %v3192, %v3232
        %v3234 = vpop.f32.mrb[0].mxu0
        %v3235 = vadd.f32 %v3194, %v3234
        %v3236 = vpop.f32.mrb[0].mxu0
        %v3237 = vpop.f32.mrb[0].mxu0
        %3238 = vdwg.mxu0
        %3239 = vmatprep.subr.bf16.mxu0 0
        %3240 = vmatpush1.bf16.msra.mxu0 %v3015
        %3241 = vmatprep.subr.bf16.mxu0 0
        %3242 = vmatpush1.bf16.msra.mxu0 %v3018
        %3243 = vmatprep.subr.bf16.mxu0 0
        %3244 = vmatpush1.bf16.msra.mxu0 %v3021
        %3245 = vmatprep.subr.bf16.mxu0 0
        %3246 = vmatpush1.bf16.msra.mxu0 %v3024
        %3247 = vmatprep.subr.bf16.mxu0 0
        %3248 = vmatpush1.bf16.msra.mxu0 %v3027
        %3249 = vmatprep.subr.bf16.mxu0 0
        %3250 = vmatpush1.bf16.msra.mxu0 %v3030
        %3251 = vmatprep.subr.bf16.mxu0 0
        %3252 = vmatpush1.bf16.msra.mxu0 %v3033
        %3253 = vmatprep.subr.bf16.mxu0 0
        %3254 = vmatpush1.bf16.msra.mxu0 %v3036
        %3255 = vmatprep.subr.bf16.mxu0 0
        %3256 = vmatpush1.bf16.msra.mxu0 %v3039
        %3257 = vmatprep.subr.bf16.mxu0 0
        %3258 = vmatpush1.bf16.msra.mxu0 %v3042
        %3259 = vmatprep.subr.bf16.mxu0 0
        %3260 = vmatpush1.bf16.msra.mxu0 %v3045
        %3261 = vmatprep.subr.bf16.mxu0 0
        %3262 = vmatpush1.bf16.msra.mxu0 %v3048
        %3263 = vmatprep.subr.bf16.mxu0 0
        %3264 = vmatpush1.bf16.msra.mxu0 %v3051
        %3265 = vmatprep.subr.bf16.mxu0 0
        %3266 = vmatpush1.bf16.msra.mxu0 %v3054
        %3267 = vmatprep.subr.bf16.mxu0 0
        %3268 = vmatpush1.bf16.msra.mxu0 %v3057
        %3269 = vmatprep.subr.bf16.mxu0 0
        %3270 = vmatpush1.bf16.msra.mxu0 %v3060
        %3271 = vmatprep.mubr.bf16.mxu0 %v2656
        %3272 = vmatmul.mubr.bf16.gmra.mrb[0].mxu0 %v2655
        %v3273 = vpop.f32.mrb[0].mxu0
        %v3274 = vadd.f32 %v2769, %v3273
        %v3275 = vpop.f32.mrb[0].mxu0
        %v3276 = vpop.f32.mrb[0].mxu0
        %v3277 = vpop.f32.mrb[0].mxu0
        %3278 = vdwg.mxu0
        %3279 = vmatprep.subr.bf16.mxu0 0
        %3280 = vmatpush1.bf16.msra.mxu0 %v3063
        %3281 = vmatprep.subr.bf16.mxu0 0
        %3282 = vmatpush1.bf16.msra.mxu0 %v3066
        %3283 = vmatprep.subr.bf16.mxu0 0
        %3284 = vmatpush1.bf16.msra.mxu0 %v3069
        %3285 = vmatprep.subr.bf16.mxu0 0
        %3286 = vmatpush1.bf16.msra.mxu0 %v3072
        %3287 = vmatprep.subr.bf16.mxu0 0
        %3288 = vmatpush1.bf16.msra.mxu0 %v3075
        %3289 = vmatprep.subr.bf16.mxu0 0
        %3290 = vmatpush1.bf16.msra.mxu0 %v3078
        %3291 = vmatprep.subr.bf16.mxu0 0
        %3292 = vmatpush1.bf16.msra.mxu0 %v3081
        %3293 = vmatprep.subr.bf16.mxu0 0
        %3294 = vmatpush1.bf16.msra.mxu0 %v3084
        %3295 = vmatprep.subr.bf16.mxu0 0
        %3296 = vmatpush1.bf16.msra.mxu0 0
        %3297 = vmatprep.subr.bf16.mxu0 0
        %3298 = vmatpush1.bf16.msra.mxu0 0
        %3299 = vmatprep.subr.bf16.mxu0 0
        %3300 = vmatpush1.bf16.msra.mxu0 0
        %3301 = vmatprep.subr.bf16.mxu0 0
        %3302 = vmatpush1.bf16.msra.mxu0 0
        %3303 = vmatprep.subr.bf16.mxu0 0
        %3304 = vmatpush1.bf16.msra.mxu0 0
        %3305 = vmatprep.subr.bf16.mxu0 0
        %3306 = vmatpush1.bf16.msra.mxu0 0
        %3307 = vmatprep.subr.bf16.mxu0 0
        %3308 = vmatpush1.bf16.msra.mxu0 0
        %3309 = vmatprep.subr.bf16.mxu0 0
        %3310 = vmatpush1.bf16.msra.mxu0 0
        %3311 = vmatprep.mubr.bf16.mxu0 0
        %3312 = vmatmul.mubr.bf16.gmra.mrb[0].mxu0 %v2657
        %v3313 = vpop.f32.mrb[0].mxu0
        %v3314 = vadd.f32 %v3274, %v3313
        %v3315 = vpop.f32.mrb[0].mxu0
        %v3316 = vpop.f32.mrb[0].mxu0
        %v3317 = vpop.f32.mrb[0].mxu0
        %3318 = vdwg.mxu0
        %v3319 = vunpack.c.l.bf16 %v1988
        %v3320 = vunpack.c.l.bf16 %v1989
        %v3321 = vunpack.c.l.bf16 %v1990
        %v3322 = vadd.f32 %v3233, %v3319
        %v3323 = vadd.f32 %v3235, %v3320
        %v3324 = vadd.f32 %v3314, %v3321
        %v3325 = vmax.f32 %v3322, 0.0
        %v3326 = vmax.f32 %v3323, 0.0
        %v3327 = vmax.f32 %v3324, 0.0
        %v3328 = vpack.c.bf16 %v3325, %v3325
        %v3329 = vpack.c.bf16 %v3326, %v3326
        %v3330 = vpack.c.bf16 %v3327, %v3327
        %s3331 = scalar_lea.vmem [#allocation9], 2304
        %v3332 = vld [vmem:[%s3331] sm:$0xff]
        %v3333 = vld [vmem:[%s3331 + $0x8] sm:$0xf]
        %v3334 = vld [vmem:[%s3331 + $0xc] sm:$0xff]
        %v3335 = vld [vmem:[%s3331 + $0x14] sm:$0xf]
        %v3336 = vld [vmem:[%s3331 + $0x18] sm:$0xff]
        %v3337 = vld [vmem:[%s3331 + $0x20] sm:$0xf]
        %v3338 = vld [vmem:[%s3331 + $0x24] sm:$0xff]
        %v3339 = vld [vmem:[%s3331 + $0x2c] sm:$0xf]
        %v3340 = vld [vmem:[%s3331 + $0x30] sm:$0xff]
        %v3341 = vld [vmem:[%s3331 + $0x38] sm:$0xf]
        %v3342 = vld [vmem:[%s3331 + $0x3c] sm:$0xff]
        %v3343 = vld [vmem:[%s3331 + $0x44] sm:$0xf]
        %v3344 = vld [vmem:[%s3331 + $0x48] sm:$0xff]
        %v3345 = vld [vmem:[%s3331 + $0x50] sm:$0xf]
        %v3346 = vld [vmem:[%s3331 + $0x54] sm:$0xff]
        %v3347 = vld [vmem:[%s3331 + $0x5c] sm:$0xf]
        %v3348 = vld [vmem:[%s3331 + $0x60] sm:$0xff]
        %v3349 = vld [vmem:[%s3331 + $0x68] sm:$0xf]
        %v3350 = vld [vmem:[%s3331 + $0x6c] sm:$0xff]
        %v3351 = vld [vmem:[%s3331 + $0x74] sm:$0xf]
        %v3352 = vld [vmem:[%s3331 + $0x78] sm:$0xff]
        %v3353 = vld [vmem:[%s3331 + $0x80] sm:$0xf]
        %v3354 = vld [vmem:[%s3331 + $0x84] sm:$0xff]
        %v3355 = vld [vmem:[%s3331 + $0x8c] sm:$0xf]
        %v3356 = vld [vmem:[%s3331 + $0x90] sm:$0xff]
        %v3357 = vld [vmem:[%s3331 + $0x98] sm:$0xf]
        %v3358 = vld [vmem:[%s3331 + $0x9c] sm:$0xff]
        %v3359 = vld [vmem:[%s3331 + $0xa4] sm:$0xf]
        %v3360 = vld [vmem:[%s3331 + $0xa8] sm:$0xff]
        %v3361 = vld [vmem:[%s3331 + $0xb0] sm:$0xf]
        %v3362 = vld [vmem:[%s3331 + $0xb4] sm:$0xff]
        %v3363 = vld [vmem:[%s3331 + $0xbc] sm:$0xf]
        %v3364 = vld [vmem:[%s3331 + $0xc0] sm:$0xff]
        %v3365 = vld [vmem:[%s3331 + $0xc8] sm:$0xf]
        %v3366 = vld [vmem:[%s3331 + $0xcc] sm:$0xff]
        %v3367 = vld [vmem:[%s3331 + $0xd4] sm:$0xf]
        %v3368 = vld [vmem:[%s3331 + $0xd8] sm:$0xff]
        %v3369 = vld [vmem:[%s3331 + $0xe0] sm:$0xf]
        %v3370 = vld [vmem:[%s3331 + $0xe4] sm:$0xff]
        %v3371 = vld [vmem:[%s3331 + $0xec] sm:$0xf]
        %v3372 = vld [vmem:[%s3331 + $0xf0] sm:$0xff]
        %v3373 = vld [vmem:[%s3331 + $0xf8] sm:$0xf]
        %v3374 = vld [vmem:[%s3331 + $0xfc] sm:$0xff]
        %v3375 = vld [vmem:[%s3331 + $0x104] sm:$0xf]
        %v3376 = vld [vmem:[%s3331 + $0x108] sm:$0xff]
        %v3377 = vld [vmem:[%s3331 + $0x110] sm:$0xf]
        %v3378 = vld [vmem:[%s3331 + $0x114] sm:$0xff]
        %v3379 = vld [vmem:[%s3331 + $0x11c] sm:$0xf]
        %v3380 = vld [vmem:[%s3331 + $0x120] sm:$0xff]
        %v3381 = vld [vmem:[%s3331 + $0x128] sm:$0xf]
        %v3382 = vld [vmem:[%s3331 + $0x12c] sm:$0xff]
        %v3383 = vld [vmem:[%s3331 + $0x134] sm:$0xf]
        %v3384 = vld [vmem:[%s3331 + $0x138] sm:$0xff]
        %v3385 = vld [vmem:[%s3331 + $0x140] sm:$0xf]
        %v3386 = vld [vmem:[%s3331 + $0x144] sm:$0xff]
        %v3387 = vld [vmem:[%s3331 + $0x14c] sm:$0xf]
        %v3388 = vld [vmem:[%s3331 + $0x150] sm:$0xff]
        %v3389 = vld [vmem:[%s3331 + $0x158] sm:$0xf]
        %v3390 = vld [vmem:[%s3331 + $0x15c] sm:$0xff]
        %v3391 = vld [vmem:[%s3331 + $0x164] sm:$0xf]
        %v3392 = vld [vmem:[%s3331 + $0x168] sm:$0xff]
        %v3393 = vld [vmem:[%s3331 + $0x170] sm:$0xf]
        %v3394 = vld [vmem:[%s3331 + $0x174] sm:$0xff]
        %v3395 = vld [vmem:[%s3331 + $0x17c] sm:$0xf]
        %v3396 = vld [vmem:[%s3331 + $0x180] sm:$0xff]
        %v3397 = vld [vmem:[%s3331 + $0x188] sm:$0xf]
        %v3398 = vld [vmem:[%s3331 + $0x18c] sm:$0xff]
        %v3399 = vld [vmem:[%s3331 + $0x194] sm:$0xf]
        %v3400 = vld [vmem:[%s3331 + $0x198] sm:$0xff]
        %v3401 = vld [vmem:[%s3331 + $0x1a0] sm:$0xf]
        %v3402 = vld [vmem:[%s3331 + $0x1a4] sm:$0xff]
        %v3403 = vld [vmem:[%s3331 + $0x1ac] sm:$0xf]
        %v3404 = vld [vmem:[%s3331 + $0x1b0] sm:$0xff]
        %v3405 = vld [vmem:[%s3331 + $0x1b8] sm:$0xf]
        %v3406 = vld [vmem:[%s3331 + $0x1bc] sm:$0xff]
        %v3407 = vld [vmem:[%s3331 + $0x1c4] sm:$0xf]
        %v3408 = vld [vmem:[%s3331 + $0x1c8] sm:$0xff]
        %v3409 = vld [vmem:[%s3331 + $0x1d0] sm:$0xf]
        %v3410 = vld [vmem:[%s3331 + $0x1d4] sm:$0xff]
        %v3411 = vld [vmem:[%s3331 + $0x1dc] sm:$0xf]
        %v3412 = vld [vmem:[%s3331 + $0x1e0] sm:$0xff]
        %v3413 = vld [vmem:[%s3331 + $0x1e8] sm:$0xf]
        %v3414 = vld [vmem:[%s3331 + $0x1ec] sm:$0xff]
        %v3415 = vld [vmem:[%s3331 + $0x1f4] sm:$0xf]
        %v3416 = vld [vmem:[%s3331 + $0x1f8] sm:$0xff]
        %v3417 = vld [vmem:[%s3331 + $0x200] sm:$0xf]
        %v3418 = vld [vmem:[%s3331 + $0x204] sm:$0xff]
        %v3419 = vld [vmem:[%s3331 + $0x20c] sm:$0xf]
        %v3420 = vld [vmem:[%s3331 + $0x210] sm:$0xff]
        %v3421 = vld [vmem:[%s3331 + $0x218] sm:$0xf]
        %v3422 = vld [vmem:[%s3331 + $0x21c] sm:$0xff]
        %v3423 = vld [vmem:[%s3331 + $0x224] sm:$0xf]
        %v3424 = vld [vmem:[%s3331 + $0x228] sm:$0xff]
        %v3425 = vld [vmem:[%s3331 + $0x230] sm:$0xf]
        %v3426 = vld [vmem:[%s3331 + $0x234] sm:$0xff]
        %v3427 = vld [vmem:[%s3331 + $0x23c] sm:$0xf]
        %s3428 = scalar_lea.vmem [#allocation11], 12
        %v3429 = vld [vmem:[%s3428] sm:$0x7]
        %v3431 = vlaneseq
        %v3432 = vshrl.u32 %v3431, 7
        %v3433 = vsub.s32 0, %v3432
        %v3434 = vrot.slane %v3429, %v3433
        %v3435 = vlaneseq
        %v3436 = vshrl.u32 %v3435, 7
        %v3437 = vsub.s32 1, %v3436
        %v3438 = vrot.slane %v3429, %v3437
        %v3439 = vlaneseq
        %v3440 = vshrl.u32 %v3439, 7
        %v3441 = vsub.s32 2, %v3440
        %v3442 = vrot.slane %v3429, %v3441
        %v3542 = vunpack.c.l.b16 %v3332
        %v3543 = vunpack.c.h.b16 %v3332
        %v3544 = vunpack.c.l.b16 %v3333
        %v3545 = vunpack.c.l.b16 %v3334
        %v3546 = vunpack.c.h.b16 %v3334
        %v3547 = vunpack.c.l.b16 %v3335
        %v3548 = vunpack.c.l.b16 %v3336
        %v3549 = vunpack.c.h.b16 %v3336
        %v3550 = vunpack.c.l.b16 %v3337
        %v3551 = vunpack.c.l.b16 %v3338
        %v3552 = vunpack.c.h.b16 %v3338
        %v3553 = vunpack.c.l.b16 %v3339
        %v3554 = vunpack.c.l.b16 %v3340
        %v3555 = vunpack.c.h.b16 %v3340
        %v3556 = vunpack.c.l.b16 %v3341
        %v3557 = vunpack.c.l.b16 %v3342
        %v3558 = vunpack.c.h.b16 %v3342
        %v3559 = vunpack.c.l.b16 %v3343
        %v3560 = vunpack.c.l.b16 %v3344
        %v3561 = vunpack.c.h.b16 %v3344
        %v3562 = vunpack.c.l.b16 %v3345
        %v3563 = vunpack.c.l.b16 %v3346
        %v3564 = vunpack.c.h.b16 %v3346
        %v3565 = vunpack.c.l.b16 %v3347
        %v3566 = vunpack.c.l.b16 %v3348
        %v3567 = vunpack.c.h.b16 %v3348
        %v3568 = vunpack.c.l.b16 %v3349
        %v3569 = vunpack.c.l.b16 %v3350
        %v3570 = vunpack.c.h.b16 %v3350
        %v3571 = vunpack.c.l.b16 %v3351
        %v3572 = vunpack.c.l.b16 %v3352
        %v3573 = vunpack.c.h.b16 %v3352
        %v3574 = vunpack.c.l.b16 %v3353
        %v3575 = vunpack.c.l.b16 %v3354
        %v3576 = vunpack.c.h.b16 %v3354
        %v3577 = vunpack.c.l.b16 %v3355
        %v3578 = vunpack.c.l.b16 %v3356
        %v3579 = vunpack.c.h.b16 %v3356
        %v3580 = vunpack.c.l.b16 %v3357
        %v3581 = vunpack.c.l.b16 %v3358
        %v3582 = vunpack.c.h.b16 %v3358
        %v3583 = vunpack.c.l.b16 %v3359
        %v3584 = vunpack.c.l.b16 %v3360
        %v3585 = vunpack.c.h.b16 %v3360
        %v3586 = vunpack.c.l.b16 %v3361
        %v3587 = vunpack.c.l.b16 %v3362
        %v3588 = vunpack.c.h.b16 %v3362
        %v3589 = vunpack.c.l.b16 %v3363
        %v3590 = vunpack.c.l.b16 %v3364
        %v3591 = vunpack.c.h.b16 %v3364
        %v3592 = vunpack.c.l.b16 %v3365
        %v3593 = vunpack.c.l.b16 %v3366
        %v3594 = vunpack.c.h.b16 %v3366
        %v3595 = vunpack.c.l.b16 %v3367
        %v3596 = vunpack.c.l.b16 %v3368
        %v3597 = vunpack.c.h.b16 %v3368
        %v3598 = vunpack.c.l.b16 %v3369
        %v3599 = vunpack.c.l.b16 %v3370
        %v3600 = vunpack.c.h.b16 %v3370
        %v3601 = vunpack.c.l.b16 %v3371
        %v3602 = vunpack.c.l.b16 %v3372
        %v3603 = vunpack.c.h.b16 %v3372
        %v3604 = vunpack.c.l.b16 %v3373
        %v3605 = vunpack.c.l.b16 %v3374
        %v3606 = vunpack.c.h.b16 %v3374
        %v3607 = vunpack.c.l.b16 %v3375
        %v3608 = vunpack.c.l.b16 %v3376
        %v3609 = vunpack.c.h.b16 %v3376
        %v3610 = vunpack.c.l.b16 %v3377
        %v3611 = vunpack.c.l.b16 %v3378
        %v3612 = vunpack.c.h.b16 %v3378
        %v3613 = vunpack.c.l.b16 %v3379
        %v3614 = vunpack.c.l.b16 %v3380
        %v3615 = vunpack.c.h.b16 %v3380
        %v3616 = vunpack.c.l.b16 %v3381
        %v3617 = vunpack.c.l.b16 %v3382
        %v3618 = vunpack.c.h.b16 %v3382
        %v3619 = vunpack.c.l.b16 %v3383
        %v3620 = vunpack.c.l.b16 %v3384
        %v3621 = vunpack.c.h.b16 %v3384
        %v3622 = vunpack.c.l.b16 %v3385
        %v3623 = vunpack.c.l.b16 %v3386
        %v3624 = vunpack.c.h.b16 %v3386
        %v3625 = vunpack.c.l.b16 %v3387
        %v3626 = vunpack.c.l.b16 %v3388
        %v3627 = vunpack.c.h.b16 %v3388
        %v3628 = vunpack.c.l.b16 %v3389
        %v3629 = vunpack.c.l.b16 %v3390
        %v3630 = vunpack.c.h.b16 %v3390
        %v3631 = vunpack.c.l.b16 %v3391
        %v3632 = vunpack.c.l.b16 %v3392
        %v3633 = vunpack.c.h.b16 %v3392
        %v3634 = vunpack.c.l.b16 %v3393
        %v3635 = vunpack.c.l.b16 %v3394
        %v3636 = vunpack.c.h.b16 %v3394
        %v3637 = vunpack.c.l.b16 %v3395
        %v3638 = vunpack.c.l.b16 %v3396
        %v3639 = vunpack.c.h.b16 %v3396
        %v3640 = vunpack.c.l.b16 %v3397
        %v3641 = vunpack.c.l.b16 %v3398
        %v3642 = vunpack.c.h.b16 %v3398
        %v3643 = vunpack.c.l.b16 %v3399
        %v3644 = vunpack.c.l.b16 %v3400
        %v3645 = vunpack.c.h.b16 %v3400
        %v3646 = vunpack.c.l.b16 %v3401
        %v3647 = vunpack.c.l.b16 %v3402
        %v3648 = vunpack.c.h.b16 %v3402
        %v3649 = vunpack.c.l.b16 %v3403
        %v3650 = vunpack.c.l.b16 %v3404
        %v3651 = vunpack.c.h.b16 %v3404
        %v3652 = vunpack.c.l.b16 %v3405
        %v3653 = vunpack.c.l.b16 %v3406
        %v3654 = vunpack.c.h.b16 %v3406
        %v3655 = vunpack.c.l.b16 %v3407
        %v3656 = vunpack.c.l.b16 %v3408
        %v3657 = vunpack.c.h.b16 %v3408
        %v3658 = vunpack.c.l.b16 %v3409
        %v3659 = vunpack.c.l.b16 %v3410
        %v3660 = vunpack.c.h.b16 %v3410
        %v3661 = vunpack.c.l.b16 %v3411
        %v3662 = vunpack.c.l.b16 %v3412
        %v3663 = vunpack.c.h.b16 %v3412
        %v3664 = vunpack.c.l.b16 %v3413
        %v3665 = vunpack.c.l.b16 %v3414
        %v3666 = vunpack.c.h.b16 %v3414
        %v3667 = vunpack.c.l.b16 %v3415
        %v3668 = vunpack.c.l.b16 %v3416
        %v3669 = vunpack.c.h.b16 %v3416
        %v3670 = vunpack.c.l.b16 %v3417
        %v3671 = vunpack.c.l.b16 %v3418
        %v3672 = vunpack.c.h.b16 %v3418
        %v3673 = vunpack.c.l.b16 %v3419
        %v3674 = vunpack.c.l.b16 %v3420
        %v3675 = vunpack.c.h.b16 %v3420
        %v3676 = vunpack.c.l.b16 %v3421
        %v3677 = vunpack.c.l.b16 %v3422
        %v3678 = vunpack.c.h.b16 %v3422
        %v3679 = vunpack.c.l.b16 %v3423
        %v3680 = vunpack.c.l.b16 %v3424
        %v3681 = vunpack.c.h.b16 %v3424
        %v3682 = vunpack.c.l.b16 %v3425
        %v3683 = vunpack.c.l.b16 %v3426
        %v3684 = vunpack.c.h.b16 %v3426
        %v3685 = vunpack.c.l.b16 %v3427
        %v3686 = vpack.c.b16 %v3545, %v3542
        %v3687 = vpack.c.b16 %v3546, %v3543
        %v3688 = vpack.c.b16 %v3547, %v3544
        %v3689 = vpack.c.b16 %v3551, %v3548
        %v3690 = vpack.c.b16 %v3552, %v3549
        %v3691 = vpack.c.b16 %v3553, %v3550
        %v3692 = vpack.c.b16 %v3557, %v3554
        %v3693 = vpack.c.b16 %v3558, %v3555
        %v3694 = vpack.c.b16 %v3559, %v3556
        %v3695 = vpack.c.b16 %v3563, %v3560
        %v3696 = vpack.c.b16 %v3564, %v3561
        %v3697 = vpack.c.b16 %v3565, %v3562
        %v3698 = vpack.c.b16 %v3569, %v3566
        %v3699 = vpack.c.b16 %v3570, %v3567
        %v3700 = vpack.c.b16 %v3571, %v3568
        %v3701 = vpack.c.b16 %v3575, %v3572
        %v3702 = vpack.c.b16 %v3576, %v3573
        %v3703 = vpack.c.b16 %v3577, %v3574
        %v3704 = vpack.c.b16 %v3581, %v3578
        %v3705 = vpack.c.b16 %v3582, %v3579
        %v3706 = vpack.c.b16 %v3583, %v3580
        %v3707 = vpack.c.b16 %v3587, %v3584
        %v3708 = vpack.c.b16 %v3588, %v3585
        %v3709 = vpack.c.b16 %v3589, %v3586
        %v3710 = vpack.c.b16 %v3593, %v3590
        %v3711 = vpack.c.b16 %v3594, %v3591
        %v3712 = vpack.c.b16 %v3595, %v3592
        %v3713 = vpack.c.b16 %v3599, %v3596
        %v3714 = vpack.c.b16 %v3600, %v3597
        %v3715 = vpack.c.b16 %v3601, %v3598
        %v3716 = vpack.c.b16 %v3605, %v3602
        %v3717 = vpack.c.b16 %v3606, %v3603
        %v3718 = vpack.c.b16 %v3607, %v3604
        %v3719 = vpack.c.b16 %v3611, %v3608
        %v3720 = vpack.c.b16 %v3612, %v3609
        %v3721 = vpack.c.b16 %v3613, %v3610
        %v3722 = vpack.c.b16 %v3617, %v3614
        %v3723 = vpack.c.b16 %v3618, %v3615
        %v3724 = vpack.c.b16 %v3619, %v3616
        %v3725 = vpack.c.b16 %v3623, %v3620
        %v3726 = vpack.c.b16 %v3624, %v3621
        %v3727 = vpack.c.b16 %v3625, %v3622
        %v3728 = vpack.c.b16 %v3629, %v3626
        %v3729 = vpack.c.b16 %v3630, %v3627
        %v3730 = vpack.c.b16 %v3631, %v3628
        %v3731 = vpack.c.b16 %v3635, %v3632
        %v3732 = vpack.c.b16 %v3636, %v3633
        %v3733 = vpack.c.b16 %v3637, %v3634
        %v3734 = vpack.c.b16 %v3641, %v3638
        %v3735 = vpack.c.b16 %v3642, %v3639
        %v3736 = vpack.c.b16 %v3643, %v3640
        %v3737 = vpack.c.b16 %v3647, %v3644
        %v3738 = vpack.c.b16 %v3648, %v3645
        %v3739 = vpack.c.b16 %v3649, %v3646
        %v3740 = vpack.c.b16 %v3653, %v3650
        %v3741 = vpack.c.b16 %v3654, %v3651
        %v3742 = vpack.c.b16 %v3655, %v3652
        %v3743 = vpack.c.b16 %v3659, %v3656
        %v3744 = vpack.c.b16 %v3660, %v3657
        %v3745 = vpack.c.b16 %v3661, %v3658
        %v3746 = vpack.c.b16 %v3665, %v3662
        %v3747 = vpack.c.b16 %v3666, %v3663
        %v3748 = vpack.c.b16 %v3667, %v3664
        %v3749 = vpack.c.b16 %v3671, %v3668
        %v3750 = vpack.c.b16 %v3672, %v3669
        %v3751 = vpack.c.b16 %v3673, %v3670
        %v3752 = vpack.c.b16 %v3677, %v3674
        %v3753 = vpack.c.b16 %v3678, %v3675
        %v3754 = vpack.c.b16 %v3679, %v3676
        %v3755 = vpack.c.b16 %v3683, %v3680
        %v3756 = vpack.c.b16 %v3684, %v3681
        %v3757 = vpack.c.b16 %v3685, %v3682
        %3830 = vmatprep.subr.bf16.mxu0 %v3687
        %3831 = vmatpush1.bf16.msra.mxu0 %v3686
        %3832 = vmatprep.subr.bf16.mxu0 %v3690
        %3833 = vmatpush1.bf16.msra.mxu0 %v3689
        %3834 = vmatprep.subr.bf16.mxu0 %v3693
        %3835 = vmatpush1.bf16.msra.mxu0 %v3692
        %3836 = vmatprep.subr.bf16.mxu0 %v3696
        %3837 = vmatpush1.bf16.msra.mxu0 %v3695
        %3838 = vmatprep.subr.bf16.mxu0 %v3699
        %3839 = vmatpush1.bf16.msra.mxu0 %v3698
        %3840 = vmatprep.subr.bf16.mxu0 %v3702
        %3841 = vmatpush1.bf16.msra.mxu0 %v3701
        %3842 = vmatprep.subr.bf16.mxu0 %v3705
        %3843 = vmatpush1.bf16.msra.mxu0 %v3704
        %3844 = vmatprep.subr.bf16.mxu0 %v3708
        %3845 = vmatpush1.bf16.msra.mxu0 %v3707
        %3846 = vmatprep.subr.bf16.mxu0 %v3711
        %3847 = vmatpush1.bf16.msra.mxu0 %v3710
        %3848 = vmatprep.subr.bf16.mxu0 %v3714
        %3849 = vmatpush1.bf16.msra.mxu0 %v3713
        %3850 = vmatprep.subr.bf16.mxu0 %v3717
        %3851 = vmatpush1.bf16.msra.mxu0 %v3716
        %3852 = vmatprep.subr.bf16.mxu0 %v3720
        %3853 = vmatpush1.bf16.msra.mxu0 %v3719
        %3854 = vmatprep.subr.bf16.mxu0 %v3723
        %3855 = vmatpush1.bf16.msra.mxu0 %v3722
        %3856 = vmatprep.subr.bf16.mxu0 %v3726
        %3857 = vmatpush1.bf16.msra.mxu0 %v3725
        %3858 = vmatprep.subr.bf16.mxu0 %v3729
        %3859 = vmatpush1.bf16.msra.mxu0 %v3728
        %3860 = vmatprep.subr.bf16.mxu0 %v3732
        %3861 = vmatpush1.bf16.msra.mxu0 %v3731
        %3862 = vmatprep.mubr.bf16.mxu0 %v3329
        %3863 = vmatmul.mubr.bf16.gmra.mrb[0].mxu0 %v3328
        %v3864 = vpop.f32.mrb[0].mxu0
        %v3865 = vadd.f32 %v3434, %v3864
        %v3866 = vpop.f32.mrb[0].mxu0
        %v3867 = vadd.f32 %v3438, %v3866
        %v3868 = vpop.f32.mrb[0].mxu0
        %v3869 = vpop.f32.mrb[0].mxu0
        %3870 = vdwg.mxu0
        %3871 = vmatprep.subr.bf16.mxu0 %v3735
        %3872 = vmatpush1.bf16.msra.mxu0 %v3734
        %3873 = vmatprep.subr.bf16.mxu0 %v3738
        %3874 = vmatpush1.bf16.msra.mxu0 %v3737
        %3875 = vmatprep.subr.bf16.mxu0 %v3741
        %3876 = vmatpush1.bf16.msra.mxu0 %v3740
        %3877 = vmatprep.subr.bf16.mxu0 %v3744
        %3878 = vmatpush1.bf16.msra.mxu0 %v3743
        %3879 = vmatprep.subr.bf16.mxu0 %v3747
        %3880 = vmatpush1.bf16.msra.mxu0 %v3746
        %3881 = vmatprep.subr.bf16.mxu0 %v3750
        %3882 = vmatpush1.bf16.msra.mxu0 %v3749
        %3883 = vmatprep.subr.bf16.mxu0 %v3753
        %3884 = vmatpush1.bf16.msra.mxu0 %v3752
        %3885 = vmatprep.subr.bf16.mxu0 %v3756
        %3886 = vmatpush1.bf16.msra.mxu0 %v3755
        %3887 = vmatprep.subr.bf16.mxu0 0
        %3888 = vmatpush1.bf16.msra.mxu0 0
        %3889 = vmatprep.subr.bf16.mxu0 0
        %3890 = vmatpush1.bf16.msra.mxu0 0
        %3891 = vmatprep.subr.bf16.mxu0 0
        %3892 = vmatpush1.bf16.msra.mxu0 0
        %3893 = vmatprep.subr.bf16.mxu0 0
        %3894 = vmatpush1.bf16.msra.mxu0 0
        %3895 = vmatprep.subr.bf16.mxu0 0
        %3896 = vmatpush1.bf16.msra.mxu0 0
        %3897 = vmatprep.subr.bf16.mxu0 0
        %3898 = vmatpush1.bf16.msra.mxu0 0
        %3899 = vmatprep.subr.bf16.mxu0 0
        %3900 = vmatpush1.bf16.msra.mxu0 0
        %3901 = vmatprep.subr.bf16.mxu0 0
        %3902 = vmatpush1.bf16.msra.mxu0 0
        %3903 = vmatprep.mubr.bf16.mxu0 0
        %3904 = vmatmul.mubr.bf16.gmra.mrb[0].mxu0 %v3330
        %v3905 = vpop.f32.mrb[0].mxu0
        %v3906 = vadd.f32 %v3865, %v3905
        %v3907 = vpop.f32.mrb[0].mxu0
        %v3908 = vadd.f32 %v3867, %v3907
        %v3909 = vpop.f32.mrb[0].mxu0
        %v3910 = vpop.f32.mrb[0].mxu0
        %3911 = vdwg.mxu0
        %3912 = vmatprep.subr.bf16.mxu0 0
        %3913 = vmatpush1.bf16.msra.mxu0 %v3688
        %3914 = vmatprep.subr.bf16.mxu0 0
        %3915 = vmatpush1.bf16.msra.mxu0 %v3691
        %3916 = vmatprep.subr.bf16.mxu0 0
        %3917 = vmatpush1.bf16.msra.mxu0 %v3694
        %3918 = vmatprep.subr.bf16.mxu0 0
        %3919 = vmatpush1.bf16.msra.mxu0 %v3697
        %3920 = vmatprep.subr.bf16.mxu0 0
        %3921 = vmatpush1.bf16.msra.mxu0 %v3700
        %3922 = vmatprep.subr.bf16.mxu0 0
        %3923 = vmatpush1.bf16.msra.mxu0 %v3703
        %3924 = vmatprep.subr.bf16.mxu0 0
        %3925 = vmatpush1.bf16.msra.mxu0 %v3706
        %3926 = vmatprep.subr.bf16.mxu0 0
        %3927 = vmatpush1.bf16.msra.mxu0 %v3709
        %3928 = vmatprep.subr.bf16.mxu0 0
        %3929 = vmatpush1.bf16.msra.mxu0 %v3712
        %3930 = vmatprep.subr.bf16.mxu0 0
        %3931 = vmatpush1.bf16.msra.mxu0 %v3715
        %3932 = vmatprep.subr.bf16.mxu0 0
        %3933 = vmatpush1.bf16.msra.mxu0 %v3718
        %3934 = vmatprep.subr.bf16.mxu0 0
        %3935 = vmatpush1.bf16.msra.mxu0 %v3721
        %3936 = vmatprep.subr.bf16.mxu0 0
        %3937 = vmatpush1.bf16.msra.mxu0 %v3724
        %3938 = vmatprep.subr.bf16.mxu0 0
        %3939 = vmatpush1.bf16.msra.mxu0 %v3727
        %3940 = vmatprep.subr.bf16.mxu0 0
        %3941 = vmatpush1.bf16.msra.mxu0 %v3730
        %3942 = vmatprep.subr.bf16.mxu0 0
        %3943 = vmatpush1.bf16.msra.mxu0 %v3733
        %3944 = vmatprep.mubr.bf16.mxu0 %v3329
        %3945 = vmatmul.mubr.bf16.gmra.mrb[0].mxu0 %v3328
        %v3946 = vpop.f32.mrb[0].mxu0
        %v3947 = vadd.f32 %v3442, %v3946
        %v3948 = vpop.f32.mrb[0].mxu0
        %v3949 = vpop.f32.mrb[0].mxu0
        %v3950 = vpop.f32.mrb[0].mxu0
        %3951 = vdwg.mxu0
        %3952 = vmatprep.subr.bf16.mxu0 0
        %3953 = vmatpush1.bf16.msra.mxu0 %v3736
        %3954 = vmatprep.subr.bf16.mxu0 0
        %3955 = vmatpush1.bf16.msra.mxu0 %v3739
        %3956 = vmatprep.subr.bf16.mxu0 0
        %3957 = vmatpush1.bf16.msra.mxu0 %v3742
        %3958 = vmatprep.subr.bf16.mxu0 0
        %3959 = vmatpush1.bf16.msra.mxu0 %v3745
        %3960 = vmatprep.subr.bf16.mxu0 0
        %3961 = vmatpush1.bf16.msra.mxu0 %v3748
        %3962 = vmatprep.subr.bf16.mxu0 0
        %3963 = vmatpush1.bf16.msra.mxu0 %v3751
        %3964 = vmatprep.subr.bf16.mxu0 0
        %3965 = vmatpush1.bf16.msra.mxu0 %v3754
        %3966 = vmatprep.subr.bf16.mxu0 0
        %3967 = vmatpush1.bf16.msra.mxu0 %v3757
        %3968 = vmatprep.subr.bf16.mxu0 0
        %3969 = vmatpush1.bf16.msra.mxu0 0
        %3970 = vmatprep.subr.bf16.mxu0 0
        %3971 = vmatpush1.bf16.msra.mxu0 0
        %3972 = vmatprep.subr.bf16.mxu0 0
        %3973 = vmatpush1.bf16.msra.mxu0 0
        %3974 = vmatprep.subr.bf16.mxu0 0
        %3975 = vmatpush1.bf16.msra.mxu0 0
        %3976 = vmatprep.subr.bf16.mxu0 0
        %3977 = vmatpush1.bf16.msra.mxu0 0
        %3978 = vmatprep.subr.bf16.mxu0 0
        %3979 = vmatpush1.bf16.msra.mxu0 0
        %3980 = vmatprep.subr.bf16.mxu0 0
        %3981 = vmatpush1.bf16.msra.mxu0 0
        %3982 = vmatprep.subr.bf16.mxu0 0
        %3983 = vmatpush1.bf16.msra.mxu0 0
        %3984 = vmatprep.mubr.bf16.mxu0 0
        %3985 = vmatmul.mubr.bf16.gmra.mrb[0].mxu0 %v3330
        %v3986 = vpop.f32.mrb[0].mxu0
        %v3987 = vadd.f32 %v3947, %v3986
        %v3988 = vpop.f32.mrb[0].mxu0
        %v3989 = vpop.f32.mrb[0].mxu0
        %v3990 = vpop.f32.mrb[0].mxu0
        %3991 = vdwg.mxu0
        %v3992 = vmax.f32 %v3906, 0.0
        %v3993 = vmax.f32 %v3908, 0.0
        %v3994 = vmax.f32 %v3987, 0.0
        %v3995 = vpack.c.bf16 %v3992, %v3992
        %v3996 = vpack.c.bf16 %v3993, %v3993
        %v3997 = vpack.c.bf16 %v3994, %v3994
        %s3998 = scalar_lea.vmem [#allocation9], 2880
        %v3999 = vld [vmem:[%s3998] sm:$0xff]
        %v4000 = vld [vmem:[%s3998 + $0x8] sm:$0xf]
        %v4001 = vld [vmem:[%s3998 + $0xc] sm:$0xff]
        %v4002 = vld [vmem:[%s3998 + $0x14] sm:$0xf]
        %v4003 = vld [vmem:[%s3998 + $0x18] sm:$0xff]
        %v4004 = vld [vmem:[%s3998 + $0x20] sm:$0xf]
        %v4005 = vld [vmem:[%s3998 + $0x24] sm:$0xff]
        %v4006 = vld [vmem:[%s3998 + $0x2c] sm:$0xf]
        %v4007 = vld [vmem:[%s3998 + $0x30] sm:$0xff]
        %v4008 = vld [vmem:[%s3998 + $0x38] sm:$0xf]
        %v4009 = vld [vmem:[%s3998 + $0x3c] sm:$0xff]
        %v4010 = vld [vmem:[%s3998 + $0x44] sm:$0xf]
        %v4011 = vld [vmem:[%s3998 + $0x48] sm:$0xff]
        %v4012 = vld [vmem:[%s3998 + $0x50] sm:$0xf]
        %v4013 = vld [vmem:[%s3998 + $0x54] sm:$0xff]
        %v4014 = vld [vmem:[%s3998 + $0x5c] sm:$0xf]
        %v4015 = vld [vmem:[%s3998 + $0x60] sm:$0xff]
        %v4016 = vld [vmem:[%s3998 + $0x68] sm:$0xf]
        %v4017 = vld [vmem:[%s3998 + $0x6c] sm:$0xff]
        %v4018 = vld [vmem:[%s3998 + $0x74] sm:$0xf]
        %v4019 = vld [vmem:[%s3998 + $0x78] sm:$0xff]
        %v4020 = vld [vmem:[%s3998 + $0x80] sm:$0xf]
        %v4021 = vld [vmem:[%s3998 + $0x84] sm:$0xff]
        %v4022 = vld [vmem:[%s3998 + $0x8c] sm:$0xf]
        %v4023 = vld [vmem:[%s3998 + $0x90] sm:$0xff]
        %v4024 = vld [vmem:[%s3998 + $0x98] sm:$0xf]
        %v4025 = vld [vmem:[%s3998 + $0x9c] sm:$0xff]
        %v4026 = vld [vmem:[%s3998 + $0xa4] sm:$0xf]
        %v4027 = vld [vmem:[%s3998 + $0xa8] sm:$0xff]
        %v4028 = vld [vmem:[%s3998 + $0xb0] sm:$0xf]
        %v4029 = vld [vmem:[%s3998 + $0xb4] sm:$0xff]
        %v4030 = vld [vmem:[%s3998 + $0xbc] sm:$0xf]
        %v4031 = vld [vmem:[%s3998 + $0xc0] sm:$0xff]
        %v4032 = vld [vmem:[%s3998 + $0xc8] sm:$0xf]
        %v4033 = vld [vmem:[%s3998 + $0xcc] sm:$0xff]
        %v4034 = vld [vmem:[%s3998 + $0xd4] sm:$0xf]
        %v4035 = vld [vmem:[%s3998 + $0xd8] sm:$0xff]
        %v4036 = vld [vmem:[%s3998 + $0xe0] sm:$0xf]
        %v4037 = vld [vmem:[%s3998 + $0xe4] sm:$0xff]
        %v4038 = vld [vmem:[%s3998 + $0xec] sm:$0xf]
        %v4039 = vld [vmem:[%s3998 + $0xf0] sm:$0xff]
        %v4040 = vld [vmem:[%s3998 + $0xf8] sm:$0xf]
        %v4041 = vld [vmem:[%s3998 + $0xfc] sm:$0xff]
        %v4042 = vld [vmem:[%s3998 + $0x104] sm:$0xf]
        %v4043 = vld [vmem:[%s3998 + $0x108] sm:$0xff]
        %v4044 = vld [vmem:[%s3998 + $0x110] sm:$0xf]
        %v4045 = vld [vmem:[%s3998 + $0x114] sm:$0xff]
        %v4046 = vld [vmem:[%s3998 + $0x11c] sm:$0xf]
        %v4047 = vld [vmem:[%s3998 + $0x120] sm:$0xff]
        %v4048 = vld [vmem:[%s3998 + $0x128] sm:$0xf]
        %v4049 = vld [vmem:[%s3998 + $0x12c] sm:$0xff]
        %v4050 = vld [vmem:[%s3998 + $0x134] sm:$0xf]
        %v4051 = vld [vmem:[%s3998 + $0x138] sm:$0xff]
        %v4052 = vld [vmem:[%s3998 + $0x140] sm:$0xf]
        %v4053 = vld [vmem:[%s3998 + $0x144] sm:$0xff]
        %v4054 = vld [vmem:[%s3998 + $0x14c] sm:$0xf]
        %v4055 = vld [vmem:[%s3998 + $0x150] sm:$0xff]
        %v4056 = vld [vmem:[%s3998 + $0x158] sm:$0xf]
        %v4057 = vld [vmem:[%s3998 + $0x15c] sm:$0xff]
        %v4058 = vld [vmem:[%s3998 + $0x164] sm:$0xf]
        %v4059 = vld [vmem:[%s3998 + $0x168] sm:$0xff]
        %v4060 = vld [vmem:[%s3998 + $0x170] sm:$0xf]
        %v4061 = vld [vmem:[%s3998 + $0x174] sm:$0xff]
        %v4062 = vld [vmem:[%s3998 + $0x17c] sm:$0xf]
        %v4063 = vld [vmem:[%s3998 + $0x180] sm:$0xff]
        %v4064 = vld [vmem:[%s3998 + $0x188] sm:$0xf]
        %v4065 = vld [vmem:[%s3998 + $0x18c] sm:$0xff]
        %v4066 = vld [vmem:[%s3998 + $0x194] sm:$0xf]
        %v4067 = vld [vmem:[%s3998 + $0x198] sm:$0xff]
        %v4068 = vld [vmem:[%s3998 + $0x1a0] sm:$0xf]
        %v4069 = vld [vmem:[%s3998 + $0x1a4] sm:$0xff]
        %v4070 = vld [vmem:[%s3998 + $0x1ac] sm:$0xf]
        %v4071 = vld [vmem:[%s3998 + $0x1b0] sm:$0xff]
        %v4072 = vld [vmem:[%s3998 + $0x1b8] sm:$0xf]
        %v4073 = vld [vmem:[%s3998 + $0x1bc] sm:$0xff]
        %v4074 = vld [vmem:[%s3998 + $0x1c4] sm:$0xf]
        %v4075 = vld [vmem:[%s3998 + $0x1c8] sm:$0xff]
        %v4076 = vld [vmem:[%s3998 + $0x1d0] sm:$0xf]
        %v4077 = vld [vmem:[%s3998 + $0x1d4] sm:$0xff]
        %v4078 = vld [vmem:[%s3998 + $0x1dc] sm:$0xf]
        %v4079 = vld [vmem:[%s3998 + $0x1e0] sm:$0xff]
        %v4080 = vld [vmem:[%s3998 + $0x1e8] sm:$0xf]
        %v4081 = vld [vmem:[%s3998 + $0x1ec] sm:$0xff]
        %v4082 = vld [vmem:[%s3998 + $0x1f4] sm:$0xf]
        %v4083 = vld [vmem:[%s3998 + $0x1f8] sm:$0xff]
        %v4084 = vld [vmem:[%s3998 + $0x200] sm:$0xf]
        %v4085 = vld [vmem:[%s3998 + $0x204] sm:$0xff]
        %v4086 = vld [vmem:[%s3998 + $0x20c] sm:$0xf]
        %v4087 = vld [vmem:[%s3998 + $0x210] sm:$0xff]
        %v4088 = vld [vmem:[%s3998 + $0x218] sm:$0xf]
        %v4089 = vld [vmem:[%s3998 + $0x21c] sm:$0xff]
        %v4090 = vld [vmem:[%s3998 + $0x224] sm:$0xf]
        %v4091 = vld [vmem:[%s3998 + $0x228] sm:$0xff]
        %v4092 = vld [vmem:[%s3998 + $0x230] sm:$0xf]
        %v4093 = vld [vmem:[%s3998 + $0x234] sm:$0xff]
        %v4094 = vld [vmem:[%s3998 + $0x23c] sm:$0xf]
        %s4095 = scalar_lea.vmem [#allocation11], 15
        %v4096 = vld [vmem:[%s4095] sm:$0x7]
        %v4098 = vlaneseq
        %v4099 = vshrl.u32 %v4098, 7
        %v4100 = vsub.s32 0, %v4099
        %v4101 = vrot.slane %v4096, %v4100
        %v4102 = vlaneseq
        %v4103 = vshrl.u32 %v4102, 7
        %v4104 = vsub.s32 1, %v4103
        %v4105 = vrot.slane %v4096, %v4104
        %v4106 = vlaneseq
        %v4107 = vshrl.u32 %v4106, 7
        %v4108 = vsub.s32 2, %v4107
        %v4109 = vrot.slane %v4096, %v4108
        %v4209 = vunpack.c.l.b16 %v3999
        %v4210 = vunpack.c.h.b16 %v3999
        %v4211 = vunpack.c.l.b16 %v4000
        %v4212 = vunpack.c.l.b16 %v4001
        %v4213 = vunpack.c.h.b16 %v4001
        %v4214 = vunpack.c.l.b16 %v4002
        %v4215 = vunpack.c.l.b16 %v4003
        %v4216 = vunpack.c.h.b16 %v4003
        %v4217 = vunpack.c.l.b16 %v4004
        %v4218 = vunpack.c.l.b16 %v4005
        %v4219 = vunpack.c.h.b16 %v4005
        %v4220 = vunpack.c.l.b16 %v4006
        %v4221 = vunpack.c.l.b16 %v4007
        %v4222 = vunpack.c.h.b16 %v4007
        %v4223 = vunpack.c.l.b16 %v4008
        %v4224 = vunpack.c.l.b16 %v4009
        %v4225 = vunpack.c.h.b16 %v4009
        %v4226 = vunpack.c.l.b16 %v4010
        %v4227 = vunpack.c.l.b16 %v4011
        %v4228 = vunpack.c.h.b16 %v4011
        %v4229 = vunpack.c.l.b16 %v4012
        %v4230 = vunpack.c.l.b16 %v4013
        %v4231 = vunpack.c.h.b16 %v4013
        %v4232 = vunpack.c.l.b16 %v4014
        %v4233 = vunpack.c.l.b16 %v4015
        %v4234 = vunpack.c.h.b16 %v4015
        %v4235 = vunpack.c.l.b16 %v4016
        %v4236 = vunpack.c.l.b16 %v4017
        %v4237 = vunpack.c.h.b16 %v4017
        %v4238 = vunpack.c.l.b16 %v4018
        %v4239 = vunpack.c.l.b16 %v4019
        %v4240 = vunpack.c.h.b16 %v4019
        %v4241 = vunpack.c.l.b16 %v4020
        %v4242 = vunpack.c.l.b16 %v4021
        %v4243 = vunpack.c.h.b16 %v4021
        %v4244 = vunpack.c.l.b16 %v4022
        %v4245 = vunpack.c.l.b16 %v4023
        %v4246 = vunpack.c.h.b16 %v4023
        %v4247 = vunpack.c.l.b16 %v4024
        %v4248 = vunpack.c.l.b16 %v4025
        %v4249 = vunpack.c.h.b16 %v4025
        %v4250 = vunpack.c.l.b16 %v4026
        %v4251 = vunpack.c.l.b16 %v4027
        %v4252 = vunpack.c.h.b16 %v4027
        %v4253 = vunpack.c.l.b16 %v4028
        %v4254 = vunpack.c.l.b16 %v4029
        %v4255 = vunpack.c.h.b16 %v4029
        %v4256 = vunpack.c.l.b16 %v4030
        %v4257 = vunpack.c.l.b16 %v4031
        %v4258 = vunpack.c.h.b16 %v4031
        %v4259 = vunpack.c.l.b16 %v4032
        %v4260 = vunpack.c.l.b16 %v4033
        %v4261 = vunpack.c.h.b16 %v4033
        %v4262 = vunpack.c.l.b16 %v4034
        %v4263 = vunpack.c.l.b16 %v4035
        %v4264 = vunpack.c.h.b16 %v4035
        %v4265 = vunpack.c.l.b16 %v4036
        %v4266 = vunpack.c.l.b16 %v4037
        %v4267 = vunpack.c.h.b16 %v4037
        %v4268 = vunpack.c.l.b16 %v4038
        %v4269 = vunpack.c.l.b16 %v4039
        %v4270 = vunpack.c.h.b16 %v4039
        %v4271 = vunpack.c.l.b16 %v4040
        %v4272 = vunpack.c.l.b16 %v4041
        %v4273 = vunpack.c.h.b16 %v4041
        %v4274 = vunpack.c.l.b16 %v4042
        %v4275 = vunpack.c.l.b16 %v4043
        %v4276 = vunpack.c.h.b16 %v4043
        %v4277 = vunpack.c.l.b16 %v4044
        %v4278 = vunpack.c.l.b16 %v4045
        %v4279 = vunpack.c.h.b16 %v4045
        %v4280 = vunpack.c.l.b16 %v4046
        %v4281 = vunpack.c.l.b16 %v4047
        %v4282 = vunpack.c.h.b16 %v4047
        %v4283 = vunpack.c.l.b16 %v4048
        %v4284 = vunpack.c.l.b16 %v4049
        %v4285 = vunpack.c.h.b16 %v4049
        %v4286 = vunpack.c.l.b16 %v4050
        %v4287 = vunpack.c.l.b16 %v4051
        %v4288 = vunpack.c.h.b16 %v4051
        %v4289 = vunpack.c.l.b16 %v4052
        %v4290 = vunpack.c.l.b16 %v4053
        %v4291 = vunpack.c.h.b16 %v4053
        %v4292 = vunpack.c.l.b16 %v4054
        %v4293 = vunpack.c.l.b16 %v4055
        %v4294 = vunpack.c.h.b16 %v4055
        %v4295 = vunpack.c.l.b16 %v4056
        %v4296 = vunpack.c.l.b16 %v4057
        %v4297 = vunpack.c.h.b16 %v4057
        %v4298 = vunpack.c.l.b16 %v4058
        %v4299 = vunpack.c.l.b16 %v4059
        %v4300 = vunpack.c.h.b16 %v4059
        %v4301 = vunpack.c.l.b16 %v4060
        %v4302 = vunpack.c.l.b16 %v4061
        %v4303 = vunpack.c.h.b16 %v4061
        %v4304 = vunpack.c.l.b16 %v4062
        %v4305 = vunpack.c.l.b16 %v4063
        %v4306 = vunpack.c.h.b16 %v4063
        %v4307 = vunpack.c.l.b16 %v4064
        %v4308 = vunpack.c.l.b16 %v4065
        %v4309 = vunpack.c.h.b16 %v4065
        %v4310 = vunpack.c.l.b16 %v4066
        %v4311 = vunpack.c.l.b16 %v4067
        %v4312 = vunpack.c.h.b16 %v4067
        %v4313 = vunpack.c.l.b16 %v4068
        %v4314 = vunpack.c.l.b16 %v4069
        %v4315 = vunpack.c.h.b16 %v4069
        %v4316 = vunpack.c.l.b16 %v4070
        %v4317 = vunpack.c.l.b16 %v4071
        %v4318 = vunpack.c.h.b16 %v4071
        %v4319 = vunpack.c.l.b16 %v4072
        %v4320 = vunpack.c.l.b16 %v4073
        %v4321 = vunpack.c.h.b16 %v4073
        %v4322 = vunpack.c.l.b16 %v4074
        %v4323 = vunpack.c.l.b16 %v4075
        %v4324 = vunpack.c.h.b16 %v4075
        %v4325 = vunpack.c.l.b16 %v4076
        %v4326 = vunpack.c.l.b16 %v4077
        %v4327 = vunpack.c.h.b16 %v4077
        %v4328 = vunpack.c.l.b16 %v4078
        %v4329 = vunpack.c.l.b16 %v4079
        %v4330 = vunpack.c.h.b16 %v4079
        %v4331 = vunpack.c.l.b16 %v4080
        %v4332 = vunpack.c.l.b16 %v4081
        %v4333 = vunpack.c.h.b16 %v4081
        %v4334 = vunpack.c.l.b16 %v4082
        %v4335 = vunpack.c.l.b16 %v4083
        %v4336 = vunpack.c.h.b16 %v4083
        %v4337 = vunpack.c.l.b16 %v4084
        %v4338 = vunpack.c.l.b16 %v4085
        %v4339 = vunpack.c.h.b16 %v4085
        %v4340 = vunpack.c.l.b16 %v4086
        %v4341 = vunpack.c.l.b16 %v4087
        %v4342 = vunpack.c.h.b16 %v4087
        %v4343 = vunpack.c.l.b16 %v4088
        %v4344 = vunpack.c.l.b16 %v4089
        %v4345 = vunpack.c.h.b16 %v4089
        %v4346 = vunpack.c.l.b16 %v4090
        %v4347 = vunpack.c.l.b16 %v4091
        %v4348 = vunpack.c.h.b16 %v4091
        %v4349 = vunpack.c.l.b16 %v4092
        %v4350 = vunpack.c.l.b16 %v4093
        %v4351 = vunpack.c.h.b16 %v4093
        %v4352 = vunpack.c.l.b16 %v4094
        %v4353 = vpack.c.b16 %v4212, %v4209
        %v4354 = vpack.c.b16 %v4213, %v4210
        %v4355 = vpack.c.b16 %v4214, %v4211
        %v4356 = vpack.c.b16 %v4218, %v4215
        %v4357 = vpack.c.b16 %v4219, %v4216
        %v4358 = vpack.c.b16 %v4220, %v4217
        %v4359 = vpack.c.b16 %v4224, %v4221
        %v4360 = vpack.c.b16 %v4225, %v4222
        %v4361 = vpack.c.b16 %v4226, %v4223
        %v4362 = vpack.c.b16 %v4230, %v4227
        %v4363 = vpack.c.b16 %v4231, %v4228
        %v4364 = vpack.c.b16 %v4232, %v4229
        %v4365 = vpack.c.b16 %v4236, %v4233
        %v4366 = vpack.c.b16 %v4237, %v4234
        %v4367 = vpack.c.b16 %v4238, %v4235
        %v4368 = vpack.c.b16 %v4242, %v4239
        %v4369 = vpack.c.b16 %v4243, %v4240
        %v4370 = vpack.c.b16 %v4244, %v4241
        %v4371 = vpack.c.b16 %v4248, %v4245
        %v4372 = vpack.c.b16 %v4249, %v4246
        %v4373 = vpack.c.b16 %v4250, %v4247
        %v4374 = vpack.c.b16 %v4254, %v4251
        %v4375 = vpack.c.b16 %v4255, %v4252
        %v4376 = vpack.c.b16 %v4256, %v4253
        %v4377 = vpack.c.b16 %v4260, %v4257
        %v4378 = vpack.c.b16 %v4261, %v4258
        %v4379 = vpack.c.b16 %v4262, %v4259
        %v4380 = vpack.c.b16 %v4266, %v4263
        %v4381 = vpack.c.b16 %v4267, %v4264
        %v4382 = vpack.c.b16 %v4268, %v4265
        %v4383 = vpack.c.b16 %v4272, %v4269
        %v4384 = vpack.c.b16 %v4273, %v4270
        %v4385 = vpack.c.b16 %v4274, %v4271
        %v4386 = vpack.c.b16 %v4278, %v4275
        %v4387 = vpack.c.b16 %v4279, %v4276
        %v4388 = vpack.c.b16 %v4280, %v4277
        %v4389 = vpack.c.b16 %v4284, %v4281
        %v4390 = vpack.c.b16 %v4285, %v4282
        %v4391 = vpack.c.b16 %v4286, %v4283
        %v4392 = vpack.c.b16 %v4290, %v4287
        %v4393 = vpack.c.b16 %v4291, %v4288
        %v4394 = vpack.c.b16 %v4292, %v4289
        %v4395 = vpack.c.b16 %v4296, %v4293
        %v4396 = vpack.c.b16 %v4297, %v4294
        %v4397 = vpack.c.b16 %v4298, %v4295
        %v4398 = vpack.c.b16 %v4302, %v4299
        %v4399 = vpack.c.b16 %v4303, %v4300
        %v4400 = vpack.c.b16 %v4304, %v4301
        %v4401 = vpack.c.b16 %v4308, %v4305
        %v4402 = vpack.c.b16 %v4309, %v4306
        %v4403 = vpack.c.b16 %v4310, %v4307
        %v4404 = vpack.c.b16 %v4314, %v4311
        %v4405 = vpack.c.b16 %v4315, %v4312
        %v4406 = vpack.c.b16 %v4316, %v4313
        %v4407 = vpack.c.b16 %v4320, %v4317
        %v4408 = vpack.c.b16 %v4321, %v4318
        %v4409 = vpack.c.b16 %v4322, %v4319
        %v4410 = vpack.c.b16 %v4326, %v4323
        %v4411 = vpack.c.b16 %v4327, %v4324
        %v4412 = vpack.c.b16 %v4328, %v4325
        %v4413 = vpack.c.b16 %v4332, %v4329
        %v4414 = vpack.c.b16 %v4333, %v4330
        %v4415 = vpack.c.b16 %v4334, %v4331
        %v4416 = vpack.c.b16 %v4338, %v4335
        %v4417 = vpack.c.b16 %v4339, %v4336
        %v4418 = vpack.c.b16 %v4340, %v4337
        %v4419 = vpack.c.b16 %v4344, %v4341
        %v4420 = vpack.c.b16 %v4345, %v4342
        %v4421 = vpack.c.b16 %v4346, %v4343
        %v4422 = vpack.c.b16 %v4350, %v4347
        %v4423 = vpack.c.b16 %v4351, %v4348
        %v4424 = vpack.c.b16 %v4352, %v4349
        %4497 = vmatprep.subr.bf16.mxu0 %v4354
        %4498 = vmatpush1.bf16.msra.mxu0 %v4353
        %4499 = vmatprep.subr.bf16.mxu0 %v4357
        %4500 = vmatpush1.bf16.msra.mxu0 %v4356
        %4501 = vmatprep.subr.bf16.mxu0 %v4360
        %4502 = vmatpush1.bf16.msra.mxu0 %v4359
        %4503 = vmatprep.subr.bf16.mxu0 %v4363
        %4504 = vmatpush1.bf16.msra.mxu0 %v4362
        %4505 = vmatprep.subr.bf16.mxu0 %v4366
        %4506 = vmatpush1.bf16.msra.mxu0 %v4365
        %4507 = vmatprep.subr.bf16.mxu0 %v4369
        %4508 = vmatpush1.bf16.msra.mxu0 %v4368
        %4509 = vmatprep.subr.bf16.mxu0 %v4372
        %4510 = vmatpush1.bf16.msra.mxu0 %v4371
        %4511 = vmatprep.subr.bf16.mxu0 %v4375
        %4512 = vmatpush1.bf16.msra.mxu0 %v4374
        %4513 = vmatprep.subr.bf16.mxu0 %v4378
        %4514 = vmatpush1.bf16.msra.mxu0 %v4377
        %4515 = vmatprep.subr.bf16.mxu0 %v4381
        %4516 = vmatpush1.bf16.msra.mxu0 %v4380
        %4517 = vmatprep.subr.bf16.mxu0 %v4384
        %4518 = vmatpush1.bf16.msra.mxu0 %v4383
        %4519 = vmatprep.subr.bf16.mxu0 %v4387
        %4520 = vmatpush1.bf16.msra.mxu0 %v4386
        %4521 = vmatprep.subr.bf16.mxu0 %v4390
        %4522 = vmatpush1.bf16.msra.mxu0 %v4389
        %4523 = vmatprep.subr.bf16.mxu0 %v4393
        %4524 = vmatpush1.bf16.msra.mxu0 %v4392
        %4525 = vmatprep.subr.bf16.mxu0 %v4396
        %4526 = vmatpush1.bf16.msra.mxu0 %v4395
        %4527 = vmatprep.subr.bf16.mxu0 %v4399
        %4528 = vmatpush1.bf16.msra.mxu0 %v4398
        %4529 = vmatprep.mubr.bf16.mxu0 %v3996
        %4530 = vmatmul.mubr.bf16.gmra.mrb[0].mxu0 %v3995
        %v4531 = vpop.f32.mrb[0].mxu0
        %v4532 = vadd.f32 %v4101, %v4531
        %v4533 = vpop.f32.mrb[0].mxu0
        %v4534 = vadd.f32 %v4105, %v4533
        %v4535 = vpop.f32.mrb[0].mxu0
        %v4536 = vpop.f32.mrb[0].mxu0
        %4537 = vdwg.mxu0
        %4538 = vmatprep.subr.bf16.mxu0 %v4402
        %4539 = vmatpush1.bf16.msra.mxu0 %v4401
        %4540 = vmatprep.subr.bf16.mxu0 %v4405
        %4541 = vmatpush1.bf16.msra.mxu0 %v4404
        %4542 = vmatprep.subr.bf16.mxu0 %v4408
        %4543 = vmatpush1.bf16.msra.mxu0 %v4407
        %4544 = vmatprep.subr.bf16.mxu0 %v4411
        %4545 = vmatpush1.bf16.msra.mxu0 %v4410
        %4546 = vmatprep.subr.bf16.mxu0 %v4414
        %4547 = vmatpush1.bf16.msra.mxu0 %v4413
        %4548 = vmatprep.subr.bf16.mxu0 %v4417
        %4549 = vmatpush1.bf16.msra.mxu0 %v4416
        %4550 = vmatprep.subr.bf16.mxu0 %v4420
        %4551 = vmatpush1.bf16.msra.mxu0 %v4419
        %4552 = vmatprep.subr.bf16.mxu0 %v4423
        %4553 = vmatpush1.bf16.msra.mxu0 %v4422
        %4554 = vmatprep.subr.bf16.mxu0 0
        %4555 = vmatpush1.bf16.msra.mxu0 0
        %4556 = vmatprep.subr.bf16.mxu0 0
        %4557 = vmatpush1.bf16.msra.mxu0 0
        %4558 = vmatprep.subr.bf16.mxu0 0
        %4559 = vmatpush1.bf16.msra.mxu0 0
        %4560 = vmatprep.subr.bf16.mxu0 0
        %4561 = vmatpush1.bf16.msra.mxu0 0
        %4562 = vmatprep.subr.bf16.mxu0 0
        %4563 = vmatpush1.bf16.msra.mxu0 0
        %4564 = vmatprep.subr.bf16.mxu0 0
        %4565 = vmatpush1.bf16.msra.mxu0 0
        %4566 = vmatprep.subr.bf16.mxu0 0
        %4567 = vmatpush1.bf16.msra.mxu0 0
        %4568 = vmatprep.subr.bf16.mxu0 0
        %4569 = vmatpush1.bf16.msra.mxu0 0
        %4570 = vmatprep.mubr.bf16.mxu0 0
        %4571 = vmatmul.mubr.bf16.gmra.mrb[0].mxu0 %v3997
        %v4572 = vpop.f32.mrb[0].mxu0
        %v4573 = vadd.f32 %v4532, %v4572
        %v4574 = vpop.f32.mrb[0].mxu0
        %v4575 = vadd.f32 %v4534, %v4574
        %v4576 = vpop.f32.mrb[0].mxu0
        %v4577 = vpop.f32.mrb[0].mxu0
        %4578 = vdwg.mxu0
        %4579 = vmatprep.subr.bf16.mxu0 0
        %4580 = vmatpush1.bf16.msra.mxu0 %v4355
        %4581 = vmatprep.subr.bf16.mxu0 0
        %4582 = vmatpush1.bf16.msra.mxu0 %v4358
        %4583 = vmatprep.subr.bf16.mxu0 0
        %4584 = vmatpush1.bf16.msra.mxu0 %v4361
        %4585 = vmatprep.subr.bf16.mxu0 0
        %4586 = vmatpush1.bf16.msra.mxu0 %v4364
        %4587 = vmatprep.subr.bf16.mxu0 0
        %4588 = vmatpush1.bf16.msra.mxu0 %v4367
        %4589 = vmatprep.subr.bf16.mxu0 0
        %4590 = vmatpush1.bf16.msra.mxu0 %v4370
        %4591 = vmatprep.subr.bf16.mxu0 0
        %4592 = vmatpush1.bf16.msra.mxu0 %v4373
        %4593 = vmatprep.subr.bf16.mxu0 0
        %4594 = vmatpush1.bf16.msra.mxu0 %v4376
        %4595 = vmatprep.subr.bf16.mxu0 0
        %4596 = vmatpush1.bf16.msra.mxu0 %v4379
        %4597 = vmatprep.subr.bf16.mxu0 0
        %4598 = vmatpush1.bf16.msra.mxu0 %v4382
        %4599 = vmatprep.subr.bf16.mxu0 0
        %4600 = vmatpush1.bf16.msra.mxu0 %v4385
        %4601 = vmatprep.subr.bf16.mxu0 0
        %4602 = vmatpush1.bf16.msra.mxu0 %v4388
        %4603 = vmatprep.subr.bf16.mxu0 0
        %4604 = vmatpush1.bf16.msra.mxu0 %v4391
        %4605 = vmatprep.subr.bf16.mxu0 0
        %4606 = vmatpush1.bf16.msra.mxu0 %v4394
        %4607 = vmatprep.subr.bf16.mxu0 0
        %4608 = vmatpush1.bf16.msra.mxu0 %v4397
        %4609 = vmatprep.subr.bf16.mxu0 0
        %4610 = vmatpush1.bf16.msra.mxu0 %v4400
        %4611 = vmatprep.mubr.bf16.mxu0 %v3996
        %4612 = vmatmul.mubr.bf16.gmra.mrb[0].mxu0 %v3995
        %v4613 = vpop.f32.mrb[0].mxu0
        %v4614 = vadd.f32 %v4109, %v4613
        %v4615 = vpop.f32.mrb[0].mxu0
        %v4616 = vpop.f32.mrb[0].mxu0
        %v4617 = vpop.f32.mrb[0].mxu0
        %4618 = vdwg.mxu0
        %4619 = vmatprep.subr.bf16.mxu0 0
        %4620 = vmatpush1.bf16.msra.mxu0 %v4403
        %4621 = vmatprep.subr.bf16.mxu0 0
        %4622 = vmatpush1.bf16.msra.mxu0 %v4406
        %4623 = vmatprep.subr.bf16.mxu0 0
        %4624 = vmatpush1.bf16.msra.mxu0 %v4409
        %4625 = vmatprep.subr.bf16.mxu0 0
        %4626 = vmatpush1.bf16.msra.mxu0 %v4412
        %4627 = vmatprep.subr.bf16.mxu0 0
        %4628 = vmatpush1.bf16.msra.mxu0 %v4415
        %4629 = vmatprep.subr.bf16.mxu0 0
        %4630 = vmatpush1.bf16.msra.mxu0 %v4418
        %4631 = vmatprep.subr.bf16.mxu0 0
        %4632 = vmatpush1.bf16.msra.mxu0 %v4421
        %4633 = vmatprep.subr.bf16.mxu0 0
        %4634 = vmatpush1.bf16.msra.mxu0 %v4424
        %4635 = vmatprep.subr.bf16.mxu0 0
        %4636 = vmatpush1.bf16.msra.mxu0 0
        %4637 = vmatprep.subr.bf16.mxu0 0
        %4638 = vmatpush1.bf16.msra.mxu0 0
        %4639 = vmatprep.subr.bf16.mxu0 0
        %4640 = vmatpush1.bf16.msra.mxu0 0
        %4641 = vmatprep.subr.bf16.mxu0 0
        %4642 = vmatpush1.bf16.msra.mxu0 0
        %4643 = vmatprep.subr.bf16.mxu0 0
        %4644 = vmatpush1.bf16.msra.mxu0 0
        %4645 = vmatprep.subr.bf16.mxu0 0
        %4646 = vmatpush1.bf16.msra.mxu0 0
        %4647 = vmatprep.subr.bf16.mxu0 0
        %4648 = vmatpush1.bf16.msra.mxu0 0
        %4649 = vmatprep.subr.bf16.mxu0 0
        %4650 = vmatpush1.bf16.msra.mxu0 0
        %4651 = vmatprep.mubr.bf16.mxu0 0
        %4652 = vmatmul.mubr.bf16.gmra.mrb[0].mxu0 %v3997
        %v4653 = vpop.f32.mrb[0].mxu0
        %v4654 = vadd.f32 %v4614, %v4653
        %v4655 = vpop.f32.mrb[0].mxu0
        %v4656 = vpop.f32.mrb[0].mxu0
        %v4657 = vpop.f32.mrb[0].mxu0
        %4658 = vdwg.mxu0
        %v4659 = vunpack.c.l.bf16 %v3328
        %v4660 = vunpack.c.l.bf16 %v3329
        %v4661 = vunpack.c.l.bf16 %v3330
        %v4662 = vadd.f32 %v4573, %v4659
        %v4663 = vadd.f32 %v4575, %v4660
        %v4664 = vadd.f32 %v4654, %v4661
        %v4665 = vmax.f32 %v4662, 0.0
        %v4666 = vmax.f32 %v4663, 0.0
        %v4667 = vmax.f32 %v4664, 0.0
        %v4668 = vpack.c.bf16 %v4665, %v4665
        %v4669 = vpack.c.bf16 %v4666, %v4666
        %v4670 = vpack.c.bf16 %v4667, %v4667
        %v4671 = vld [vmem:[%s5] sm:$0xf]
        %v4672 = vld [vmem:[%s5 + $0x4] sm:$0xf]
        %v4673 = vld [vmem:[%s5 + $0x8] sm:$0xf]
        %v4674 = vld [vmem:[%s5 + $0xc] sm:$0xf]
        %v4675 = vld [vmem:[%s5 + $0x10] sm:$0xf]
        %v4676 = vld [vmem:[%s5 + $0x14] sm:$0xf]
        %v4677 = vld [vmem:[%s5 + $0x18] sm:$0xf]
        %v4678 = vld [vmem:[%s5 + $0x1c] sm:$0xf]
        %v4679 = vld [vmem:[%s5 + $0x20] sm:$0xf]
        %v4680 = vld [vmem:[%s5 + $0x24] sm:$0xf]
        %v4681 = vld [vmem:[%s5 + $0x28] sm:$0xf]
        %v4682 = vld [vmem:[%s5 + $0x2c] sm:$0xf]
        %v4683 = vld [vmem:[%s5 + $0x30] sm:$0xf]
        %v4684 = vld [vmem:[%s5 + $0x34] sm:$0xf]
        %v4685 = vld [vmem:[%s5 + $0x38] sm:$0xf]
        %v4686 = vld [vmem:[%s5 + $0x3c] sm:$0xf]
        %v4687 = vld [vmem:[%s5 + $0x40] sm:$0xf]
        %v4688 = vld [vmem:[%s5 + $0x44] sm:$0xf]
        %v4689 = vld [vmem:[%s5 + $0x48] sm:$0xf]
        %v4690 = vld [vmem:[%s5 + $0x4c] sm:$0xf]
        %v4691 = vld [vmem:[%s5 + $0x50] sm:$0xf]
        %v4692 = vld [vmem:[%s5 + $0x54] sm:$0xf]
        %v4693 = vld [vmem:[%s5 + $0x58] sm:$0xf]
        %v4694 = vld [vmem:[%s5 + $0x5c] sm:$0xf]
        %v4695 = vld [vmem:[%s5 + $0x60] sm:$0xf]
        %v4696 = vld [vmem:[%s5 + $0x64] sm:$0xf]
        %v4697 = vld [vmem:[%s5 + $0x68] sm:$0xf]
        %v4698 = vld [vmem:[%s5 + $0x6c] sm:$0xf]
        %v4699 = vld [vmem:[%s5 + $0x70] sm:$0xf]
        %v4700 = vld [vmem:[%s5 + $0x74] sm:$0xf]
        %v4701 = vld [vmem:[%s5 + $0x78] sm:$0xf]
        %v4702 = vld [vmem:[%s5 + $0x7c] sm:$0xf]
        %v4703 = vld [vmem:[%s5 + $0x80] sm:$0xf]
        %v4704 = vld [vmem:[%s5 + $0x84] sm:$0xf]
        %v4705 = vld [vmem:[%s5 + $0x88] sm:$0xf]
        %v4706 = vld [vmem:[%s5 + $0x8c] sm:$0xf]
        %v4707 = vld [vmem:[%s5 + $0x90] sm:$0xf]
        %v4708 = vld [vmem:[%s5 + $0x94] sm:$0xf]
        %v4709 = vld [vmem:[%s5 + $0x98] sm:$0xf]
        %v4710 = vld [vmem:[%s5 + $0x9c] sm:$0xf]
        %v4711 = vld [vmem:[%s5 + $0xa0] sm:$0xf]
        %v4712 = vld [vmem:[%s5 + $0xa4] sm:$0xf]
        %v4713 = vld [vmem:[%s5 + $0xa8] sm:$0xf]
        %v4714 = vld [vmem:[%s5 + $0xac] sm:$0xf]
        %v4715 = vld [vmem:[%s5 + $0xb0] sm:$0xf]
        %v4716 = vld [vmem:[%s5 + $0xb4] sm:$0xf]
        %v4717 = vld [vmem:[%s5 + $0xb8] sm:$0xf]
        %v4718 = vld [vmem:[%s5 + $0xbc] sm:$0xf]
        %v4719 = vld [vmem:[#allocation12] sm:$0x1]
        %v4721 = vlaneseq
        %v4722 = vshrl.u32 %v4721, 7
        %v4723 = vsub.s32 0, %v4722
        %v4724 = vrot.slane %v4719, %v4723
        %v4774 = vunpack.c.l.b16 %v4671
        %v4775 = vunpack.c.l.b16 %v4672
        %v4776 = vunpack.c.l.b16 %v4673
        %v4777 = vunpack.c.l.b16 %v4674
        %v4778 = vunpack.c.l.b16 %v4675
        %v4779 = vunpack.c.l.b16 %v4676
        %v4780 = vunpack.c.l.b16 %v4677
        %v4781 = vunpack.c.l.b16 %v4678
        %v4782 = vunpack.c.l.b16 %v4679
        %v4783 = vunpack.c.l.b16 %v4680
        %v4784 = vunpack.c.l.b16 %v4681
        %v4785 = vunpack.c.l.b16 %v4682
        %v4786 = vunpack.c.l.b16 %v4683
        %v4787 = vunpack.c.l.b16 %v4684
        %v4788 = vunpack.c.l.b16 %v4685
        %v4789 = vunpack.c.l.b16 %v4686
        %v4790 = vunpack.c.l.b16 %v4687
        %v4791 = vunpack.c.l.b16 %v4688
        %v4792 = vunpack.c.l.b16 %v4689
        %v4793 = vunpack.c.l.b16 %v4690
        %v4794 = vunpack.c.l.b16 %v4691
        %v4795 = vunpack.c.l.b16 %v4692
        %v4796 = vunpack.c.l.b16 %v4693
        %v4797 = vunpack.c.l.b16 %v4694
        %v4798 = vunpack.c.l.b16 %v4695
        %v4799 = vunpack.c.l.b16 %v4696
        %v4800 = vunpack.c.l.b16 %v4697
        %v4801 = vunpack.c.l.b16 %v4698
        %v4802 = vunpack.c.l.b16 %v4699
        %v4803 = vunpack.c.l.b16 %v4700
        %v4804 = vunpack.c.l.b16 %v4701
        %v4805 = vunpack.c.l.b16 %v4702
        %v4806 = vunpack.c.l.b16 %v4703
        %v4807 = vunpack.c.l.b16 %v4704
        %v4808 = vunpack.c.l.b16 %v4705
        %v4809 = vunpack.c.l.b16 %v4706
        %v4810 = vunpack.c.l.b16 %v4707
        %v4811 = vunpack.c.l.b16 %v4708
        %v4812 = vunpack.c.l.b16 %v4709
        %v4813 = vunpack.c.l.b16 %v4710
        %v4814 = vunpack.c.l.b16 %v4711
        %v4815 = vunpack.c.l.b16 %v4712
        %v4816 = vunpack.c.l.b16 %v4713
        %v4817 = vunpack.c.l.b16 %v4714
        %v4818 = vunpack.c.l.b16 %v4715
        %v4819 = vunpack.c.l.b16 %v4716
        %v4820 = vunpack.c.l.b16 %v4717
        %v4821 = vunpack.c.l.b16 %v4718
        %v4822 = vpack.c.b16 %v4775, %v4774
        %v4823 = vpack.c.b16 %v4777, %v4776
        %v4824 = vpack.c.b16 %v4779, %v4778
        %v4825 = vpack.c.b16 %v4781, %v4780
        %v4826 = vpack.c.b16 %v4783, %v4782
        %v4827 = vpack.c.b16 %v4785, %v4784
        %v4828 = vpack.c.b16 %v4787, %v4786
        %v4829 = vpack.c.b16 %v4789, %v4788
        %v4830 = vpack.c.b16 %v4791, %v4790
        %v4831 = vpack.c.b16 %v4793, %v4792
        %v4832 = vpack.c.b16 %v4795, %v4794
        %v4833 = vpack.c.b16 %v4797, %v4796
        %v4834 = vpack.c.b16 %v4799, %v4798
        %v4835 = vpack.c.b16 %v4801, %v4800
        %v4836 = vpack.c.b16 %v4803, %v4802
        %v4837 = vpack.c.b16 %v4805, %v4804
        %v4838 = vpack.c.b16 %v4807, %v4806
        %v4839 = vpack.c.b16 %v4809, %v4808
        %v4840 = vpack.c.b16 %v4811, %v4810
        %v4841 = vpack.c.b16 %v4813, %v4812
        %v4842 = vpack.c.b16 %v4815, %v4814
        %v4843 = vpack.c.b16 %v4817, %v4816
        %v4844 = vpack.c.b16 %v4819, %v4818
        %v4845 = vpack.c.b16 %v4821, %v4820
        %4870 = vmatprep.subr.bf16.mxu0 0
        %4871 = vmatpush1.bf16.msra.mxu0 %v4822
        %4872 = vmatprep.subr.bf16.mxu0 0
        %4873 = vmatpush1.bf16.msra.mxu0 %v4823
        %4874 = vmatprep.subr.bf16.mxu0 0
        %4875 = vmatpush1.bf16.msra.mxu0 %v4824
        %4876 = vmatprep.subr.bf16.mxu0 0
        %4877 = vmatpush1.bf16.msra.mxu0 %v4825
        %4878 = vmatprep.subr.bf16.mxu0 0
        %4879 = vmatpush1.bf16.msra.mxu0 %v4826
        %4880 = vmatprep.subr.bf16.mxu0 0
        %4881 = vmatpush1.bf16.msra.mxu0 %v4827
        %4882 = vmatprep.subr.bf16.mxu0 0
        %4883 = vmatpush1.bf16.msra.mxu0 %v4828
        %4884 = vmatprep.subr.bf16.mxu0 0
        %4885 = vmatpush1.bf16.msra.mxu0 %v4829
        %4886 = vmatprep.subr.bf16.mxu0 0
        %4887 = vmatpush1.bf16.msra.mxu0 %v4830
        %4888 = vmatprep.subr.bf16.mxu0 0
        %4889 = vmatpush1.bf16.msra.mxu0 %v4831
        %4890 = vmatprep.subr.bf16.mxu0 0
        %4891 = vmatpush1.bf16.msra.mxu0 %v4832
        %4892 = vmatprep.subr.bf16.mxu0 0
        %4893 = vmatpush1.bf16.msra.mxu0 %v4833
        %4894 = vmatprep.subr.bf16.mxu0 0
        %4895 = vmatpush1.bf16.msra.mxu0 %v4834
        %4896 = vmatprep.subr.bf16.mxu0 0
        %4897 = vmatpush1.bf16.msra.mxu0 %v4835
        %4898 = vmatprep.subr.bf16.mxu0 0
        %4899 = vmatpush1.bf16.msra.mxu0 %v4836
        %4900 = vmatprep.subr.bf16.mxu0 0
        %4901 = vmatpush1.bf16.msra.mxu0 %v4837
        %4902 = vmatprep.mubr.bf16.mxu0 %v4669
        %4903 = vmatmul.mubr.bf16.gmra.mrb[0].mxu0 %v4668
        %v4904 = vpop.f32.mrb[0].mxu0
        %v4905 = vadd.f32 %v4724, %v4904
        %v4906 = vpop.f32.mrb[0].mxu0
        %v4907 = vpop.f32.mrb[0].mxu0
        %v4908 = vpop.f32.mrb[0].mxu0
        %4909 = vdwg.mxu0
        %4910 = vmatprep.subr.bf16.mxu0 0
        %4911 = vmatpush1.bf16.msra.mxu0 %v4838
        %4912 = vmatprep.subr.bf16.mxu0 0
        %4913 = vmatpush1.bf16.msra.mxu0 %v4839
        %4914 = vmatprep.subr.bf16.mxu0 0
        %4915 = vmatpush1.bf16.msra.mxu0 %v4840
        %4916 = vmatprep.subr.bf16.mxu0 0
        %4917 = vmatpush1.bf16.msra.mxu0 %v4841
        %4918 = vmatprep.subr.bf16.mxu0 0
        %4919 = vmatpush1.bf16.msra.mxu0 %v4842
        %4920 = vmatprep.subr.bf16.mxu0 0
        %4921 = vmatpush1.bf16.msra.mxu0 %v4843
        %4922 = vmatprep.subr.bf16.mxu0 0
        %4923 = vmatpush1.bf16.msra.mxu0 %v4844
        %4924 = vmatprep.subr.bf16.mxu0 0
        %4925 = vmatpush1.bf16.msra.mxu0 %v4845
        %4926 = vmatprep.subr.bf16.mxu0 0
        %4927 = vmatpush1.bf16.msra.mxu0 0
        %4928 = vmatprep.subr.bf16.mxu0 0
        %4929 = vmatpush1.bf16.msra.mxu0 0
        %4930 = vmatprep.subr.bf16.mxu0 0
        %4931 = vmatpush1.bf16.msra.mxu0 0
        %4932 = vmatprep.subr.bf16.mxu0 0
        %4933 = vmatpush1.bf16.msra.mxu0 0
        %4934 = vmatprep.subr.bf16.mxu0 0
        %4935 = vmatpush1.bf16.msra.mxu0 0
        %4936 = vmatprep.subr.bf16.mxu0 0
        %4937 = vmatpush1.bf16.msra.mxu0 0
        %4938 = vmatprep.subr.bf16.mxu0 0
        %4939 = vmatpush1.bf16.msra.mxu0 0
        %4940 = vmatprep.subr.bf16.mxu0 0
        %4941 = vmatpush1.bf16.msra.mxu0 0
        %4942 = vmatprep.mubr.bf16.mxu0 0
        %4943 = vmatmul.mubr.bf16.gmra.mrb[0].mxu0 %v4670
        %v4944 = vpop.f32.mrb[0].mxu0
        %v4945 = vadd.f32 %v4905, %v4944
        %v4946 = vpop.f32.mrb[0].mxu0
        %v4947 = vpop.f32.mrb[0].mxu0
        %v4948 = vpop.f32.mrb[0].mxu0
        %4949 = vdwg.mxu0
        %v4950 = vmax.f32 %v4945, 0.0
        %v4951 = vpack.c.bf16 %v4950, %v4950
        %v4952 = vld [vmem:[#allocation14] sm:$0xff]
        %v4953 = vld [vmem:[#allocation14 + $0x8] sm:$0xff]
        %v4954 = vld [vmem:[#allocation14 + $0x10] sm:$0xff]
        %v4955 = vld [vmem:[#allocation14 + $0x18] sm:$0xff]
        %v4956 = vld [vmem:[#allocation15] sm:$0x3]
        %v4958 = vlaneseq
        %v4959 = vshrl.u32 %v4958, 7
        %v4960 = vsub.s32 0, %v4959
        %v4961 = vrot.slane %v4956, %v4960
        %v4962 = vlaneseq
        %v4963 = vshrl.u32 %v4962, 7
        %v4964 = vsub.s32 1, %v4963
        %v4965 = vrot.slane %v4956, %v4964
        %v4972 = vunpack.c.l.b16 %v4952
        %v4973 = vunpack.c.h.b16 %v4952
        %v4974 = vunpack.c.l.b16 %v4953
        %v4975 = vunpack.c.h.b16 %v4953
        %v4976 = vunpack.c.l.b16 %v4954
        %v4977 = vunpack.c.h.b16 %v4954
        %v4978 = vunpack.c.l.b16 %v4955
        %v4979 = vunpack.c.h.b16 %v4955
        %v4980 = vpack.c.b16 %v4974, %v4972
        %v4981 = vpack.c.b16 %v4975, %v4973
        %v4982 = vpack.c.b16 %v4978, %v4976
        %v4983 = vpack.c.b16 %v4979, %v4977
        %vm4988 = vcmask 261120
        %v4990 = vsel %vm4988, %v4951, 0
        %4992 = vmatprep.subr.bf16.mxu0 %v4981
        %4993 = vmatpush1.bf16.msra.mxu0 %v4980
        %4994 = vmatprep.subr.bf16.mxu0 %v4983
        %4995 = vmatpush1.bf16.msra.mxu0 %v4982
        %4996 = vmatprep.subr.bf16.mxu0 0
        %4997 = vmatpush1.bf16.msra.mxu0 0
        %4998 = vmatprep.subr.bf16.mxu0 0
        %4999 = vmatpush1.bf16.msra.mxu0 0
        %5000 = vmatprep.subr.bf16.mxu0 0
        %5001 = vmatpush1.bf16.msra.mxu0 0
        %5002 = vmatprep.subr.bf16.mxu0 0
        %5003 = vmatpush1.bf16.msra.mxu0 0
        %5004 = vmatprep.subr.bf16.mxu0 0
        %5005 = vmatpush1.bf16.msra.mxu0 0
        %5006 = vmatprep.subr.bf16.mxu0 0
        %5007 = vmatpush1.bf16.msra.mxu0 0
        %5008 = vmatprep.subr.bf16.mxu0 0
        %5009 = vmatpush1.bf16.msra.mxu0 0
        %5010 = vmatprep.subr.bf16.mxu0 0
        %5011 = vmatpush1.bf16.msra.mxu0 0
        %5012 = vmatprep.subr.bf16.mxu0 0
        %5013 = vmatpush1.bf16.msra.mxu0 0
        %5014 = vmatprep.subr.bf16.mxu0 0
        %5015 = vmatpush1.bf16.msra.mxu0 0
        %5016 = vmatprep.subr.bf16.mxu0 0
        %5017 = vmatpush1.bf16.msra.mxu0 0
        %5018 = vmatprep.subr.bf16.mxu0 0
        %5019 = vmatpush1.bf16.msra.mxu0 0
        %5020 = vmatprep.subr.bf16.mxu0 0
        %5021 = vmatpush1.bf16.msra.mxu0 0
        %5022 = vmatprep.subr.bf16.mxu0 0
        %5023 = vmatpush1.bf16.msra.mxu0 0
        %5024 = vmatprep.mubr.bf16.mxu0 0
        %5025 = vmatmul.mubr.bf16.gmra.mrb[0].mxu0 %v4990
        %v5026 = vpop.f32.mrb[0].mxu0
        %v5027 = vadd.f32 %v4961, %v5026
        %v5028 = vpop.f32.mrb[0].mxu0
        %v5029 = vadd.f32 %v4965, %v5028
        %v5030 = vpop.f32.mrb[0].mxu0
        %v5031 = vpop.f32.mrb[0].mxu0
        %5032 = vdwg.mxu0
        %v5033 = vlaneseq
        %v5034 = vand.u32 %v5033, 127
        %vm5035 = vcmp.lt.s32.totalorder %v5034, 9
        %v5036 = vsel %vm5035, %v5027, -1e+30
        %5037 = vmax.xlane.f32.xlu0 %v5036
        %v5038 = vpop.xlane.xlu0 %5037
        %v5039 = vsub.f32 %v5036, %v5038
        %v5040 = vmul.f32 %v5039, 1.442695
        %v5041 = vpow.pop %v5040
        %5042 = vadd.xlane.f32.xlu0 %v5041
        %v5043 = vpop.xlane.xlu0 %5042
        %v5044 = vrcp.pop %v5043
        %v5045 = vmul.f32 %v5041, %v5044
        %v5046 = vmax.f32 %v5029, 0.0
        %v5047 = vld [vmem:[#allocation17] sm:$0x1]
        %v5049 = vlaneseq
        %v5050 = vshrl.u32 %v5049, 7
        %v5051 = vsub.s32 0, %v5050
        %v5052 = vrot.slane %v5047, %v5051
        %v5054 = vmul.f32 %v5046, %v5052
        %5055 = vadd.xlane.f32.xlu0 %v5054
        %v5056 = vpop.xlane.xlu0 %5055
        %v5057 = vld [vmem:[#allocation2] sm:$0x1]
        %v5059 = vlaneseq
        %v5060 = vshrl.u32 %v5059, 7
        %v5061 = vsub.s32 0, %v5060
        %v5062 = vrot.slane %v5057, %v5061
        %v5064 = vadd.f32 %v5056, %v5062
        %v5065 = vtanh.pop %v5064
        %vm5066 = vcmp.eq.s32.totalorder %v5034, 9
        %5068 = vset.pattern.permute.xlu0 0
        %5069 = vperm.xlu0 %5068, %v5065
        %v5070 = vpop.permute.xlu0 %5069
        %v5072 = vsel %vm5066, %v5070, %v5045
        %5073 = vst [vmem:[%s511] sm:$0xff] %v5072
        %s5074 = sand.u32 %s278, 1
        %s5075 = scalar_lea.sflag [#allocation5], %s5074
        %s5076 = sand.u32 %s278, 1
        %s5077 = smul.addr %s5076, 8
        %s5078 = scalar_lea.vmem [#allocation18], %s5077
        // Predicated region
        $region101: #{tpu_custom_call.1} parent=63 // pred_check
          %p5079 = pneg %p288
        $region102: #{tpu_custom_call.1} parent=63 // pred_check_branch
          %5081 = sbr.rel (%p5079) target = $region104
        $region103: #{tpu_custom_call.1} parent=63 // pred_region
          %s5083 = ssub.s32 128, 128
          %5084 = vsyncadd %s5075, %s5083
          %s5085 = smul.addr %s34, 128
          %s5086 = scalar_lea.hbm %s11, %s5085
          %s5088 = sshll.u32 %s5078, 4
          %s5089 = int_to_ptr.vmem [resolvable:$true] %s5088
          %5091 = dma.vmem_to_hbm [thread:$0]  %s5089, 128, %s5086, %s5075
        $region104: #{tpu_custom_call.1} parent=63 // pred_fallthru
          _
      $region64: #{tpu_custom_call.1} parent=5 // pred_fallthru
        _
      %p5092 = scmp.le.s32.totalorder 2, %s29
      // Predicated region
      $region105: #{tpu_custom_call.1} parent=5 // pred_check
        %p5093 = pneg %p5092
      $region106: #{tpu_custom_call.1} parent=5 // pred_check_branch
        %5095 = sbr.rel (%p5093) target = $region108
      $region107: #{tpu_custom_call.1} parent=5 // pred_region
        %s5096 = ssub.s32 %s29, 2
        // Predicated region
        $region109: #{tpu_custom_call.1} parent=107 // pred_check
          %p5097 = pneg %p294
        $region110: #{tpu_custom_call.1} parent=107 // pred_check_branch
          %5099 = sbr.rel (%p5097) target = $region112
        $region111: #{tpu_custom_call.1} parent=107 // pred_region
          %s5100 = sand.u32 %s279, 1
          %s5101 = scalar_lea.sflag [#allocation5], %s5100
          %s5102 = sand.u32 %s279, 1
          %s5103 = smul.addr %s5102, 8
          %s5104 = scalar_lea.vmem [#allocation18], %s5103
          %5105 = dma.done %s5101, 128
        $region112: #{tpu_custom_call.1} parent=107 // pred_fallthru
          _
      $region108: #{tpu_custom_call.1} parent=5 // pred_fallthru
        _
    $region6: #{tpu_custom_call.1} parent=1 // loop_footer
      %s33 = sadd.s32 1, %s29
    $region7: #{tpu_custom_call.1} parent=1 // loop_footer_branch
      %28 = sbr.rel target = $region3
    $region8: #{tpu_custom_call.1} parent=1 // loop_exit
      _
    %5106 = vsyncpa [#allocation4], 1
    %s5107 = scalar_lea.sflag [#allocation4], 1
    %5108 = vsyncpa %s5107, 1
    %5109 = vsyncpa [#allocation7], 1
    %5110 = vsyncpa [#allocation10], 1
    %5111 = vsyncpa [#allocation13], 1
    %5112 = vsyncpa [#allocation16], 1
    %5113 = vsyncpa [#allocation5], 1
    %s5114 = scalar_lea.sflag [#allocation5], 1
    %5115 = vsyncpa %s5114, 1

</llo_original>
